<compile_context>
chip_gen: v5e
topology: v5e:2x2
jax: 0.10.0
libtpu: 0.0.40
codegen_flags: <defaults>
</compile_context>

<pallas_src>
import functools

import jax
import jax.numpy as jnp
from jax.experimental import pallas as pl
from jax.experimental.pallas import tpu as pltpu

_BN_EPS = 1e-5
_MXU_DTYPE = jnp.bfloat16  # bf16 operands + f32 accumulation on the MXU


def _full_spec(shape):
    """Whole-array VMEM block for a grid=(1,) kernel."""
    return pl.BlockSpec(shape, lambda i: (0,) * len(shape))


# ----------------------------------------------------------------------------
# Single fused kernel: embedding -> n_conv ConvLayers -> pool -> fc -> out
# ----------------------------------------------------------------------------
def _cgcnn_kernel(atom_ref, bond_ref, gather_ref, expand_ref, sum_ref,
                  pool_ref, struct_ref,
                  emb_w_ref, emb_b_ref,
                  w_self_ref, w_nbr_ref, w_bond_ref,
                  bn1_scale_ref, bn1_shift_ref, bn2_scale_ref, bn2_shift_ref,
                  fcw_a_ref, fcw_s_ref, fcb_ref, outw_ref, outb_ref,
                  o_ref, *, n_conv, atom_fea_len):
    f32 = jnp.float32
    a_len = atom_fea_len

    # Embedding Linear (fused).
    atom = (jnp.dot(atom_ref[...].astype(_MXU_DTYPE), emb_w_ref[...],
                    preferred_element_type=f32) + emb_b_ref[...])        # (N, A)

    gather = gather_ref[...]        # (N*M, N) one-hot: row i*M+m -> atom idx[i,m]
    expand = expand_ref[...]        # (N*M, N) one-hot: row i*M+m -> atom i
    nbr_sum = sum_ref[...]          # (N, N*M): sums the M neighbor rows per atom
    bond = bond_ref[...].astype(_MXU_DTYPE)                              # (N*M, B)

    # Static unroll over layers; activations never leave VMEM/vregs.
    for layer in range(n_conv):
        atom_mxu = atom.astype(_MXU_DTYPE)
        self_proj = jnp.dot(atom_mxu, w_self_ref[layer],
                            preferred_element_type=f32)                  # (N, 2A)
        nbr_table = jnp.dot(atom_mxu, w_nbr_ref[layer],
                            preferred_element_type=f32)                  # (N, 2A)
        bond_proj = jnp.dot(bond, w_bond_ref[layer],
                            preferred_element_type=f32)                  # (N*M, 2A)

        # Flat (N*M, 2A) gated features, built entirely with MXU matmuls
        # (no gathers, no reshapes, no broadcasts over the neighbor axis).
        gated = (jnp.dot(expand, self_proj, preferred_element_type=f32)
                 + jnp.dot(gather, nbr_table, preferred_element_type=f32)
                 + bond_proj)                                             # (N*M, 2A)

        # fc_full bias + eval BatchNorm1d folded into one scale/shift.
        gated = gated * bn1_scale_ref[layer] + bn1_shift_ref[layer]

        # Gate: sigmoid via tanh (single EUP op), softplus core.
        nbr_filter = 0.5 * jnp.tanh(0.5 * gated[:, :a_len]) + 0.5        # (N*M, A)
        nbr_core = jax.nn.softplus(gated[:, a_len:])                      # (N*M, A)
        prod = nbr_filter * nbr_core

        # Sum over the M neighbors via an MXU matmul with a 0/1 matrix
        # (replaces the XLU cross-sublane reduction).
        nbr_sumed = jnp.dot(nbr_sum, prod, preferred_element_type=f32)    # (N, A)
        nbr_sumed = nbr_sumed * bn2_scale_ref[layer] + bn2_shift_ref[layer]

        atom = jax.nn.softplus(atom + nbr_sumed)                          # (N, A)

    # Tail: exact per-crystal mean pooling (normalized assignment matmul),
    # concat(structure) via split weight columns, conv_to_fc + softplus, fc_out.
    pooled = jnp.dot(pool_ref[...], atom, preferred_element_type=f32)     # (N0, A)
    h = (jnp.dot(jax.nn.softplus(pooled), fcw_a_ref[...],
                 preferred_element_type=f32)
         + jnp.dot(jax.nn.softplus(struct_ref[...]), fcw_s_ref[...],
                   preferred_element_type=f32)
         + fcb_ref[...])
    h = jax.nn.softplus(h)
    out = jnp.dot(h, outw_ref[...], preferred_element_type=f32) + outb_ref[...]
    o_ref[...] = out.astype(o_ref.dtype)                                  # (N0, 1)


# ----------------------------------------------------------------------------
# Wrapper: host-side preprocessing + single pallas_call
# ----------------------------------------------------------------------------
def cgcnn_forward(params, atom_fea, nbr_fea, nbr_fea_idx, structure_fea, pool_mat):
    n_atoms, m, b_len = nbr_fea.shape
    a_len = params["emb_w"].shape[1]
    n_conv = len(params["convs"])
    n_crys, s_len = structure_fea.shape
    h_len = params["fc_w_atom"].shape[1]
    nm = n_atoms * m
    f32 = jnp.float32

    # --- host-side preprocessing (plain XLA ops, executed once per call) ---
    bond_flat = nbr_fea.reshape(nm, b_len)                                # (N*M, B)
    gather = jax.nn.one_hot(nbr_fea_idx.reshape(-1), n_atoms, dtype=f32)  # (N*M, N)
    expand = jax.nn.one_hot(jnp.repeat(jnp.arange(n_atoms), m),
                            n_atoms, dtype=f32)                           # (N*M, N)
    nbr_sum = jax.nn.one_hot(jnp.arange(nm) // m, n_atoms, dtype=f32).T   # (N, N*M)

    def fold_bn(bn, bias=None):
        gamma, beta, mean, var = bn[0], bn[1], bn[2], bn[3]
        scale = gamma * jax.lax.rsqrt(var + _BN_EPS)
        shift = beta - mean * scale
        if bias is not None:                       # fold Linear bias through BN
            shift = shift + bias * scale
        return scale.reshape(1, -1), shift.reshape(1, -1)

    w_self = jnp.stack([c["w_self"] for c in params["convs"]]).astype(_MXU_DTYPE)
    w_nbr = jnp.stack([c["w_nbr"] for c in params["convs"]]).astype(_MXU_DTYPE)
    w_bond = jnp.stack([c["w_bond"] for c in params["convs"]]).astype(_MXU_DTYPE)
    bn1 = [fold_bn(c["bn1"], c["bias"]) for c in params["convs"]]
    bn2 = [fold_bn(c["bn2"]) for c in params["convs"]]
    bn1_scale = jnp.stack([s for s, _ in bn1])
    bn1_shift = jnp.stack([t for _, t in bn1])
    bn2_scale = jnp.stack([s for s, _ in bn2])
    bn2_shift = jnp.stack([t for _, t in bn2])

    inputs = [
        atom_fea, bond_flat, gather, expand, nbr_sum, pool_mat, structure_fea,
        params["emb_w"].astype(_MXU_DTYPE), params["emb_b"].reshape(1, a_len),
        w_self, w_nbr, w_bond,
        bn1_scale, bn1_shift, bn2_scale, bn2_shift,
        params["fc_w_atom"], params["fc_w_struct"], params["fc_b"].reshape(1, h_len),
        params["out_w"], params["out_b"].reshape(1, 1),
    ]
    in_specs = [_full_spec(x.shape) for x in inputs]

    kernel = functools.partial(_cgcnn_kernel, n_conv=n_conv, atom_fea_len=a_len)

    # TODO(synk): for large N, tile the (flat) atom axis and mark it "parallel"
    # so v7x's 2 TensorCores split atoms; re-derive tile sizes against v7x's
    # 64 MiB VMEM.  At N=16 the whole network fits one grid step.
    return pl.pallas_call(
        kernel,
        out_shape=jax.ShapeDtypeStruct((n_crys, 1), jnp.float32),
        grid=(1,),
        in_specs=in_specs,
        out_specs=_full_spec((n_crys, 1)),
        compiler_params=pltpu.CompilerParams(
            dimension_semantics=("arbitrary",)),
    )(*inputs)


# ----------------------------------------------------------------------------
# Deterministic synthetic parameters + example run
# ----------------------------------------------------------------------------
def _key_stream(key):
    while True:
        key, sub = jax.random.split(key)
        yield sub


def init_params(key, orig_fea, nbr_fea_len, struct_len, atom_fea_len, fc_dim, n_conv):
    a_len, b_len, s_len, h_len = atom_fea_len, nbr_fea_len, struct_len, fc_dim
    a2 = 2 * a_len
    keys = _key_stream(key)

    def nrm(shape, scale=0.1):
        return scale * jax.random.normal(next(keys), shape, jnp.float32)

    params = {
        "emb_w": nrm((orig_fea, a_len)),
        "emb_b": nrm((a_len,)),
        # conv_to_fc weight split into [atom | structure] column blocks
        "fc_w_atom": nrm((a_len, h_len)),
        "fc_w_struct": nrm((s_len, h_len)),
        "fc_b": nrm((h_len,)),
        "out_w": nrm((h_len, 1)),
        "out_b": nrm((1,)),
        "convs": [],
    }
    for _ in range(n_conv):
        bn1 = jnp.stack([
            1.0 + nrm((a2,)),            # gamma
            nrm((a2,)),                  # beta
            nrm((a2,)),                  # running_mean
            1.0 + jnp.abs(nrm((a2,))),   # running_var (> 0)
        ])
        bn2 = jnp.stack([
            1.0 + nrm((a_len,)),
            nrm((a_len,)),
            nrm((a_len,)),
            1.0 + jnp.abs(nrm((a_len,))),
        ])
        params["convs"].append({
            # fc_full split into the [self | nbr | bond] row blocks of W^T
            "w_self": nrm((a_len, a2)),
            "w_nbr": nrm((a_len, a2)),
            "w_bond": nrm((b_len, a2)),
            "bias": nrm((a2,)),
            "bn1": bn1,
            "bn2": bn2,
        })
    return params


if __name__ == "__main__":
    # small shapes: N atoms, M neighbors per atom, N0 crystals
    N, M, N0 = 16, 8, 2
    ORIG_FEA, NBR_FEA, STRUCT_FEA, ATOM_FEA, FC_DIM, N_CONV = 16, 16, 8, 32, 64, 3

    key = jax.random.PRNGKey(0)
    k_params, k_atom, k_nbr, k_idx, k_struct = jax.random.split(key, 5)

    params = init_params(k_params, ORIG_FEA, NBR_FEA, STRUCT_FEA,
                         ATOM_FEA, FC_DIM, N_CONV)

    atom_fea = jax.random.normal(k_atom, (N, ORIG_FEA), jnp.float32)
    nbr_fea = jax.random.normal(k_nbr, (N, M, NBR_FEA), jnp.float32)
    nbr_fea_idx = jax.random.randint(k_idx, (N, M), 0, N, dtype=jnp.int32)
    structure_fea = jax.random.normal(k_struct, (N0, STRUCT_FEA), jnp.float32)

    # crystal_atom_idx: crystal 0 -> atoms [0..7], crystal 1 -> atoms [8..15];
    # torch.mean pooling == matmul with the normalized assignment matrix.
    crystal_atom_idx = [jnp.arange(0, 8), jnp.arange(8, 16)]
    pool_mat = jnp.zeros((N0, N), jnp.float32)
    for c, idxs in enumerate(crystal_atom_idx):
        pool_mat = pool_mat.at[c, idxs].set(1.0 / idxs.shape[0])

    fwd = jax.jit(cgcnn_forward)
    out = fwd(params, atom_fea, nbr_fea, nbr_fea_idx, structure_fea, pool_mat)
    out = jax.block_until_ready(out)

    assert out.shape == (N0, 1)
    assert bool(jnp.all(jnp.isfinite(out)))
    print("KERNEL_OK")
</pallas_src>

<mosaic_0001>
module attributes {stable_mosaic.version = 11 : i64} {
  func.func @_cgcnn_kernel(%arg0: i32, %arg1: memref<16x16xf32, #tpu.memory_space<vmem>>, %arg2: memref<128x16xf32, #tpu.memory_space<vmem>>, %arg3: memref<128x16xf32, #tpu.memory_space<vmem>>, %arg4: memref<128x16xf32, #tpu.memory_space<vmem>>, %arg5: memref<16x128xf32, #tpu.memory_space<vmem>>, %arg6: memref<2x16xf32, #tpu.memory_space<vmem>>, %arg7: memref<2x8xf32, #tpu.memory_space<vmem>>, %arg8: memref<16x32xbf16, #tpu.memory_space<vmem>>, %arg9: memref<1x32xf32, #tpu.memory_space<vmem>>, %arg10: memref<3x32x64xbf16, #tpu.memory_space<vmem>>, %arg11: memref<3x32x64xbf16, #tpu.memory_space<vmem>>, %arg12: memref<3x16x64xbf16, #tpu.memory_space<vmem>>, %arg13: memref<3x1x64xf32, #tpu.memory_space<vmem>>, %arg14: memref<3x1x64xf32, #tpu.memory_space<vmem>>, %arg15: memref<3x1x32xf32, #tpu.memory_space<vmem>>, %arg16: memref<3x1x32xf32, #tpu.memory_space<vmem>>, %arg17: memref<32x64xf32, #tpu.memory_space<vmem>>, %arg18: memref<8x64xf32, #tpu.memory_space<vmem>>, %arg19: memref<1x64xf32, #tpu.memory_space<vmem>>, %arg20: memref<64x1xf32, #tpu.memory_space<vmem>>, %arg21: memref<1x1xf32, #tpu.memory_space<vmem>>, %arg22: memref<2x1xf32, #tpu.memory_space<vmem>>) attributes {dimension_semantics = [#tpu.dimension_semantics<arbitrary>], iteration_bounds = array<i64: 1>, scalar_prefetch = 0 : i64, scratch_operands = 0 : i64, tpu.core_type = #tpu.core_type<tc>, window_params = [{pipeline_mode = #tpu.pipeline_mode<synchronous>, transform_indices = @transform_0, window_bounds = array<i64: 16, 16>}, {pipeline_mode = #tpu.pipeline_mode<synchronous>, transform_indices = @transform_1, window_bounds = array<i64: 128, 16>}, {pipeline_mode = #tpu.pipeline_mode<synchronous>, transform_indices = @transform_2, window_bounds = array<i64: 128, 16>}, {pipeline_mode = #tpu.pipeline_mode<synchronous>, transform_indices = @transform_3, window_bounds = array<i64: 128, 16>}, {pipeline_mode = #tpu.pipeline_mode<synchronous>, transform_indices = @transform_4, window_bounds = array<i64: 16, 128>}, {pipeline_mode = #tpu.pipeline_mode<synchronous>, transform_indices = @transform_5, window_bounds = array<i64: 2, 16>}, {pipeline_mode = #tpu.pipeline_mode<synchronous>, transform_indices = @transform_6, window_bounds = array<i64: 2, 8>}, {pipeline_mode = #tpu.pipeline_mode<synchronous>, transform_indices = @transform_7, window_bounds = array<i64: 16, 32>}, {pipeline_mode = #tpu.pipeline_mode<synchronous>, transform_indices = @transform_8, window_bounds = array<i64: 1, 32>}, {pipeline_mode = #tpu.pipeline_mode<synchronous>, transform_indices = @transform_9, window_bounds = array<i64: 3, 32, 64>}, {pipeline_mode = #tpu.pipeline_mode<synchronous>, transform_indices = @transform_10, window_bounds = array<i64: 3, 32, 64>}, {pipeline_mode = #tpu.pipeline_mode<synchronous>, transform_indices = @transform_11, window_bounds = array<i64: 3, 16, 64>}, {pipeline_mode = #tpu.pipeline_mode<synchronous>, transform_indices = @transform_12, window_bounds = array<i64: 3, 1, 64>}, {pipeline_mode = #tpu.pipeline_mode<synchronous>, transform_indices = @transform_13, window_bounds = array<i64: 3, 1, 64>}, {pipeline_mode = #tpu.pipeline_mode<synchronous>, transform_indices = @transform_14, window_bounds = array<i64: 3, 1, 32>}, {pipeline_mode = #tpu.pipeline_mode<synchronous>, transform_indices = @transform_15, window_bounds = array<i64: 3, 1, 32>}, {pipeline_mode = #tpu.pipeline_mode<synchronous>, transform_indices = @transform_16, window_bounds = array<i64: 32, 64>}, {pipeline_mode = #tpu.pipeline_mode<synchronous>, transform_indices = @transform_17, window_bounds = array<i64: 8, 64>}, {pipeline_mode = #tpu.pipeline_mode<synchronous>, transform_indices = @transform_18, window_bounds = array<i64: 1, 64>}, {pipeline_mode = #tpu.pipeline_mode<synchronous>, transform_indices = @transform_19, window_bounds = array<i64: 64, 1>}, {pipeline_mode = #tpu.pipeline_mode<synchronous>, transform_indices = @transform_20, window_bounds = array<i64: 1, 1>}, {pipeline_mode = #tpu.pipeline_mode<synchronous>, transform_indices = @transform_21, window_bounds = array<i64: 2, 1>}]} {
    %c0 = arith.constant 0 : index
    %c0_0 = arith.constant 0 : index
    %0 = vector.load %arg1[%c0, %c0_0] : memref<16x16xf32, #tpu.memory_space<vmem>>, vector<16x16xf32>
    %1 = arith.truncf %0 : vector<16x16xf32> to vector<16x16xbf16>
    %c0_1 = arith.constant 0 : index
    %c0_2 = arith.constant 0 : index
    %2 = vector.load %arg8[%c0_1, %c0_2] : memref<16x32xbf16, #tpu.memory_space<vmem>>, vector<16x32xbf16>
    %cst = arith.constant dense<0.000000e+00> : vector<16x32xf32>
    %3 = tpu.matmul %1, %2, %cst {dimension_numbers = #tpu.dot_dimension_numbers<[1], [0], [0], [1], [0, 0, 1, 1], [], []>} : vector<16x16xbf16>, vector<16x32xbf16>, vector<16x32xf32> -> vector<16x32xf32>
    %c0_3 = arith.constant 0 : index
    %c0_4 = arith.constant 0 : index
    %4 = vector.load %arg9[%c0_3, %c0_4] : memref<1x32xf32, #tpu.memory_space<vmem>>, vector<1x32xf32>
    %5 = vector.broadcast %4 : vector<1x32xf32> to vector<16x32xf32>
    %6 = arith.addf %3, %5 : vector<16x32xf32>
    %c0_5 = arith.constant 0 : index
    %c0_6 = arith.constant 0 : index
    %7 = vector.load %arg3[%c0_5, %c0_6] : memref<128x16xf32, #tpu.memory_space<vmem>>, vector<128x16xf32>
    %c0_7 = arith.constant 0 : index
    %c0_8 = arith.constant 0 : index
    %8 = vector.load %arg4[%c0_7, %c0_8] : memref<128x16xf32, #tpu.memory_space<vmem>>, vector<128x16xf32>
    %c0_9 = arith.constant 0 : index
    %c0_10 = arith.constant 0 : index
    %9 = vector.load %arg5[%c0_9, %c0_10] : memref<16x128xf32, #tpu.memory_space<vmem>>, vector<16x128xf32>
    %c0_11 = arith.constant 0 : index
    %c0_12 = arith.constant 0 : index
    %10 = vector.load %arg2[%c0_11, %c0_12] : memref<128x16xf32, #tpu.memory_space<vmem>>, vector<128x16xf32>
    %11 = arith.truncf %10 : vector<128x16xf32> to vector<128x16xbf16>
    %12 = arith.truncf %6 : vector<16x32xf32> to vector<16x32xbf16>
    %c0_13 = arith.constant 0 : index
    %c0_14 = arith.constant 0 : index
    %c0_15 = arith.constant 0 : index
    %13 = vector.load %arg10[%c0_13, %c0_14, %c0_15] : memref<3x32x64xbf16, #tpu.memory_space<vmem>>, vector<1x32x64xbf16>
    %14 = vector.shape_cast %13 : vector<1x32x64xbf16> to vector<32x64xbf16>
    %cst_16 = arith.constant dense<0.000000e+00> : vector<16x64xf32>
    %15 = tpu.matmul %12, %14, %cst_16 {dimension_numbers = #tpu.dot_dimension_numbers<[1], [0], [0], [1], [0, 0, 1, 1], [], []>} : vector<16x32xbf16>, vector<32x64xbf16>, vector<16x64xf32> -> vector<16x64xf32>
    %c0_17 = arith.constant 0 : index
    %c0_18 = arith.constant 0 : index
    %c0_19 = arith.constant 0 : index
    %16 = vector.load %arg11[%c0_17, %c0_18, %c0_19] : memref<3x32x64xbf16, #tpu.memory_space<vmem>>, vector<1x32x64xbf16>
    %17 = vector.shape_cast %16 : vector<1x32x64xbf16> to vector<32x64xbf16>
    %cst_20 = arith.constant dense<0.000000e+00> : vector<16x64xf32>
    %18 = tpu.matmul %12, %17, %cst_20 {dimension_numbers = #tpu.dot_dimension_numbers<[1], [0], [0], [1], [0, 0, 1, 1], [], []>} : vector<16x32xbf16>, vector<32x64xbf16>, vector<16x64xf32> -> vector<16x64xf32>
    %c0_21 = arith.constant 0 : index
    %c0_22 = arith.constant 0 : index
    %c0_23 = arith.constant 0 : index
    %19 = vector.load %arg12[%c0_21, %c0_22, %c0_23] : memref<3x16x64xbf16, #tpu.memory_space<vmem>>, vector<1x16x64xbf16>
    %20 = vector.shape_cast %19 : vector<1x16x64xbf16> to vector<16x64xbf16>
    %cst_24 = arith.constant dense<0.000000e+00> : vector<128x64xf32>
    %21 = tpu.matmul %11, %20, %cst_24 {dimension_numbers = #tpu.dot_dimension_numbers<[1], [0], [0], [1], [0, 0, 1, 1], [], []>} : vector<128x16xbf16>, vector<16x64xbf16>, vector<128x64xf32> -> vector<128x64xf32>
    %cst_25 = arith.constant dense<0.000000e+00> : vector<128x64xf32>
    %22 = tpu.matmul %8, %15, %cst_25 {dimension_numbers = #tpu.dot_dimension_numbers<[1], [0], [0], [1], [0, 0, 1, 1], [], []>} : vector<128x16xf32>, vector<16x64xf32>, vector<128x64xf32> -> vector<128x64xf32>
    %cst_26 = arith.constant dense<0.000000e+00> : vector<128x64xf32>
    %23 = tpu.matmul %7, %18, %cst_26 {dimension_numbers = #tpu.dot_dimension_numbers<[1], [0], [0], [1], [0, 0, 1, 1], [], []>} : vector<128x16xf32>, vector<16x64xf32>, vector<128x64xf32> -> vector<128x64xf32>
    %24 = arith.addf %22, %23 : vector<128x64xf32>
    %25 = arith.addf %24, %21 : vector<128x64xf32>
    %c0_27 = arith.constant 0 : index
    %c0_28 = arith.constant 0 : index
    %c0_29 = arith.constant 0 : index
    %26 = vector.load %arg13[%c0_27, %c0_28, %c0_29] : memref<3x1x64xf32, #tpu.memory_space<vmem>>, vector<1x1x64xf32>
    %27 = vector.shape_cast %26 : vector<1x1x64xf32> to vector<1x64xf32>
    %28 = vector.broadcast %27 : vector<1x64xf32> to vector<128x64xf32>
    %29 = arith.mulf %25, %28 : vector<128x64xf32>
    %c0_30 = arith.constant 0 : index
    %c0_31 = arith.constant 0 : index
    %c0_32 = arith.constant 0 : index
    %30 = vector.load %arg14[%c0_30, %c0_31, %c0_32] : memref<3x1x64xf32, #tpu.memory_space<vmem>>, vector<1x1x64xf32>
    %31 = vector.shape_cast %30 : vector<1x1x64xf32> to vector<1x64xf32>
    %32 = vector.broadcast %31 : vector<1x64xf32> to vector<128x64xf32>
    %33 = arith.addf %29, %32 : vector<128x64xf32>
    %34 = vector.extract_strided_slice %33 {offsets = [0, 0], sizes = [128, 32], strides = [1, 1]} : vector<128x64xf32> to vector<128x32xf32>
    %cst_33 = arith.constant 5.000000e-01 : f32
    %35 = vector.broadcast %cst_33 : f32 to vector<128x32xf32>
    %36 = arith.mulf %35, %34 : vector<128x32xf32>
    %37 = math.tanh %36 : vector<128x32xf32>
    %cst_34 = arith.constant 5.000000e-01 : f32
    %38 = vector.broadcast %cst_34 : f32 to vector<128x32xf32>
    %39 = arith.mulf %38, %37 : vector<128x32xf32>
    %cst_35 = arith.constant 5.000000e-01 : f32
    %40 = vector.broadcast %cst_35 : f32 to vector<128x32xf32>
    %41 = arith.addf %39, %40 : vector<128x32xf32>
    %42 = vector.extract_strided_slice %33 {offsets = [0, 32], sizes = [128, 32], strides = [1, 1]} : vector<128x64xf32> to vector<128x32xf32>
    %cst_36 = arith.constant 0.000000e+00 : f32
    %43 = vector.broadcast %cst_36 : f32 to vector<128x32xf32>
    %44 = arith.maximumf %42, %43 : vector<128x32xf32>
    %45 = vector.broadcast %cst_36 : f32 to vector<128x32xf32>
    %46 = arith.subf %42, %45 : vector<128x32xf32>
    %47 = arith.cmpf one, %46, %46 : vector<128x32xf32>
    %48 = vector.broadcast %cst_36 : f32 to vector<128x32xf32>
    %49 = arith.addf %42, %48 : vector<128x32xf32>
    %50 = math.absf %46 : vector<128x32xf32>
    %cst_37 = arith.constant 0.000000e+00 : f32
    %51 = vector.broadcast %cst_37 : f32 to vector<128x32xf32>
    %52 = arith.subf %51, %50 : vector<128x32xf32>
    %53 = math.exp %52 : vector<128x32xf32>
    %54 = math.log1p %53 : vector<128x32xf32>
    %55 = arith.addf %44, %54 : vector<128x32xf32>
    %56 = arith.select %47, %49, %55 : vector<128x32xi1>, vector<128x32xf32>
    %57 = arith.mulf %41, %56 : vector<128x32xf32>
    %cst_38 = arith.constant dense<0.000000e+00> : vector<16x32xf32>
    %58 = tpu.matmul %9, %57, %cst_38 {dimension_numbers = #tpu.dot_dimension_numbers<[1], [0], [0], [1], [0, 0, 1, 1], [], []>} : vector<16x128xf32>, vector<128x32xf32>, vector<16x32xf32> -> vector<16x32xf32>
    %c0_39 = arith.constant 0 : index
    %c0_40 = arith.constant 0 : index
    %c0_41 = arith.constant 0 : index
    %59 = vector.load %arg15[%c0_39, %c0_40, %c0_41] : memref<3x1x32xf32, #tpu.memory_space<vmem>>, vector<1x1x32xf32>
    %60 = vector.shape_cast %59 : vector<1x1x32xf32> to vector<1x32xf32>
    %61 = vector.broadcast %60 : vector<1x32xf32> to vector<16x32xf32>
    %62 = arith.mulf %58, %61 : vector<16x32xf32>
    %c0_42 = arith.constant 0 : index
    %c0_43 = arith.constant 0 : index
    %c0_44 = arith.constant 0 : index
    %63 = vector.load %arg16[%c0_42, %c0_43, %c0_44] : memref<3x1x32xf32, #tpu.memory_space<vmem>>, vector<1x1x32xf32>
    %64 = vector.shape_cast %63 : vector<1x1x32xf32> to vector<1x32xf32>
    %65 = vector.broadcast %64 : vector<1x32xf32> to vector<16x32xf32>
    %66 = arith.addf %62, %65 : vector<16x32xf32>
    %67 = arith.addf %6, %66 : vector<16x32xf32>
    %cst_45 = arith.constant 0.000000e+00 : f32
    %68 = vector.broadcast %cst_45 : f32 to vector<16x32xf32>
    %69 = arith.maximumf %67, %68 : vector<16x32xf32>
    %70 = vector.broadcast %cst_45 : f32 to vector<16x32xf32>
    %71 = arith.subf %67, %70 : vector<16x32xf32>
    %72 = arith.cmpf one, %71, %71 : vector<16x32xf32>
    %73 = vector.broadcast %cst_45 : f32 to vector<16x32xf32>
    %74 = arith.addf %67, %73 : vector<16x32xf32>
    %75 = math.absf %71 : vector<16x32xf32>
    %cst_46 = arith.constant 0.000000e+00 : f32
    %76 = vector.broadcast %cst_46 : f32 to vector<16x32xf32>
    %77 = arith.subf %76, %75 : vector<16x32xf32>
    %78 = math.exp %77 : vector<16x32xf32>
    %79 = math.log1p %78 : vector<16x32xf32>
    %80 = arith.addf %69, %79 : vector<16x32xf32>
    %81 = arith.select %72, %74, %80 : vector<16x32xi1>, vector<16x32xf32>
    %82 = arith.truncf %81 : vector<16x32xf32> to vector<16x32xbf16>
    %c1 = arith.constant 1 : index
    %c0_47 = arith.constant 0 : index
    %c0_48 = arith.constant 0 : index
    %83 = vector.load %arg10[%c1, %c0_47, %c0_48] : memref<3x32x64xbf16, #tpu.memory_space<vmem>>, vector<1x32x64xbf16>
    %84 = vector.shape_cast %83 : vector<1x32x64xbf16> to vector<32x64xbf16>
    %cst_49 = arith.constant dense<0.000000e+00> : vector<16x64xf32>
    %85 = tpu.matmul %82, %84, %cst_49 {dimension_numbers = #tpu.dot_dimension_numbers<[1], [0], [0], [1], [0, 0, 1, 1], [], []>} : vector<16x32xbf16>, vector<32x64xbf16>, vector<16x64xf32> -> vector<16x64xf32>
    %c1_50 = arith.constant 1 : index
    %c0_51 = arith.constant 0 : index
    %c0_52 = arith.constant 0 : index
    %86 = vector.load %arg11[%c1_50, %c0_51, %c0_52] : memref<3x32x64xbf16, #tpu.memory_space<vmem>>, vector<1x32x64xbf16>
    %87 = vector.shape_cast %86 : vector<1x32x64xbf16> to vector<32x64xbf16>
    %cst_53 = arith.constant dense<0.000000e+00> : vector<16x64xf32>
    %88 = tpu.matmul %82, %87, %cst_53 {dimension_numbers = #tpu.dot_dimension_numbers<[1], [0], [0], [1], [0, 0, 1, 1], [], []>} : vector<16x32xbf16>, vector<32x64xbf16>, vector<16x64xf32> -> vector<16x64xf32>
    %c1_54 = arith.constant 1 : index
    %c0_55 = arith.constant 0 : index
    %c0_56 = arith.constant 0 : index
    %89 = vector.load %arg12[%c1_54, %c0_55, %c0_56] : memref<3x16x64xbf16, #tpu.memory_space<vmem>>, vector<1x16x64xbf16>
    %90 = vector.shape_cast %89 : vector<1x16x64xbf16> to vector<16x64xbf16>
    %cst_57 = arith.constant dense<0.000000e+00> : vector<128x64xf32>
    %91 = tpu.matmul %11, %90, %cst_57 {dimension_numbers = #tpu.dot_dimension_numbers<[1], [0], [0], [1], [0, 0, 1, 1], [], []>} : vector<128x16xbf16>, vector<16x64xbf16>, vector<128x64xf32> -> vector<128x64xf32>
    %cst_58 = arith.constant dense<0.000000e+00> : vector<128x64xf32>
    %92 = tpu.matmul %8, %85, %cst_58 {dimension_numbers = #tpu.dot_dimension_numbers<[1], [0], [0], [1], [0, 0, 1, 1], [], []>} : vector<128x16xf32>, vector<16x64xf32>, vector<128x64xf32> -> vector<128x64xf32>
    %cst_59 = arith.constant dense<0.000000e+00> : vector<128x64xf32>
    %93 = tpu.matmul %7, %88, %cst_59 {dimension_numbers = #tpu.dot_dimension_numbers<[1], [0], [0], [1], [0, 0, 1, 1], [], []>} : vector<128x16xf32>, vector<16x64xf32>, vector<128x64xf32> -> vector<128x64xf32>
    %94 = arith.addf %92, %93 : vector<128x64xf32>
    %95 = arith.addf %94, %91 : vector<128x64xf32>
    %c1_60 = arith.constant 1 : index
    %c0_61 = arith.constant 0 : index
    %c0_62 = arith.constant 0 : index
    %96 = vector.load %arg13[%c1_60, %c0_61, %c0_62] : memref<3x1x64xf32, #tpu.memory_space<vmem>>, vector<1x1x64xf32>
    %97 = vector.shape_cast %96 : vector<1x1x64xf32> to vector<1x64xf32>
    %98 = vector.broadcast %97 : vector<1x64xf32> to vector<128x64xf32>
    %99 = arith.mulf %95, %98 : vector<128x64xf32>
    %c1_63 = arith.constant 1 : index
    %c0_64 = arith.constant 0 : index
    %c0_65 = arith.constant 0 : index
    %100 = vector.load %arg14[%c1_63, %c0_64, %c0_65] : memref<3x1x64xf32, #tpu.memory_space<vmem>>, vector<1x1x64xf32>
    %101 = vector.shape_cast %100 : vector<1x1x64xf32> to vector<1x64xf32>
    %102 = vector.broadcast %101 : vector<1x64xf32> to vector<128x64xf32>
    %103 = arith.addf %99, %102 : vector<128x64xf32>
    %104 = vector.extract_strided_slice %103 {offsets = [0, 0], sizes = [128, 32], strides = [1, 1]} : vector<128x64xf32> to vector<128x32xf32>
    %cst_66 = arith.constant 5.000000e-01 : f32
    %105 = vector.broadcast %cst_66 : f32 to vector<128x32xf32>
    %106 = arith.mulf %105, %104 : vector<128x32xf32>
    %107 = math.tanh %106 : vector<128x32xf32>
    %cst_67 = arith.constant 5.000000e-01 : f32
    %108 = vector.broadcast %cst_67 : f32 to vector<128x32xf32>
    %109 = arith.mulf %108, %107 : vector<128x32xf32>
    %cst_68 = arith.constant 5.000000e-01 : f32
    %110 = vector.broadcast %cst_68 : f32 to vector<128x32xf32>
    %111 = arith.addf %109, %110 : vector<128x32xf32>
    %112 = vector.extract_strided_slice %103 {offsets = [0, 32], sizes = [128, 32], strides = [1, 1]} : vector<128x64xf32> to vector<128x32xf32>
    %cst_69 = arith.constant 0.000000e+00 : f32
    %113 = vector.broadcast %cst_69 : f32 to vector<128x32xf32>
    %114 = arith.maximumf %112, %113 : vector<128x32xf32>
    %115 = vector.broadcast %cst_69 : f32 to vector<128x32xf32>
    %116 = arith.subf %112, %115 : vector<128x32xf32>
    %117 = arith.cmpf one, %116, %116 : vector<128x32xf32>
    %118 = vector.broadcast %cst_69 : f32 to vector<128x32xf32>
    %119 = arith.addf %112, %118 : vector<128x32xf32>
    %120 = math.absf %116 : vector<128x32xf32>
    %cst_70 = arith.constant 0.000000e+00 : f32
    %121 = vector.broadcast %cst_70 : f32 to vector<128x32xf32>
    %122 = arith.subf %121, %120 : vector<128x32xf32>
    %123 = math.exp %122 : vector<128x32xf32>
    %124 = math.log1p %123 : vector<128x32xf32>
    %125 = arith.addf %114, %124 : vector<128x32xf32>
    %126 = arith.select %117, %119, %125 : vector<128x32xi1>, vector<128x32xf32>
    %127 = arith.mulf %111, %126 : vector<128x32xf32>
    %cst_71 = arith.constant dense<0.000000e+00> : vector<16x32xf32>
    %128 = tpu.matmul %9, %127, %cst_71 {dimension_numbers = #tpu.dot_dimension_numbers<[1], [0], [0], [1], [0, 0, 1, 1], [], []>} : vector<16x128xf32>, vector<128x32xf32>, vector<16x32xf32> -> vector<16x32xf32>
    %c1_72 = arith.constant 1 : index
    %c0_73 = arith.constant 0 : index
    %c0_74 = arith.constant 0 : index
    %129 = vector.load %arg15[%c1_72, %c0_73, %c0_74] : memref<3x1x32xf32, #tpu.memory_space<vmem>>, vector<1x1x32xf32>
    %130 = vector.shape_cast %129 : vector<1x1x32xf32> to vector<1x32xf32>
    %131 = vector.broadcast %130 : vector<1x32xf32> to vector<16x32xf32>
    %132 = arith.mulf %128, %131 : vector<16x32xf32>
    %c1_75 = arith.constant 1 : index
    %c0_76 = arith.constant 0 : index
    %c0_77 = arith.constant 0 : index
    %133 = vector.load %arg16[%c1_75, %c0_76, %c0_77] : memref<3x1x32xf32, #tpu.memory_space<vmem>>, vector<1x1x32xf32>
    %134 = vector.shape_cast %133 : vector<1x1x32xf32> to vector<1x32xf32>
    %135 = vector.broadcast %134 : vector<1x32xf32> to vector<16x32xf32>
    %136 = arith.addf %132, %135 : vector<16x32xf32>
    %137 = arith.addf %81, %136 : vector<16x32xf32>
    %cst_78 = arith.constant 0.000000e+00 : f32
    %138 = vector.broadcast %cst_78 : f32 to vector<16x32xf32>
    %139 = arith.maximumf %137, %138 : vector<16x32xf32>
    %140 = vector.broadcast %cst_78 : f32 to vector<16x32xf32>
    %141 = arith.subf %137, %140 : vector<16x32xf32>
    %142 = arith.cmpf one, %141, %141 : vector<16x32xf32>
    %143 = vector.broadcast %cst_78 : f32 to vector<16x32xf32>
    %144 = arith.addf %137, %143 : vector<16x32xf32>
    %145 = math.absf %141 : vector<16x32xf32>
    %cst_79 = arith.constant 0.000000e+00 : f32
    %146 = vector.broadcast %cst_79 : f32 to vector<16x32xf32>
    %147 = arith.subf %146, %145 : vector<16x32xf32>
    %148 = math.exp %147 : vector<16x32xf32>
    %149 = math.log1p %148 : vector<16x32xf32>
    %150 = arith.addf %139, %149 : vector<16x32xf32>
    %151 = arith.select %142, %144, %150 : vector<16x32xi1>, vector<16x32xf32>
    %152 = arith.truncf %151 : vector<16x32xf32> to vector<16x32xbf16>
    %c2 = arith.constant 2 : index
    %c0_80 = arith.constant 0 : index
    %c0_81 = arith.constant 0 : index
    %153 = vector.load %arg10[%c2, %c0_80, %c0_81] : memref<3x32x64xbf16, #tpu.memory_space<vmem>>, vector<1x32x64xbf16>
    %154 = vector.shape_cast %153 : vector<1x32x64xbf16> to vector<32x64xbf16>
    %cst_82 = arith.constant dense<0.000000e+00> : vector<16x64xf32>
    %155 = tpu.matmul %152, %154, %cst_82 {dimension_numbers = #tpu.dot_dimension_numbers<[1], [0], [0], [1], [0, 0, 1, 1], [], []>} : vector<16x32xbf16>, vector<32x64xbf16>, vector<16x64xf32> -> vector<16x64xf32>
    %c2_83 = arith.constant 2 : index
    %c0_84 = arith.constant 0 : index
    %c0_85 = arith.constant 0 : index
    %156 = vector.load %arg11[%c2_83, %c0_84, %c0_85] : memref<3x32x64xbf16, #tpu.memory_space<vmem>>, vector<1x32x64xbf16>
    %157 = vector.shape_cast %156 : vector<1x32x64xbf16> to vector<32x64xbf16>
    %cst_86 = arith.constant dense<0.000000e+00> : vector<16x64xf32>
    %158 = tpu.matmul %152, %157, %cst_86 {dimension_numbers = #tpu.dot_dimension_numbers<[1], [0], [0], [1], [0, 0, 1, 1], [], []>} : vector<16x32xbf16>, vector<32x64xbf16>, vector<16x64xf32> -> vector<16x64xf32>
    %c2_87 = arith.constant 2 : index
    %c0_88 = arith.constant 0 : index
    %c0_89 = arith.constant 0 : index
    %159 = vector.load %arg12[%c2_87, %c0_88, %c0_89] : memref<3x16x64xbf16, #tpu.memory_space<vmem>>, vector<1x16x64xbf16>
    %160 = vector.shape_cast %159 : vector<1x16x64xbf16> to vector<16x64xbf16>
    %cst_90 = arith.constant dense<0.000000e+00> : vector<128x64xf32>
    %161 = tpu.matmul %11, %160, %cst_90 {dimension_numbers = #tpu.dot_dimension_numbers<[1], [0], [0], [1], [0, 0, 1, 1], [], []>} : vector<128x16xbf16>, vector<16x64xbf16>, vector<128x64xf32> -> vector<128x64xf32>
    %cst_91 = arith.constant dense<0.000000e+00> : vector<128x64xf32>
    %162 = tpu.matmul %8, %155, %cst_91 {dimension_numbers = #tpu.dot_dimension_numbers<[1], [0], [0], [1], [0, 0, 1, 1], [], []>} : vector<128x16xf32>, vector<16x64xf32>, vector<128x64xf32> -> vector<128x64xf32>
    %cst_92 = arith.constant dense<0.000000e+00> : vector<128x64xf32>
    %163 = tpu.matmul %7, %158, %cst_92 {dimension_numbers = #tpu.dot_dimension_numbers<[1], [0], [0], [1], [0, 0, 1, 1], [], []>} : vector<128x16xf32>, vector<16x64xf32>, vector<128x64xf32> -> vector<128x64xf32>
    %164 = arith.addf %162, %163 : vector<128x64xf32>
    %165 = arith.addf %164, %161 : vector<128x64xf32>
    %c2_93 = arith.constant 2 : index
    %c0_94 = arith.constant 0 : index
    %c0_95 = arith.constant 0 : index
    %166 = vector.load %arg13[%c2_93, %c0_94, %c0_95] : memref<3x1x64xf32, #tpu.memory_space<vmem>>, vector<1x1x64xf32>
    %167 = vector.shape_cast %166 : vector<1x1x64xf32> to vector<1x64xf32>
    %168 = vector.broadcast %167 : vector<1x64xf32> to vector<128x64xf32>
    %169 = arith.mulf %165, %168 : vector<128x64xf32>
    %c2_96 = arith.constant 2 : index
    %c0_97 = arith.constant 0 : index
    %c0_98 = arith.constant 0 : index
    %170 = vector.load %arg14[%c2_96, %c0_97, %c0_98] : memref<3x1x64xf32, #tpu.memory_space<vmem>>, vector<1x1x64xf32>
    %171 = vector.shape_cast %170 : vector<1x1x64xf32> to vector<1x64xf32>
    %172 = vector.broadcast %171 : vector<1x64xf32> to vector<128x64xf32>
    %173 = arith.addf %169, %172 : vector<128x64xf32>
    %174 = vector.extract_strided_slice %173 {offsets = [0, 0], sizes = [128, 32], strides = [1, 1]} : vector<128x64xf32> to vector<128x32xf32>
    %cst_99 = arith.constant 5.000000e-01 : f32
    %175 = vector.broadcast %cst_99 : f32 to vector<128x32xf32>
    %176 = arith.mulf %175, %174 : vector<128x32xf32>
    %177 = math.tanh %176 : vector<128x32xf32>
    %cst_100 = arith.constant 5.000000e-01 : f32
    %178 = vector.broadcast %cst_100 : f32 to vector<128x32xf32>
    %179 = arith.mulf %178, %177 : vector<128x32xf32>
    %cst_101 = arith.constant 5.000000e-01 : f32
    %180 = vector.broadcast %cst_101 : f32 to vector<128x32xf32>
    %181 = arith.addf %179, %180 : vector<128x32xf32>
    %182 = vector.extract_strided_slice %173 {offsets = [0, 32], sizes = [128, 32], strides = [1, 1]} : vector<128x64xf32> to vector<128x32xf32>
    %cst_102 = arith.constant 0.000000e+00 : f32
    %183 = vector.broadcast %cst_102 : f32 to vector<128x32xf32>
    %184 = arith.maximumf %182, %183 : vector<128x32xf32>
    %185 = vector.broadcast %cst_102 : f32 to vector<128x32xf32>
    %186 = arith.subf %182, %185 : vector<128x32xf32>
    %187 = arith.cmpf one, %186, %186 : vector<128x32xf32>
    %188 = vector.broadcast %cst_102 : f32 to vector<128x32xf32>
    %189 = arith.addf %182, %188 : vector<128x32xf32>
    %190 = math.absf %186 : vector<128x32xf32>
    %cst_103 = arith.constant 0.000000e+00 : f32
    %191 = vector.broadcast %cst_103 : f32 to vector<128x32xf32>
    %192 = arith.subf %191, %190 : vector<128x32xf32>
    %193 = math.exp %192 : vector<128x32xf32>
    %194 = math.log1p %193 : vector<128x32xf32>
    %195 = arith.addf %184, %194 : vector<128x32xf32>
    %196 = arith.select %187, %189, %195 : vector<128x32xi1>, vector<128x32xf32>
    %197 = arith.mulf %181, %196 : vector<128x32xf32>
    %cst_104 = arith.constant dense<0.000000e+00> : vector<16x32xf32>
    %198 = tpu.matmul %9, %197, %cst_104 {dimension_numbers = #tpu.dot_dimension_numbers<[1], [0], [0], [1], [0, 0, 1, 1], [], []>} : vector<16x128xf32>, vector<128x32xf32>, vector<16x32xf32> -> vector<16x32xf32>
    %c2_105 = arith.constant 2 : index
    %c0_106 = arith.constant 0 : index
    %c0_107 = arith.constant 0 : index
    %199 = vector.load %arg15[%c2_105, %c0_106, %c0_107] : memref<3x1x32xf32, #tpu.memory_space<vmem>>, vector<1x1x32xf32>
    %200 = vector.shape_cast %199 : vector<1x1x32xf32> to vector<1x32xf32>
    %201 = vector.broadcast %200 : vector<1x32xf32> to vector<16x32xf32>
    %202 = arith.mulf %198, %201 : vector<16x32xf32>
    %c2_108 = arith.constant 2 : index
    %c0_109 = arith.constant 0 : index
    %c0_110 = arith.constant 0 : index
    %203 = vector.load %arg16[%c2_108, %c0_109, %c0_110] : memref<3x1x32xf32, #tpu.memory_space<vmem>>, vector<1x1x32xf32>
    %204 = vector.shape_cast %203 : vector<1x1x32xf32> to vector<1x32xf32>
    %205 = vector.broadcast %204 : vector<1x32xf32> to vector<16x32xf32>
    %206 = arith.addf %202, %205 : vector<16x32xf32>
    %207 = arith.addf %151, %206 : vector<16x32xf32>
    %cst_111 = arith.constant 0.000000e+00 : f32
    %208 = vector.broadcast %cst_111 : f32 to vector<16x32xf32>
    %209 = arith.maximumf %207, %208 : vector<16x32xf32>
    %210 = vector.broadcast %cst_111 : f32 to vector<16x32xf32>
    %211 = arith.subf %207, %210 : vector<16x32xf32>
    %212 = arith.cmpf one, %211, %211 : vector<16x32xf32>
    %213 = vector.broadcast %cst_111 : f32 to vector<16x32xf32>
    %214 = arith.addf %207, %213 : vector<16x32xf32>
    %215 = math.absf %211 : vector<16x32xf32>
    %cst_112 = arith.constant 0.000000e+00 : f32
    %216 = vector.broadcast %cst_112 : f32 to vector<16x32xf32>
    %217 = arith.subf %216, %215 : vector<16x32xf32>
    %218 = math.exp %217 : vector<16x32xf32>
    %219 = math.log1p %218 : vector<16x32xf32>
    %220 = arith.addf %209, %219 : vector<16x32xf32>
    %221 = arith.select %212, %214, %220 : vector<16x32xi1>, vector<16x32xf32>
    %c0_113 = arith.constant 0 : index
    %c0_114 = arith.constant 0 : index
    %222 = vector.load %arg6[%c0_113, %c0_114] : memref<2x16xf32, #tpu.memory_space<vmem>>, vector<2x16xf32>
    %cst_115 = arith.constant dense<0.000000e+00> : vector<2x32xf32>
    %223 = tpu.matmul %222, %221, %cst_115 {dimension_numbers = #tpu.dot_dimension_numbers<[1], [0], [0], [1], [0, 0, 1, 1], [], []>} : vector<2x16xf32>, vector<16x32xf32>, vector<2x32xf32> -> vector<2x32xf32>
    %cst_116 = arith.constant 0.000000e+00 : f32
    %224 = vector.broadcast %cst_116 : f32 to vector<2x32xf32>
    %225 = arith.maximumf %223, %224 : vector<2x32xf32>
    %226 = vector.broadcast %cst_116 : f32 to vector<2x32xf32>
    %227 = arith.subf %223, %226 : vector<2x32xf32>
    %228 = arith.cmpf one, %227, %227 : vector<2x32xf32>
    %229 = vector.broadcast %cst_116 : f32 to vector<2x32xf32>
    %230 = arith.addf %223, %229 : vector<2x32xf32>
    %231 = math.absf %227 : vector<2x32xf32>
    %cst_117 = arith.constant 0.000000e+00 : f32
    %232 = vector.broadcast %cst_117 : f32 to vector<2x32xf32>
    %233 = arith.subf %232, %231 : vector<2x32xf32>
    %234 = math.exp %233 : vector<2x32xf32>
    %235 = math.log1p %234 : vector<2x32xf32>
    %236 = arith.addf %225, %235 : vector<2x32xf32>
    %237 = arith.select %228, %230, %236 : vector<2x32xi1>, vector<2x32xf32>
    %c0_118 = arith.constant 0 : index
    %c0_119 = arith.constant 0 : index
    %238 = vector.load %arg17[%c0_118, %c0_119] : memref<32x64xf32, #tpu.memory_space<vmem>>, vector<32x64xf32>
    %cst_120 = arith.constant dense<0.000000e+00> : vector<2x64xf32>
    %239 = tpu.matmul %237, %238, %cst_120 {dimension_numbers = #tpu.dot_dimension_numbers<[1], [0], [0], [1], [0, 0, 1, 1], [], []>} : vector<2x32xf32>, vector<32x64xf32>, vector<2x64xf32> -> vector<2x64xf32>
    %c0_121 = arith.constant 0 : index
    %c0_122 = arith.constant 0 : index
    %240 = vector.load %arg7[%c0_121, %c0_122] : memref<2x8xf32, #tpu.memory_space<vmem>>, vector<2x8xf32>
    %cst_123 = arith.constant 0.000000e+00 : f32
    %241 = vector.broadcast %cst_123 : f32 to vector<2x8xf32>
    %242 = arith.maximumf %240, %241 : vector<2x8xf32>
    %243 = vector.broadcast %cst_123 : f32 to vector<2x8xf32>
    %244 = arith.subf %240, %243 : vector<2x8xf32>
    %245 = arith.cmpf one, %244, %244 : vector<2x8xf32>
    %246 = vector.broadcast %cst_123 : f32 to vector<2x8xf32>
    %247 = arith.addf %240, %246 : vector<2x8xf32>
    %248 = math.absf %244 : vector<2x8xf32>
    %cst_124 = arith.constant 0.000000e+00 : f32
    %249 = vector.broadcast %cst_124 : f32 to vector<2x8xf32>
    %250 = arith.subf %249, %248 : vector<2x8xf32>
    %251 = math.exp %250 : vector<2x8xf32>
    %252 = math.log1p %251 : vector<2x8xf32>
    %253 = arith.addf %242, %252 : vector<2x8xf32>
    %254 = arith.select %245, %247, %253 : vector<2x8xi1>, vector<2x8xf32>
    %c0_125 = arith.constant 0 : index
    %c0_126 = arith.constant 0 : index
    %255 = vector.load %arg18[%c0_125, %c0_126] : memref<8x64xf32, #tpu.memory_space<vmem>>, vector<8x64xf32>
    %cst_127 = arith.constant dense<0.000000e+00> : vector<2x64xf32>
    %256 = tpu.matmul %254, %255, %cst_127 {dimension_numbers = #tpu.dot_dimension_numbers<[1], [0], [0], [1], [0, 0, 1, 1], [], []>} : vector<2x8xf32>, vector<8x64xf32>, vector<2x64xf32> -> vector<2x64xf32>
    %257 = arith.addf %239, %256 : vector<2x64xf32>
    %c0_128 = arith.constant 0 : index
    %c0_129 = arith.constant 0 : index
    %258 = vector.load %arg19[%c0_128, %c0_129] : memref<1x64xf32, #tpu.memory_space<vmem>>, vector<1x64xf32>
    %259 = vector.broadcast %258 : vector<1x64xf32> to vector<2x64xf32>
    %260 = arith.addf %257, %259 : vector<2x64xf32>
    %cst_130 = arith.constant 0.000000e+00 : f32
    %261 = vector.broadcast %cst_130 : f32 to vector<2x64xf32>
    %262 = arith.maximumf %260, %261 : vector<2x64xf32>
    %263 = vector.broadcast %cst_130 : f32 to vector<2x64xf32>
    %264 = arith.subf %260, %263 : vector<2x64xf32>
    %265 = arith.cmpf one, %264, %264 : vector<2x64xf32>
    %266 = vector.broadcast %cst_130 : f32 to vector<2x64xf32>
    %267 = arith.addf %260, %266 : vector<2x64xf32>
    %268 = math.absf %264 : vector<2x64xf32>
    %cst_131 = arith.constant 0.000000e+00 : f32
    %269 = vector.broadcast %cst_131 : f32 to vector<2x64xf32>
    %270 = arith.subf %269, %268 : vector<2x64xf32>
    %271 = math.exp %270 : vector<2x64xf32>
    %272 = math.log1p %271 : vector<2x64xf32>
    %273 = arith.addf %262, %272 : vector<2x64xf32>
    %274 = arith.select %265, %267, %273 : vector<2x64xi1>, vector<2x64xf32>
    %c0_132 = arith.constant 0 : index
    %c0_133 = arith.constant 0 : index
    %275 = vector.load %arg20[%c0_132, %c0_133] : memref<64x1xf32, #tpu.memory_space<vmem>>, vector<64x1xf32>
    %cst_134 = arith.constant dense<0.000000e+00> : vector<2x1xf32>
    %276 = tpu.matmul %274, %275, %cst_134 {dimension_numbers = #tpu.dot_dimension_numbers<[1], [0], [0], [1], [0, 0, 1, 1], [], []>} : vector<2x64xf32>, vector<64x1xf32>, vector<2x1xf32> -> vector<2x1xf32>
    %c0_135 = arith.constant 0 : index
    %c0_136 = arith.constant 0 : index
    %277 = vector.load %arg21[%c0_135, %c0_136] : memref<1x1xf32, #tpu.memory_space<vmem>>, vector<1x1xf32>
    %278 = vector.broadcast %277 : vector<1x1xf32> to vector<2x1xf32>
    %279 = arith.addf %276, %278 : vector<2x1xf32>
    %c0_137 = arith.constant 0 : index
    %c0_138 = arith.constant 0 : index
    %280 = vector.load %arg22[%c0_137, %c0_138] : memref<2x1xf32, #tpu.memory_space<vmem>>, vector<2x1xf32>
    tpu.vector_store %arg22[%c0_137, %c0_138], %279 {strides = array<i32>} : memref<2x1xf32, #tpu.memory_space<vmem>>, vector<2x1xf32>,
    return
  }
  func.func @transform_0(%arg0: i32) -> (i32, i32) {
    %c0_i32 = arith.constant 0 : i32
    %c0_i32_0 = arith.constant 0 : i32
    %c0_i32_1 = arith.constant 0 : i32
    return %c0_i32, %c0_i32_0 : i32, i32
  }
  func.func @transform_1(%arg0: i32) -> (i32, i32) {
    %c0_i32 = arith.constant 0 : i32
    %c0_i32_0 = arith.constant 0 : i32
    %c0_i32_1 = arith.constant 0 : i32
    return %c0_i32, %c0_i32_0 : i32, i32
  }
  func.func @transform_2(%arg0: i32) -> (i32, i32) {
    %c0_i32 = arith.constant 0 : i32
    %c0_i32_0 = arith.constant 0 : i32
    %c0_i32_1 = arith.constant 0 : i32
    return %c0_i32, %c0_i32_0 : i32, i32
  }
  func.func @transform_3(%arg0: i32) -> (i32, i32) {
    %c0_i32 = arith.constant 0 : i32
    %c0_i32_0 = arith.constant 0 : i32
    %c0_i32_1 = arith.constant 0 : i32
    return %c0_i32, %c0_i32_0 : i32, i32
  }
  func.func @transform_4(%arg0: i32) -> (i32, i32) {
    %c0_i32 = arith.constant 0 : i32
    %c0_i32_0 = arith.constant 0 : i32
    %c0_i32_1 = arith.constant 0 : i32
    return %c0_i32, %c0_i32_0 : i32, i32
  }
  func.func @transform_5(%arg0: i32) -> (i32, i32) {
    %c0_i32 = arith.constant 0 : i32
    %c0_i32_0 = arith.constant 0 : i32
    %c0_i32_1 = arith.constant 0 : i32
    return %c0_i32, %c0_i32_0 : i32, i32
  }
  func.func @transform_6(%arg0: i32) -> (i32, i32) {
    %c0_i32 = arith.constant 0 : i32
    %c0_i32_0 = arith.constant 0 : i32
    %c0_i32_1 = arith.constant 0 : i32
    return %c0_i32, %c0_i32_0 : i32, i32
  }
  func.func @transform_7(%arg0: i32) -> (i32, i32) {
    %c0_i32 = arith.constant 0 : i32
    %c0_i32_0 = arith.constant 0 : i32
    %c0_i32_1 = arith.constant 0 : i32
    return %c0_i32, %c0_i32_0 : i32, i32
  }
  func.func @transform_8(%arg0: i32) -> (i32, i32) {
    %c0_i32 = arith.constant 0 : i32
    %c0_i32_0 = arith.constant 0 : i32
    %c0_i32_1 = arith.constant 0 : i32
    return %c0_i32, %c0_i32_0 : i32, i32
  }
  func.func @transform_9(%arg0: i32) -> (i32, i32, i32) {
    %c0_i32 = arith.constant 0 : i32
    %c0_i32_0 = arith.constant 0 : i32
    %c0_i32_1 = arith.constant 0 : i32
    %c0_i32_2 = arith.constant 0 : i32
    return %c0_i32, %c0_i32_0, %c0_i32_1 : i32, i32, i32
  }
  func.func @transform_10(%arg0: i32) -> (i32, i32, i32) {
    %c0_i32 = arith.constant 0 : i32
    %c0_i32_0 = arith.constant 0 : i32
    %c0_i32_1 = arith.constant 0 : i32
    %c0_i32_2 = arith.constant 0 : i32
    return %c0_i32, %c0_i32_0, %c0_i32_1 : i32, i32, i32
  }
  func.func @transform_11(%arg0: i32) -> (i32, i32, i32) {
    %c0_i32 = arith.constant 0 : i32
    %c0_i32_0 = arith.constant 0 : i32
    %c0_i32_1 = arith.constant 0 : i32
    %c0_i32_2 = arith.constant 0 : i32
    return %c0_i32, %c0_i32_0, %c0_i32_1 : i32, i32, i32
  }
  func.func @transform_12(%arg0: i32) -> (i32, i32, i32) {
    %c0_i32 = arith.constant 0 : i32
    %c0_i32_0 = arith.constant 0 : i32
    %c0_i32_1 = arith.constant 0 : i32
    %c0_i32_2 = arith.constant 0 : i32
    return %c0_i32, %c0_i32_0, %c0_i32_1 : i32, i32, i32
  }
  func.func @transform_13(%arg0: i32) -> (i32, i32, i32) {
    %c0_i32 = arith.constant 0 : i32
    %c0_i32_0 = arith.constant 0 : i32
    %c0_i32_1 = arith.constant 0 : i32
    %c0_i32_2 = arith.constant 0 : i32
    return %c0_i32, %c0_i32_0, %c0_i32_1 : i32, i32, i32
  }
  func.func @transform_14(%arg0: i32) -> (i32, i32, i32) {
    %c0_i32 = arith.constant 0 : i32
    %c0_i32_0 = arith.constant 0 : i32
    %c0_i32_1 = arith.constant 0 : i32
    %c0_i32_2 = arith.constant 0 : i32
    return %c0_i32, %c0_i32_0, %c0_i32_1 : i32, i32, i32
  }
  func.func @transform_15(%arg0: i32) -> (i32, i32, i32) {
    %c0_i32 = arith.constant 0 : i32
    %c0_i32_0 = arith.constant 0 : i32
    %c0_i32_1 = arith.constant 0 : i32
    %c0_i32_2 = arith.constant 0 : i32
    return %c0_i32, %c0_i32_0, %c0_i32_1 : i32, i32, i32
  }
  func.func @transform_16(%arg0: i32) -> (i32, i32) {
    %c0_i32 = arith.constant 0 : i32
    %c0_i32_0 = arith.constant 0 : i32
    %c0_i32_1 = arith.constant 0 : i32
    return %c0_i32, %c0_i32_0 : i32, i32
  }
  func.func @transform_17(%arg0: i32) -> (i32, i32) {
    %c0_i32 = arith.constant 0 : i32
    %c0_i32_0 = arith.constant 0 : i32
    %c0_i32_1 = arith.constant 0 : i32
    return %c0_i32, %c0_i32_0 : i32, i32
  }
  func.func @transform_18(%arg0: i32) -> (i32, i32) {
    %c0_i32 = arith.constant 0 : i32
    %c0_i32_0 = arith.constant 0 : i32
    %c0_i32_1 = arith.constant 0 : i32
    return %c0_i32, %c0_i32_0 : i32, i32
  }
  func.func @transform_19(%arg0: i32) -> (i32, i32) {
    %c0_i32 = arith.constant 0 : i32
    %c0_i32_0 = arith.constant 0 : i32
    %c0_i32_1 = arith.constant 0 : i32
    return %c0_i32, %c0_i32_0 : i32, i32
  }
  func.func @transform_20(%arg0: i32) -> (i32, i32) {
    %c0_i32 = arith.constant 0 : i32
    %c0_i32_0 = arith.constant 0 : i32
    %c0_i32_1 = arith.constant 0 : i32
    return %c0_i32, %c0_i32_0 : i32, i32
  }
  func.func @transform_21(%arg0: i32) -> (i32, i32) {
    %c0_i32 = arith.constant 0 : i32
    %c0_i32_0 = arith.constant 0 : i32
    %c0_i32_1 = arith.constant 0 : i32
    return %c0_i32, %c0_i32_0 : i32, i32
  }
}

</mosaic_0001>

<llo_original>
// kernel: eq.1
$region0: #{eq.1}
  %s0 = inlined_call_operand.vmem [shape: s32[16,8], index: 0, kind: input, shape index: {}]
  %s1 = inlined_call_operand.vmem [shape: s32[128], index: 1, kind: output, shape index: {}]
  $region1: #{eq.1} parent=0
    #allocation0 [shape = 'u8[4096]{0}', space=vmem, size = 0x1000, scoped, tag = 'scoped mem for output reshape']
    %v2 = vld [vmem:[%s0] sm:$0x1]
    %vm3 = vcmask 64512
    %4 = vst.msk [vmem:[#allocation0] sm:$0x1] %vm3, %v2
    %s5 = scalar_lea.vmem %s0, 15
    %v6 = vld [vmem:[%s5] sm:$0x1]
    %7 = vrot.lane.b32.xlu0 %v6, 120
    %v8 = vpop.permute.xlu0 %7
    %vm9 = vcmask 1048512
    %10 = vst.msk [vmem:[#allocation0] sm:$0x1] %vm9, %v8
    %s11 = scalar_lea.vmem %s0, 14
    %v12 = vld [vmem:[%s11] sm:$0x1]
    %13 = vrot.lane.b32.xlu0 %v12, 112
    %v14 = vpop.permute.xlu0 %13
    %vm15 = vcmask 982912
    %16 = vst.msk [vmem:[#allocation0] sm:$0x1] %vm15, %v14
    %s17 = scalar_lea.vmem %s0, 13
    %v18 = vld [vmem:[%s17] sm:$0x1]
    %19 = vrot.lane.b32.xlu0 %v18, 104
    %v20 = vpop.permute.xlu0 %19
    %vm21 = vcmask 917312
    %22 = vst.msk [vmem:[#allocation0] sm:$0x1] %vm21, %v20
    %s23 = scalar_lea.vmem %s0, 12
    %v24 = vld [vmem:[%s23] sm:$0x1]
    %25 = vrot.lane.b32.xlu0 %v24, 96
    %v26 = vpop.permute.xlu0 %25
    %vm27 = vcmask 851712
    %28 = vst.msk [vmem:[#allocation0] sm:$0x1] %vm27, %v26
    %s29 = scalar_lea.vmem %s0, 11
    %v30 = vld [vmem:[%s29] sm:$0x1]
    %31 = vrot.lane.b32.xlu0 %v30, 88
    %v32 = vpop.permute.xlu0 %31
    %vm33 = vcmask 786112
    %34 = vst.msk [vmem:[#allocation0] sm:$0x1] %vm33, %v32
    %s35 = scalar_lea.vmem %s0, 10
    %v36 = vld [vmem:[%s35] sm:$0x1]
    %37 = vrot.lane.b32.xlu0 %v36, 80
    %v38 = vpop.permute.xlu0 %37
    %vm39 = vcmask 720512
    %40 = vst.msk [vmem:[#allocation0] sm:$0x1] %vm39, %v38
    %s41 = scalar_lea.vmem %s0, 9
    %v42 = vld [vmem:[%s41] sm:$0x1]
    %43 = vrot.lane.b32.xlu0 %v42, 72
    %v44 = vpop.permute.xlu0 %43
    %vm45 = vcmask 654912
    %46 = vst.msk [vmem:[#allocation0] sm:$0x1] %vm45, %v44
    %s47 = scalar_lea.vmem %s0, 8
    %v48 = vld [vmem:[%s47] sm:$0x1]
    %49 = vrot.lane.b32.xlu0 %v48, 64
    %v50 = vpop.permute.xlu0 %49
    %vm51 = vcmask 589312
    %52 = vst.msk [vmem:[#allocation0] sm:$0x1] %vm51, %v50
    %s53 = scalar_lea.vmem %s0, 7
    %v54 = vld [vmem:[%s53] sm:$0x1]
    %55 = vrot.lane.b32.xlu0 %v54, 56
    %v56 = vpop.permute.xlu0 %55
    %vm57 = vcmask 523712
    %58 = vst.msk [vmem:[#allocation0] sm:$0x1] %vm57, %v56
    %s59 = scalar_lea.vmem %s0, 6
    %v60 = vld [vmem:[%s59] sm:$0x1]
    %61 = vrot.lane.b32.xlu0 %v60, 48
    %v62 = vpop.permute.xlu0 %61
    %vm63 = vcmask 458112
    %64 = vst.msk [vmem:[#allocation0] sm:$0x1] %vm63, %v62
    %s65 = scalar_lea.vmem %s0, 5
    %v66 = vld [vmem:[%s65] sm:$0x1]
    %67 = vrot.lane.b32.xlu0 %v66, 40
    %v68 = vpop.permute.xlu0 %67
    %vm69 = vcmask 392512
    %70 = vst.msk [vmem:[#allocation0] sm:$0x1] %vm69, %v68
    %s71 = scalar_lea.vmem %s0, 4
    %v72 = vld [vmem:[%s71] sm:$0x1]
    %73 = vrot.lane.b32.xlu0 %v72, 32
    %v74 = vpop.permute.xlu0 %73
    %vm75 = vcmask 326912
    %76 = vst.msk [vmem:[#allocation0] sm:$0x1] %vm75, %v74
    %s77 = scalar_lea.vmem %s0, 3
    %v78 = vld [vmem:[%s77] sm:$0x1]
    %79 = vrot.lane.b32.xlu0 %v78, 24
    %v80 = vpop.permute.xlu0 %79
    %vm81 = vcmask 261312
    %82 = vst.msk [vmem:[#allocation0] sm:$0x1] %vm81, %v80
    %s83 = scalar_lea.vmem %s0, 2
    %v84 = vld [vmem:[%s83] sm:$0x1]
    %85 = vrot.lane.b32.xlu0 %v84, 16
    %v86 = vpop.permute.xlu0 %85
    %vm87 = vcmask 195712
    %88 = vst.msk [vmem:[#allocation0] sm:$0x1] %vm87, %v86
    %s89 = scalar_lea.vmem %s0, 1
    %v90 = vld [vmem:[%s89] sm:$0x1]
    %91 = vrot.lane.b32.xlu0 %v90, 8
    %v92 = vpop.permute.xlu0 %91
    %vm93 = vcmask 130112
    %94 = vst.msk [vmem:[#allocation0] sm:$0x1] %vm93, %v92
    %s96 = ssub.s32 2, 1
    %v97 = vld [vmem:[#allocation0] sm:%s96]
    %s99 = ssub.s32 2, 1
    %100 = vst [vmem:[%s1] sm:%s99] %v97

// kernel: cgcnn_forward.1
$region0: #{cgcnn_forward.1}
  #allocation0 [shape = 'u32[]', space=smem, size = 0x4, offset = 0x4, fixed_abs, tag = 'smem constant byte address 0x4 - core index']
  #allocation1 [shape = 'u32[72,128]{1,0:T(1,128)}', space=vmem, size = 0x9000, scoped, tag = 'internal scratch']
  #allocation2 [shape = 'f32[1,1]{1,0:T(1,128)S(1)}', space=vmem, size = 0x200, scoped, tag = 'scoped memory for cgcnn_forward.1']
  %s0 = inlined_call_operand.vmem [shape: f32[16,16], index: 0, kind: input, shape index: {}]
  %s1 = inlined_call_operand.vmem [shape: f32[128,16], index: 1, kind: input, shape index: {}]
  %s2 = inlined_call_operand.vmem [shape: f32[128,16], index: 2, kind: input, shape index: {}]
  %s3 = inlined_call_operand.vmem [shape: f32[128,16], index: 3, kind: input, shape index: {}]
  %s4 = inlined_call_operand.vmem [shape: f32[16,128], index: 4, kind: input, shape index: {}]
  %s5 = inlined_call_operand.vmem [shape: f32[2,16], index: 5, kind: input, shape index: {}]
  %s6 = inlined_call_operand.vmem [shape: f32[2,8], index: 6, kind: input, shape index: {}]
  %s7 = inlined_call_operand.vmem [shape: bf16[16,32], index: 7, kind: input, shape index: {}]
  %s8 = inlined_call_operand.vmem [shape: f32[1,32], index: 8, kind: input, shape index: {}]
  %s9 = inlined_call_operand.vmem [shape: bf16[3,32,64], index: 9, kind: input, shape index: {}]
  %s10 = inlined_call_operand.vmem [shape: bf16[3,32,64], index: 10, kind: input, shape index: {}]
  %s11 = inlined_call_operand.vmem [shape: bf16[3,16,64], index: 11, kind: input, shape index: {}]
  %s12 = inlined_call_operand.vmem [shape: f32[3,1,64], index: 12, kind: input, shape index: {}]
  %s13 = inlined_call_operand.vmem [shape: f32[3,1,64], index: 13, kind: input, shape index: {}]
  %s14 = inlined_call_operand.vmem [shape: f32[3,1,32], index: 14, kind: input, shape index: {}]
  %s15 = inlined_call_operand.vmem [shape: f32[3,1,32], index: 15, kind: input, shape index: {}]
  %s16 = inlined_call_operand.vmem [shape: f32[32,64], index: 16, kind: input, shape index: {}]
  %s17 = inlined_call_operand.vmem [shape: f32[8,64], index: 17, kind: input, shape index: {}]
  %s18 = inlined_call_operand.vmem [shape: f32[1,64], index: 18, kind: input, shape index: {}]
  %s19 = inlined_call_operand.vmem [shape: f32[64,1], index: 19, kind: input, shape index: {}]
  %s20 = inlined_call_operand.<no memory space> [shape: f32[1,1], index: 20, kind: input, shape index: {}]
  %s21 = inlined_call_operand.vmem [shape: f32[2,1], index: 21, kind: output, shape index: {}]
  %s22 = sld [smem:[#allocation0]]
  $region94: #{cgcnn_forward.1} parent=0
    _
  %s24 = ssub.s32 1, %s22
  %s25 = scalar_select 0, %s24, %s22
  %v26 = vstv %s20
  %27 = vst [vmem:[#allocation2] sm:$0x1] %v26
  // Predicated region
  $region2: #{cgcnn_forward.1} parent=0 // pred_check
    _
  $region3: #{cgcnn_forward.1} parent=0 // pred_check_branch
    %29 = sbr.rel (0) target = $region5
  $region4: #{cgcnn_forward.1} parent=0 // pred_region
    _
  $region5: #{cgcnn_forward.1} parent=0 // pred_fallthru
    _
  // Predicated region
  $region6: #{cgcnn_forward.1} parent=0 // pred_check
    _
  $region7: #{cgcnn_forward.1} parent=0 // pred_check_branch
    %31 = sbr.rel (0) target = $region9
  $region8: #{cgcnn_forward.1} parent=0 // pred_region
    _
  $region9: #{cgcnn_forward.1} parent=0 // pred_fallthru
    _
  // Predicated region
  $region10: #{cgcnn_forward.1} parent=0 // pred_check
    _
  $region11: #{cgcnn_forward.1} parent=0 // pred_check_branch
    %33 = sbr.rel (0) target = $region13
  $region12: #{cgcnn_forward.1} parent=0 // pred_region
    _
  $region13: #{cgcnn_forward.1} parent=0 // pred_fallthru
    _
  // Predicated region
  $region14: #{cgcnn_forward.1} parent=0 // pred_check
    _
  $region15: #{cgcnn_forward.1} parent=0 // pred_check_branch
    %35 = sbr.rel (0) target = $region17
  $region16: #{cgcnn_forward.1} parent=0 // pred_region
    _
  $region17: #{cgcnn_forward.1} parent=0 // pred_fallthru
    _
  // Predicated region
  $region18: #{cgcnn_forward.1} parent=0 // pred_check
    _
  $region19: #{cgcnn_forward.1} parent=0 // pred_check_branch
    %37 = sbr.rel (0) target = $region21
  $region20: #{cgcnn_forward.1} parent=0 // pred_region
    _
  $region21: #{cgcnn_forward.1} parent=0 // pred_fallthru
    _
  // Predicated region
  $region22: #{cgcnn_forward.1} parent=0 // pred_check
    _
  $region23: #{cgcnn_forward.1} parent=0 // pred_check_branch
    %39 = sbr.rel (0) target = $region25
  $region24: #{cgcnn_forward.1} parent=0 // pred_region
    _
  $region25: #{cgcnn_forward.1} parent=0 // pred_fallthru
    _
  // Predicated region
  $region26: #{cgcnn_forward.1} parent=0 // pred_check
    _
  $region27: #{cgcnn_forward.1} parent=0 // pred_check_branch
    %41 = sbr.rel (0) target = $region29
  $region28: #{cgcnn_forward.1} parent=0 // pred_region
    _
  $region29: #{cgcnn_forward.1} parent=0 // pred_fallthru
    _
  // Predicated region
  $region30: #{cgcnn_forward.1} parent=0 // pred_check
    _
  $region31: #{cgcnn_forward.1} parent=0 // pred_check_branch
    %43 = sbr.rel (0) target = $region33
  $region32: #{cgcnn_forward.1} parent=0 // pred_region
    _
  $region33: #{cgcnn_forward.1} parent=0 // pred_fallthru
    _
  // Predicated region
  $region34: #{cgcnn_forward.1} parent=0 // pred_check
    _
  $region35: #{cgcnn_forward.1} parent=0 // pred_check_branch
    %45 = sbr.rel (0) target = $region37
  $region36: #{cgcnn_forward.1} parent=0 // pred_region
    _
  $region37: #{cgcnn_forward.1} parent=0 // pred_fallthru
    _
  // Predicated region
  $region38: #{cgcnn_forward.1} parent=0 // pred_check
    _
  $region39: #{cgcnn_forward.1} parent=0 // pred_check_branch
    %47 = sbr.rel (0) target = $region41
  $region40: #{cgcnn_forward.1} parent=0 // pred_region
    _
  $region41: #{cgcnn_forward.1} parent=0 // pred_fallthru
    _
  // Predicated region
  $region42: #{cgcnn_forward.1} parent=0 // pred_check
    _
  $region43: #{cgcnn_forward.1} parent=0 // pred_check_branch
    %49 = sbr.rel (0) target = $region45
  $region44: #{cgcnn_forward.1} parent=0 // pred_region
    _
  $region45: #{cgcnn_forward.1} parent=0 // pred_fallthru
    _
  // Predicated region
  $region46: #{cgcnn_forward.1} parent=0 // pred_check
    _
  $region47: #{cgcnn_forward.1} parent=0 // pred_check_branch
    %51 = sbr.rel (0) target = $region49
  $region48: #{cgcnn_forward.1} parent=0 // pred_region
    _
  $region49: #{cgcnn_forward.1} parent=0 // pred_fallthru
    _
  // Predicated region
  $region50: #{cgcnn_forward.1} parent=0 // pred_check
    _
  $region51: #{cgcnn_forward.1} parent=0 // pred_check_branch
    %53 = sbr.rel (0) target = $region53
  $region52: #{cgcnn_forward.1} parent=0 // pred_region
    _
  $region53: #{cgcnn_forward.1} parent=0 // pred_fallthru
    _
  // Predicated region
  $region54: #{cgcnn_forward.1} parent=0 // pred_check
    _
  $region55: #{cgcnn_forward.1} parent=0 // pred_check_branch
    %55 = sbr.rel (0) target = $region57
  $region56: #{cgcnn_forward.1} parent=0 // pred_region
    _
  $region57: #{cgcnn_forward.1} parent=0 // pred_fallthru
    _
  // Predicated region
  $region58: #{cgcnn_forward.1} parent=0 // pred_check
    _
  $region59: #{cgcnn_forward.1} parent=0 // pred_check_branch
    %57 = sbr.rel (0) target = $region61
  $region60: #{cgcnn_forward.1} parent=0 // pred_region
    _
  $region61: #{cgcnn_forward.1} parent=0 // pred_fallthru
    _
  // Predicated region
  $region62: #{cgcnn_forward.1} parent=0 // pred_check
    _
  $region63: #{cgcnn_forward.1} parent=0 // pred_check_branch
    %59 = sbr.rel (0) target = $region65
  $region64: #{cgcnn_forward.1} parent=0 // pred_region
    _
  $region65: #{cgcnn_forward.1} parent=0 // pred_fallthru
    _
  // Predicated region
  $region66: #{cgcnn_forward.1} parent=0 // pred_check
    _
  $region67: #{cgcnn_forward.1} parent=0 // pred_check_branch
    %61 = sbr.rel (0) target = $region69
  $region68: #{cgcnn_forward.1} parent=0 // pred_region
    _
  $region69: #{cgcnn_forward.1} parent=0 // pred_fallthru
    _
  // Predicated region
  $region70: #{cgcnn_forward.1} parent=0 // pred_check
    _
  $region71: #{cgcnn_forward.1} parent=0 // pred_check_branch
    %63 = sbr.rel (0) target = $region73
  $region72: #{cgcnn_forward.1} parent=0 // pred_region
    _
  $region73: #{cgcnn_forward.1} parent=0 // pred_fallthru
    _
  // Predicated region
  $region74: #{cgcnn_forward.1} parent=0 // pred_check
    _
  $region75: #{cgcnn_forward.1} parent=0 // pred_check_branch
    %65 = sbr.rel (0) target = $region77
  $region76: #{cgcnn_forward.1} parent=0 // pred_region
    _
  $region77: #{cgcnn_forward.1} parent=0 // pred_fallthru
    _
  // Predicated region
  $region78: #{cgcnn_forward.1} parent=0 // pred_check
    _
  $region79: #{cgcnn_forward.1} parent=0 // pred_check_branch
    %67 = sbr.rel (0) target = $region81
  $region80: #{cgcnn_forward.1} parent=0 // pred_region
    _
  $region81: #{cgcnn_forward.1} parent=0 // pred_fallthru
    _
  // Predicated region
  $region82: #{cgcnn_forward.1} parent=0 // pred_check
    _
  $region83: #{cgcnn_forward.1} parent=0 // pred_check_branch
    %69 = sbr.rel (0) target = $region85
  $region84: #{cgcnn_forward.1} parent=0 // pred_region
    _
  $region85: #{cgcnn_forward.1} parent=0 // pred_fallthru
    _
  %v71 = vld [vmem:[%s0] sm:$0xff]
  %v72 = vld [vmem:[%s0 + $0x8] sm:$0xff]
  %v73 = vpack.c.bf16 %v72, %v71
  %v74 = vld [vmem:[%s7] sm:$0xf]
  %v75 = vld [vmem:[%s7 + $0x4] sm:$0xf]
  %v76 = vld [vmem:[%s8] sm:$0x1]
  %v78 = vperm.slane %v76, 0
  %v82 = vunpack.c.l.b16 %v74
  %v83 = vunpack.c.l.b16 %v75
  %v84 = vpack.c.b16 %v83, %v82
  %vm86 = vcmask 130048
  %v88 = vsel %vm86, %v73, 0
  %90 = vmatpush.bf16.msra.mxu0 0
  %91 = vmatpush.bf16.msra.mxu0 0
  %92 = vmatpush.bf16.msra.mxu0 0
  %93 = vmatpush.bf16.msra.mxu0 0
  %94 = vmatpush.bf16.msra.mxu0 0
  %95 = vmatpush.bf16.msra.mxu0 0
  %96 = vmatpush.bf16.msra.mxu0 0
  %97 = vmatpush.bf16.msra.mxu0 %v84
  %98 = vmatmul.bf16.gmra.mxu0 %v88
  %v99 = vpop.f32.mrf.mxu0
  %v100 = vadd.f32 %v78, %v99
  %v101 = vpop.f32.mrf.mxu0
  %v102 = vadd.f32 %v78, %v101
  %103 = vdwg.mxu0
  %v104 = vld [vmem:[%s2] sm:$0xff]
  %v105 = vld [vmem:[%s2 + $0x8] sm:$0xff]
  %v106 = vld [vmem:[%s2 + $0x10] sm:$0xff]
  %v107 = vld [vmem:[%s2 + $0x18] sm:$0xff]
  %v108 = vld [vmem:[%s2 + $0x20] sm:$0xff]
  %v109 = vld [vmem:[%s2 + $0x28] sm:$0xff]
  %v110 = vld [vmem:[%s2 + $0x30] sm:$0xff]
  %v111 = vld [vmem:[%s2 + $0x38] sm:$0xff]
  %v112 = vld [vmem:[%s2 + $0x40] sm:$0xff]
  %v113 = vld [vmem:[%s2 + $0x48] sm:$0xff]
  %v114 = vld [vmem:[%s2 + $0x50] sm:$0xff]
  %v115 = vld [vmem:[%s2 + $0x58] sm:$0xff]
  %v116 = vld [vmem:[%s2 + $0x60] sm:$0xff]
  %v117 = vld [vmem:[%s2 + $0x68] sm:$0xff]
  %v118 = vld [vmem:[%s2 + $0x70] sm:$0xff]
  %v119 = vld [vmem:[%s2 + $0x78] sm:$0xff]
  %v120 = vld [vmem:[%s3] sm:$0xff]
  %v121 = vld [vmem:[%s3 + $0x8] sm:$0xff]
  %v122 = vld [vmem:[%s3 + $0x10] sm:$0xff]
  %v123 = vld [vmem:[%s3 + $0x18] sm:$0xff]
  %v124 = vld [vmem:[%s3 + $0x20] sm:$0xff]
  %v125 = vld [vmem:[%s3 + $0x28] sm:$0xff]
  %v126 = vld [vmem:[%s3 + $0x30] sm:$0xff]
  %v127 = vld [vmem:[%s3 + $0x38] sm:$0xff]
  %v128 = vld [vmem:[%s3 + $0x40] sm:$0xff]
  %v129 = vld [vmem:[%s3 + $0x48] sm:$0xff]
  %v130 = vld [vmem:[%s3 + $0x50] sm:$0xff]
  %v131 = vld [vmem:[%s3 + $0x58] sm:$0xff]
  %v132 = vld [vmem:[%s3 + $0x60] sm:$0xff]
  %v133 = vld [vmem:[%s3 + $0x68] sm:$0xff]
  %v134 = vld [vmem:[%s3 + $0x70] sm:$0xff]
  %v135 = vld [vmem:[%s3 + $0x78] sm:$0xff]
  %v136 = vld [vmem:[%s4] sm:$0xff]
  %v137 = vld [vmem:[%s4 + $0x8] sm:$0xff]
  %v138 = vld [vmem:[%s1] sm:$0xff]
  %v139 = vld [vmem:[%s1 + $0x8] sm:$0xff]
  %v140 = vld [vmem:[%s1 + $0x10] sm:$0xff]
  %v141 = vld [vmem:[%s1 + $0x18] sm:$0xff]
  %v142 = vld [vmem:[%s1 + $0x20] sm:$0xff]
  %v143 = vld [vmem:[%s1 + $0x28] sm:$0xff]
  %v144 = vld [vmem:[%s1 + $0x30] sm:$0xff]
  %v145 = vld [vmem:[%s1 + $0x38] sm:$0xff]
  %v146 = vld [vmem:[%s1 + $0x40] sm:$0xff]
  %v147 = vld [vmem:[%s1 + $0x48] sm:$0xff]
  %v148 = vld [vmem:[%s1 + $0x50] sm:$0xff]
  %v149 = vld [vmem:[%s1 + $0x58] sm:$0xff]
  %v150 = vld [vmem:[%s1 + $0x60] sm:$0xff]
  %v151 = vld [vmem:[%s1 + $0x68] sm:$0xff]
  %v152 = vld [vmem:[%s1 + $0x70] sm:$0xff]
  %v153 = vld [vmem:[%s1 + $0x78] sm:$0xff]
  %v154 = vpack.c.bf16 %v139, %v138
  %v155 = vpack.c.bf16 %v141, %v140
  %v156 = vpack.c.bf16 %v143, %v142
  %v157 = vpack.c.bf16 %v145, %v144
  %v158 = vpack.c.bf16 %v147, %v146
  %v159 = vpack.c.bf16 %v149, %v148
  %v160 = vpack.c.bf16 %v151, %v150
  %v161 = vpack.c.bf16 %v153, %v152
  %v162 = vpack.c.bf16 %v102, %v100
  %v163 = vld [vmem:[%s9] sm:$0xf]
  %v164 = vld [vmem:[%s9 + $0x4] sm:$0xf]
  %v165 = vld [vmem:[%s9 + $0x8] sm:$0xf]
  %v166 = vld [vmem:[%s9 + $0xc] sm:$0xf]
  %v171 = vunpack.c.l.b16 %v163
  %v172 = vunpack.c.l.b16 %v164
  %v173 = vunpack.c.l.b16 %v165
  %v174 = vunpack.c.l.b16 %v166
  %v175 = vpack.c.b16 %v172, %v171
  %v176 = vpack.c.b16 %v174, %v173
  %vm179 = vcmask 261120
  %v181 = vsel %vm179, %v162, 0
  %183 = vmatpush.bf16.msra.mxu0 0
  %184 = vmatpush.bf16.msra.mxu0 0
  %185 = vmatpush.bf16.msra.mxu0 0
  %186 = vmatpush.bf16.msra.mxu0 0
  %187 = vmatpush.bf16.msra.mxu0 0
  %188 = vmatpush.bf16.msra.mxu0 0
  %189 = vmatpush.bf16.msra.mxu0 %v176
  %190 = vmatpush.bf16.msra.mxu0 %v175
  %191 = vmatmul.bf16.gmra.mxu0 %v181
  %v192 = vpop.f32.mrf.mxu0
  %v193 = vadd.f32 0.0, %v192
  %v194 = vpop.f32.mrf.mxu0
  %v195 = vadd.f32 0.0, %v194
  %196 = vdwg.mxu0
  %v197 = vld [vmem:[%s10] sm:$0xf]
  %v198 = vld [vmem:[%s10 + $0x4] sm:$0xf]
  %v199 = vld [vmem:[%s10 + $0x8] sm:$0xf]
  %v200 = vld [vmem:[%s10 + $0xc] sm:$0xf]
  %v205 = vunpack.c.l.b16 %v197
  %v206 = vunpack.c.l.b16 %v198
  %v207 = vunpack.c.l.b16 %v199
  %v208 = vunpack.c.l.b16 %v200
  %v209 = vpack.c.b16 %v206, %v205
  %v210 = vpack.c.b16 %v208, %v207
  %213 = vmatpush.bf16.msra.mxu0 0
  %214 = vmatpush.bf16.msra.mxu0 0
  %215 = vmatpush.bf16.msra.mxu0 0
  %216 = vmatpush.bf16.msra.mxu0 0
  %217 = vmatpush.bf16.msra.mxu0 0
  %218 = vmatpush.bf16.msra.mxu0 0
  %219 = vmatpush.bf16.msra.mxu0 %v210
  %220 = vmatpush.bf16.msra.mxu0 %v209
  %221 = vmatmul.bf16.gmra.mxu0 %v181
  %v222 = vpop.f32.mrf.mxu0
  %v223 = vadd.f32 0.0, %v222
  %v224 = vpop.f32.mrf.mxu0
  %v225 = vadd.f32 0.0, %v224
  %226 = vdwg.mxu0
  %v227 = vld [vmem:[%s11] sm:$0xf]
  %v228 = vld [vmem:[%s11 + $0x4] sm:$0xf]
  %v231 = vunpack.c.l.b16 %v227
  %v232 = vunpack.c.l.b16 %v228
  %v233 = vpack.c.b16 %v232, %v231
  %v236 = vsel %vm86, %v154, 0
  %v239 = vsel %vm86, %v155, 0
  %v242 = vsel %vm86, %v156, 0
  %v245 = vsel %vm86, %v157, 0
  %v248 = vsel %vm86, %v158, 0
  %v251 = vsel %vm86, %v159, 0
  %v254 = vsel %vm86, %v160, 0
  %v257 = vsel %vm86, %v161, 0
  %259 = vmatpush.bf16.msra.mxu0 0
  %260 = vmatpush.bf16.msra.mxu0 0
  %261 = vmatpush.bf16.msra.mxu0 0
  %262 = vmatpush.bf16.msra.mxu0 0
  %263 = vmatpush.bf16.msra.mxu0 0
  %264 = vmatpush.bf16.msra.mxu0 0
  %265 = vmatpush.bf16.msra.mxu0 0
  %266 = vmatpush.bf16.msra.mxu0 %v233
  %267 = vmatmul.bf16.gmra.mxu0 %v236
  %v268 = vpop.f32.mrf.mxu0
  %v269 = vadd.f32 0.0, %v268
  %v270 = vpop.f32.mrf.mxu0
  %v271 = vadd.f32 0.0, %v270
  %272 = vmatmul.bf16.gmra.mxu0 %v239
  %v273 = vpop.f32.mrf.mxu0
  %v274 = vadd.f32 0.0, %v273
  %v275 = vpop.f32.mrf.mxu0
  %v276 = vadd.f32 0.0, %v275
  %277 = vmatmul.bf16.gmra.mxu0 %v242
  %v278 = vpop.f32.mrf.mxu0
  %v279 = vadd.f32 0.0, %v278
  %v280 = vpop.f32.mrf.mxu0
  %v281 = vadd.f32 0.0, %v280
  %282 = vmatmul.bf16.gmra.mxu0 %v245
  %v283 = vpop.f32.mrf.mxu0
  %v284 = vadd.f32 0.0, %v283
  %v285 = vpop.f32.mrf.mxu0
  %v286 = vadd.f32 0.0, %v285
  %287 = vmatmul.bf16.gmra.mxu0 %v248
  %v288 = vpop.f32.mrf.mxu0
  %v289 = vadd.f32 0.0, %v288
  %v290 = vpop.f32.mrf.mxu0
  %v291 = vadd.f32 0.0, %v290
  %292 = vmatmul.bf16.gmra.mxu0 %v251
  %v293 = vpop.f32.mrf.mxu0
  %v294 = vadd.f32 0.0, %v293
  %v295 = vpop.f32.mrf.mxu0
  %v296 = vadd.f32 0.0, %v295
  %297 = vmatmul.bf16.gmra.mxu0 %v254
  %v298 = vpop.f32.mrf.mxu0
  %v299 = vadd.f32 0.0, %v298
  %v300 = vpop.f32.mrf.mxu0
  %v301 = vadd.f32 0.0, %v300
  %302 = vmatmul.bf16.gmra.mxu0 %v257
  %v303 = vpop.f32.mrf.mxu0
  %v304 = vadd.f32 0.0, %v303
  %v305 = vpop.f32.mrf.mxu0
  %v306 = vadd.f32 0.0, %v305
  %307 = vdwg.mxu0
  %v309 = vsel %vm86, %v104, 0
  %v312 = vsel %vm86, %v105, 0
  %v315 = vsel %vm86, %v106, 0
  %v318 = vsel %vm86, %v107, 0
  %v321 = vsel %vm86, %v108, 0
  %v324 = vsel %vm86, %v109, 0
  %v327 = vsel %vm86, %v110, 0
  %v330 = vsel %vm86, %v111, 0
  %v333 = vsel %vm86, %v112, 0
  %v336 = vsel %vm86, %v113, 0
  %v339 = vsel %vm86, %v114, 0
  %v342 = vsel %vm86, %v115, 0
  %v345 = vsel %vm86, %v116, 0
  %v348 = vsel %vm86, %v117, 0
  %v351 = vsel %vm86, %v118, 0
  %v354 = vsel %vm86, %v119, 0
  %356 = vmatpush.msra.mxu0 0.0
  %357 = vmatpush.msra.mxu0 0.0
  %358 = vmatpush.msra.mxu0 0.0
  %359 = vmatpush.msra.mxu0 0.0
  %360 = vmatpush.msra.mxu0 0.0
  %361 = vmatpush.msra.mxu0 0.0
  %362 = vmatpush.msra.mxu0 0.0
  %363 = vmatpush.msra.mxu0 0.0
  %364 = vmatpush.msra.mxu0 0.0
  %365 = vmatpush.msra.mxu0 0.0
  %366 = vmatpush.msra.mxu0 0.0
  %367 = vmatpush.msra.mxu0 0.0
  %368 = vmatpush.msra.mxu0 0.0
  %369 = vmatpush.msra.mxu0 0.0
  %370 = vmatpush.msra.mxu0 %v225
  %371 = vmatpush.msra.mxu0 %v223
  %372 = vmatmul.f32.gmra.mxu0 %v309
  %v373 = vpop.f32.mrf.mxu0
  %v374 = vadd.f32 0.0, %v373
  %375 = vmatmul.f32.gmra.mxu0 %v312
  %v376 = vpop.f32.mrf.mxu0
  %v377 = vadd.f32 0.0, %v376
  %378 = vmatmul.f32.gmra.mxu0 %v315
  %v379 = vpop.f32.mrf.mxu0
  %v380 = vadd.f32 0.0, %v379
  %381 = vmatmul.f32.gmra.mxu0 %v318
  %v382 = vpop.f32.mrf.mxu0
  %v383 = vadd.f32 0.0, %v382
  %384 = vmatmul.f32.gmra.mxu0 %v321
  %v385 = vpop.f32.mrf.mxu0
  %v386 = vadd.f32 0.0, %v385
  %387 = vmatmul.f32.gmra.mxu0 %v324
  %v388 = vpop.f32.mrf.mxu0
  %v389 = vadd.f32 0.0, %v388
  %390 = vmatmul.f32.gmra.mxu0 %v327
  %v391 = vpop.f32.mrf.mxu0
  %v392 = vadd.f32 0.0, %v391
  %393 = vmatmul.f32.gmra.mxu0 %v330
  %v394 = vpop.f32.mrf.mxu0
  %v395 = vadd.f32 0.0, %v394
  %396 = vmatmul.f32.gmra.mxu0 %v333
  %v397 = vpop.f32.mrf.mxu0
  %v398 = vadd.f32 0.0, %v397
  %399 = vmatmul.f32.gmra.mxu0 %v336
  %v400 = vpop.f32.mrf.mxu0
  %v401 = vadd.f32 0.0, %v400
  %402 = vmatmul.f32.gmra.mxu0 %v339
  %v403 = vpop.f32.mrf.mxu0
  %v404 = vadd.f32 0.0, %v403
  %405 = vmatmul.f32.gmra.mxu0 %v342
  %v406 = vpop.f32.mrf.mxu0
  %v407 = vadd.f32 0.0, %v406
  %408 = vmatmul.f32.gmra.mxu0 %v345
  %v409 = vpop.f32.mrf.mxu0
  %v410 = vadd.f32 0.0, %v409
  %411 = vmatmul.f32.gmra.mxu0 %v348
  %v412 = vpop.f32.mrf.mxu0
  %v413 = vadd.f32 0.0, %v412
  %414 = vmatmul.f32.gmra.mxu0 %v351
  %v415 = vpop.f32.mrf.mxu0
  %v416 = vadd.f32 0.0, %v415
  %417 = vmatmul.f32.gmra.mxu0 %v354
  %v418 = vpop.f32.mrf.mxu0
  %v419 = vadd.f32 0.0, %v418
  %420 = vdwg.mxu0
  %v422 = vsel %vm86, %v120, 0
  %v425 = vsel %vm86, %v121, 0
  %v428 = vsel %vm86, %v122, 0
  %v431 = vsel %vm86, %v123, 0
  %v434 = vsel %vm86, %v124, 0
  %v437 = vsel %vm86, %v125, 0
  %v440 = vsel %vm86, %v126, 0
  %v443 = vsel %vm86, %v127, 0
  %v446 = vsel %vm86, %v128, 0
  %v449 = vsel %vm86, %v129, 0
  %v452 = vsel %vm86, %v130, 0
  %v455 = vsel %vm86, %v131, 0
  %v458 = vsel %vm86, %v132, 0
  %v461 = vsel %vm86, %v133, 0
  %v464 = vsel %vm86, %v134, 0
  %v467 = vsel %vm86, %v135, 0
  %469 = vmatpush.msra.mxu0 0.0
  %470 = vmatpush.msra.mxu0 0.0
  %471 = vmatpush.msra.mxu0 0.0
  %472 = vmatpush.msra.mxu0 0.0
  %473 = vmatpush.msra.mxu0 0.0
  %474 = vmatpush.msra.mxu0 0.0
  %475 = vmatpush.msra.mxu0 0.0
  %476 = vmatpush.msra.mxu0 0.0
  %477 = vmatpush.msra.mxu0 0.0
  %478 = vmatpush.msra.mxu0 0.0
  %479 = vmatpush.msra.mxu0 0.0
  %480 = vmatpush.msra.mxu0 0.0
  %481 = vmatpush.msra.mxu0 0.0
  %482 = vmatpush.msra.mxu0 0.0
  %483 = vmatpush.msra.mxu0 %v195
  %484 = vmatpush.msra.mxu0 %v193
  %485 = vmatmul.f32.gmra.mxu0 %v422
  %v486 = vpop.f32.mrf.mxu0
  %v487 = vadd.f32 %v374, %v486
  %488 = vmatmul.f32.gmra.mxu0 %v425
  %v489 = vpop.f32.mrf.mxu0
  %v490 = vadd.f32 %v377, %v489
  %491 = vmatmul.f32.gmra.mxu0 %v428
  %v492 = vpop.f32.mrf.mxu0
  %v493 = vadd.f32 %v380, %v492
  %494 = vmatmul.f32.gmra.mxu0 %v431
  %v495 = vpop.f32.mrf.mxu0
  %v496 = vadd.f32 %v383, %v495
  %497 = vmatmul.f32.gmra.mxu0 %v434
  %v498 = vpop.f32.mrf.mxu0
  %v499 = vadd.f32 %v386, %v498
  %500 = vmatmul.f32.gmra.mxu0 %v437
  %v501 = vpop.f32.mrf.mxu0
  %v502 = vadd.f32 %v389, %v501
  %503 = vmatmul.f32.gmra.mxu0 %v440
  %v504 = vpop.f32.mrf.mxu0
  %v505 = vadd.f32 %v392, %v504
  %506 = vmatmul.f32.gmra.mxu0 %v443
  %v507 = vpop.f32.mrf.mxu0
  %v508 = vadd.f32 %v395, %v507
  %509 = vmatmul.f32.gmra.mxu0 %v446
  %v510 = vpop.f32.mrf.mxu0
  %v511 = vadd.f32 %v398, %v510
  %512 = vmatmul.f32.gmra.mxu0 %v449
  %v513 = vpop.f32.mrf.mxu0
  %v514 = vadd.f32 %v401, %v513
  %515 = vmatmul.f32.gmra.mxu0 %v452
  %v516 = vpop.f32.mrf.mxu0
  %v517 = vadd.f32 %v404, %v516
  %518 = vmatmul.f32.gmra.mxu0 %v455
  %v519 = vpop.f32.mrf.mxu0
  %v520 = vadd.f32 %v407, %v519
  %521 = vmatmul.f32.gmra.mxu0 %v458
  %v522 = vpop.f32.mrf.mxu0
  %v523 = vadd.f32 %v410, %v522
  %524 = vmatmul.f32.gmra.mxu0 %v461
  %v525 = vpop.f32.mrf.mxu0
  %v526 = vadd.f32 %v413, %v525
  %527 = vmatmul.f32.gmra.mxu0 %v464
  %v528 = vpop.f32.mrf.mxu0
  %v529 = vadd.f32 %v416, %v528
  %530 = vmatmul.f32.gmra.mxu0 %v467
  %v531 = vpop.f32.mrf.mxu0
  %v532 = vadd.f32 %v419, %v531
  %533 = vdwg.mxu0
  %v534 = vadd.f32 %v487, %v269
  %v535 = vadd.f32 %v490, %v271
  %v536 = vadd.f32 %v493, %v274
  %v537 = vadd.f32 %v496, %v276
  %v538 = vadd.f32 %v499, %v279
  %v539 = vadd.f32 %v502, %v281
  %v540 = vadd.f32 %v505, %v284
  %v541 = vadd.f32 %v508, %v286
  %v542 = vadd.f32 %v511, %v289
  %v543 = vadd.f32 %v514, %v291
  %v544 = vadd.f32 %v517, %v294
  %v545 = vadd.f32 %v520, %v296
  %v546 = vadd.f32 %v523, %v299
  %v547 = vadd.f32 %v526, %v301
  %v548 = vadd.f32 %v529, %v304
  %v549 = vadd.f32 %v532, %v306
  %v550 = vld [vmem:[%s12] sm:$0x1]
  %v552 = vperm.slane %v550, 0
  %v554 = vmul.f32 %v534, %v552
  %v555 = vmul.f32 %v535, %v552
  %v556 = vmul.f32 %v536, %v552
  %v557 = vmul.f32 %v537, %v552
  %v558 = vmul.f32 %v538, %v552
  %v559 = vmul.f32 %v539, %v552
  %v560 = vmul.f32 %v540, %v552
  %v561 = vmul.f32 %v541, %v552
  %v562 = vmul.f32 %v542, %v552
  %v563 = vmul.f32 %v543, %v552
  %v564 = vmul.f32 %v544, %v552
  %v565 = vmul.f32 %v545, %v552
  %v566 = vmul.f32 %v546, %v552
  %v567 = vmul.f32 %v547, %v552
  %v568 = vmul.f32 %v548, %v552
  %v569 = vmul.f32 %v549, %v552
  %v570 = vld [vmem:[%s13] sm:$0x1]
  %v572 = vperm.slane %v570, 0
  %v574 = vadd.f32 %v554, %v572
  %v575 = vadd.f32 %v555, %v572
  %v576 = vadd.f32 %v556, %v572
  %v577 = vadd.f32 %v557, %v572
  %v578 = vadd.f32 %v558, %v572
  %v579 = vadd.f32 %v559, %v572
  %v580 = vadd.f32 %v560, %v572
  %v581 = vadd.f32 %v561, %v572
  %v582 = vadd.f32 %v562, %v572
  %v583 = vadd.f32 %v563, %v572
  %v584 = vadd.f32 %v564, %v572
  %v585 = vadd.f32 %v565, %v572
  %v586 = vadd.f32 %v566, %v572
  %v587 = vadd.f32 %v567, %v572
  %v588 = vadd.f32 %v568, %v572
  %v589 = vadd.f32 %v569, %v572
  %v590 = vmul.f32 %v574, 0.5
  %v591 = vmul.f32 %v575, 0.5
  %v592 = vmul.f32 %v576, 0.5
  %v593 = vmul.f32 %v577, 0.5
  %v594 = vmul.f32 %v578, 0.5
  %v595 = vmul.f32 %v579, 0.5
  %v596 = vmul.f32 %v580, 0.5
  %v597 = vmul.f32 %v581, 0.5
  %v598 = vmul.f32 %v582, 0.5
  %v599 = vmul.f32 %v583, 0.5
  %v600 = vmul.f32 %v584, 0.5
  %v601 = vmul.f32 %v585, 0.5
  %v602 = vmul.f32 %v586, 0.5
  %v603 = vmul.f32 %v587, 0.5
  %v604 = vmul.f32 %v588, 0.5
  %v605 = vmul.f32 %v589, 0.5
  %v606 = vtanh.pop %v590
  %v607 = vtanh.pop %v591
  %v608 = vtanh.pop %v592
  %v609 = vtanh.pop %v593
  %v610 = vtanh.pop %v594
  %v611 = vtanh.pop %v595
  %v612 = vtanh.pop %v596
  %v613 = vtanh.pop %v597
  %v614 = vtanh.pop %v598
  %v615 = vtanh.pop %v599
  %v616 = vtanh.pop %v600
  %v617 = vtanh.pop %v601
  %v618 = vtanh.pop %v602
  %v619 = vtanh.pop %v603
  %v620 = vtanh.pop %v604
  %v621 = vtanh.pop %v605
  %v622 = vmul.f32 %v606, 0.5
  %v623 = vmul.f32 %v607, 0.5
  %v624 = vmul.f32 %v608, 0.5
  %v625 = vmul.f32 %v609, 0.5
  %v626 = vmul.f32 %v610, 0.5
  %v627 = vmul.f32 %v611, 0.5
  %v628 = vmul.f32 %v612, 0.5
  %v629 = vmul.f32 %v613, 0.5
  %v630 = vmul.f32 %v614, 0.5
  %v631 = vmul.f32 %v615, 0.5
  %v632 = vmul.f32 %v616, 0.5
  %v633 = vmul.f32 %v617, 0.5
  %v634 = vmul.f32 %v618, 0.5
  %v635 = vmul.f32 %v619, 0.5
  %v636 = vmul.f32 %v620, 0.5
  %v637 = vmul.f32 %v621, 0.5
  %v638 = vadd.f32 %v622, 0.5
  %v639 = vadd.f32 %v623, 0.5
  %v640 = vadd.f32 %v624, 0.5
  %v641 = vadd.f32 %v625, 0.5
  %v642 = vadd.f32 %v626, 0.5
  %v643 = vadd.f32 %v627, 0.5
  %v644 = vadd.f32 %v628, 0.5
  %v645 = vadd.f32 %v629, 0.5
  %v646 = vadd.f32 %v630, 0.5
  %v647 = vadd.f32 %v631, 0.5
  %v648 = vadd.f32 %v632, 0.5
  %v649 = vadd.f32 %v633, 0.5
  %v650 = vadd.f32 %v634, 0.5
  %v651 = vadd.f32 %v635, 0.5
  %v652 = vadd.f32 %v636, 0.5
  %v653 = vadd.f32 %v637, 0.5
  %v654 = vmax.f32 %v574, 0.0
  %v655 = vmax.f32 %v575, 0.0
  %v656 = vmax.f32 %v576, 0.0
  %v657 = vmax.f32 %v577, 0.0
  %v658 = vmax.f32 %v578, 0.0
  %v659 = vmax.f32 %v579, 0.0
  %v660 = vmax.f32 %v580, 0.0
  %v661 = vmax.f32 %v581, 0.0
  %v662 = vmax.f32 %v582, 0.0
  %v663 = vmax.f32 %v583, 0.0
  %v664 = vmax.f32 %v584, 0.0
  %v665 = vmax.f32 %v585, 0.0
  %v666 = vmax.f32 %v586, 0.0
  %v667 = vmax.f32 %v587, 0.0
  %v668 = vmax.f32 %v588, 0.0
  %v669 = vmax.f32 %v589, 0.0
  %vm670 = vcmp.ne.f32.partialorder %v574, %v574
  %vm671 = vcmp.ne.f32.partialorder %v575, %v575
  %vm672 = vcmp.ne.f32.partialorder %v576, %v576
  %vm673 = vcmp.ne.f32.partialorder %v577, %v577
  %vm674 = vcmp.ne.f32.partialorder %v578, %v578
  %vm675 = vcmp.ne.f32.partialorder %v579, %v579
  %vm676 = vcmp.ne.f32.partialorder %v580, %v580
  %vm677 = vcmp.ne.f32.partialorder %v581, %v581
  %vm678 = vcmp.ne.f32.partialorder %v582, %v582
  %vm679 = vcmp.ne.f32.partialorder %v583, %v583
  %vm680 = vcmp.ne.f32.partialorder %v584, %v584
  %vm681 = vcmp.ne.f32.partialorder %v585, %v585
  %vm682 = vcmp.ne.f32.partialorder %v586, %v586
  %vm683 = vcmp.ne.f32.partialorder %v587, %v587
  %vm684 = vcmp.ne.f32.partialorder %v588, %v588
  %vm685 = vcmp.ne.f32.partialorder %v589, %v589
  %v686 = vadd.f32 %v574, 0.0
  %v687 = vadd.f32 %v575, 0.0
  %v688 = vadd.f32 %v576, 0.0
  %v689 = vadd.f32 %v577, 0.0
  %v690 = vadd.f32 %v578, 0.0
  %v691 = vadd.f32 %v579, 0.0
  %v692 = vadd.f32 %v580, 0.0
  %v693 = vadd.f32 %v581, 0.0
  %v694 = vadd.f32 %v582, 0.0
  %v695 = vadd.f32 %v583, 0.0
  %v696 = vadd.f32 %v584, 0.0
  %v697 = vadd.f32 %v585, 0.0
  %v698 = vadd.f32 %v586, 0.0
  %v699 = vadd.f32 %v587, 0.0
  %v700 = vadd.f32 %v588, 0.0
  %v701 = vadd.f32 %v589, 0.0
  %v702 = vand.u32 2147483647, %v574
  %v703 = vand.u32 2147483647, %v575
  %v704 = vand.u32 2147483647, %v576
  %v705 = vand.u32 2147483647, %v577
  %v706 = vand.u32 2147483647, %v578
  %v707 = vand.u32 2147483647, %v579
  %v708 = vand.u32 2147483647, %v580
  %v709 = vand.u32 2147483647, %v581
  %v710 = vand.u32 2147483647, %v582
  %v711 = vand.u32 2147483647, %v583
  %v712 = vand.u32 2147483647, %v584
  %v713 = vand.u32 2147483647, %v585
  %v714 = vand.u32 2147483647, %v586
  %v715 = vand.u32 2147483647, %v587
  %v716 = vand.u32 2147483647, %v588
  %v717 = vand.u32 2147483647, %v589
  %v718 = vsub.f32 0.0, %v702
  %v719 = vsub.f32 0.0, %v703
  %v720 = vsub.f32 0.0, %v704
  %v721 = vsub.f32 0.0, %v705
  %v722 = vsub.f32 0.0, %v706
  %v723 = vsub.f32 0.0, %v707
  %v724 = vsub.f32 0.0, %v708
  %v725 = vsub.f32 0.0, %v709
  %v726 = vsub.f32 0.0, %v710
  %v727 = vsub.f32 0.0, %v711
  %v728 = vsub.f32 0.0, %v712
  %v729 = vsub.f32 0.0, %v713
  %v730 = vsub.f32 0.0, %v714
  %v731 = vsub.f32 0.0, %v715
  %v732 = vsub.f32 0.0, %v716
  %v733 = vsub.f32 0.0, %v717
  %v734 = vmul.f32 %v718, 1.442695
  %v735 = vpow.pop %v734
  %v736 = vmul.f32 %v719, 1.442695
  %v737 = vpow.pop %v736
  %v738 = vmul.f32 %v720, 1.442695
  %v739 = vpow.pop %v738
  %v740 = vmul.f32 %v721, 1.442695
  %v741 = vpow.pop %v740
  %v742 = vmul.f32 %v722, 1.442695
  %v743 = vpow.pop %v742
  %v744 = vmul.f32 %v723, 1.442695
  %v745 = vpow.pop %v744
  %v746 = vmul.f32 %v724, 1.442695
  %v747 = vpow.pop %v746
  %v748 = vmul.f32 %v725, 1.442695
  %v749 = vpow.pop %v748
  %v750 = vmul.f32 %v726, 1.442695
  %v751 = vpow.pop %v750
  %v752 = vmul.f32 %v727, 1.442695
  %v753 = vpow.pop %v752
  %v754 = vmul.f32 %v728, 1.442695
  %v755 = vpow.pop %v754
  %v756 = vmul.f32 %v729, 1.442695
  %v757 = vpow.pop %v756
  %v758 = vmul.f32 %v730, 1.442695
  %v759 = vpow.pop %v758
  %v760 = vmul.f32 %v731, 1.442695
  %v761 = vpow.pop %v760
  %v762 = vmul.f32 %v732, 1.442695
  %v763 = vpow.pop %v762
  %v764 = vmul.f32 %v733, 1.442695
  %v765 = vpow.pop %v764
  %v766 = vadd.f32 %v735, 1.0
  %v767 = vlog2.pop %v766
  %v768 = vmul.f32 %v767, 0.6931472
  %v769 = vmul.f32 -0.5, %v735
  %v770 = vadd.f32 %v769, 1.0
  %v771 = vmul.f32 %v770, %v735
  %v772 = vand.u32 2147483647, %v735
  %vm773 = vcmp.lt.f32.partialorder %v772, 0.0004427343
  %v774 = vsel %vm773, %v771, %v768
  %v775 = vadd.f32 %v737, 1.0
  %v776 = vlog2.pop %v775
  %v777 = vmul.f32 %v776, 0.6931472
  %v778 = vmul.f32 -0.5, %v737
  %v779 = vadd.f32 %v778, 1.0
  %v780 = vmul.f32 %v779, %v737
  %v781 = vand.u32 2147483647, %v737
  %vm782 = vcmp.lt.f32.partialorder %v781, 0.0004427343
  %v783 = vsel %vm782, %v780, %v777
  %v784 = vadd.f32 %v739, 1.0
  %v785 = vlog2.pop %v784
  %v786 = vmul.f32 %v785, 0.6931472
  %v787 = vmul.f32 -0.5, %v739
  %v788 = vadd.f32 %v787, 1.0
  %v789 = vmul.f32 %v788, %v739
  %v790 = vand.u32 2147483647, %v739
  %vm791 = vcmp.lt.f32.partialorder %v790, 0.0004427343
  %v792 = vsel %vm791, %v789, %v786
  %v793 = vadd.f32 %v741, 1.0
  %v794 = vlog2.pop %v793
  %v795 = vmul.f32 %v794, 0.6931472
  %v796 = vmul.f32 -0.5, %v741
  %v797 = vadd.f32 %v796, 1.0
  %v798 = vmul.f32 %v797, %v741
  %v799 = vand.u32 2147483647, %v741
  %vm800 = vcmp.lt.f32.partialorder %v799, 0.0004427343
  %v801 = vsel %vm800, %v798, %v795
  %v802 = vadd.f32 %v743, 1.0
  %v803 = vlog2.pop %v802
  %v804 = vmul.f32 %v803, 0.6931472
  %v805 = vmul.f32 -0.5, %v743
  %v806 = vadd.f32 %v805, 1.0
  %v807 = vmul.f32 %v806, %v743
  %v808 = vand.u32 2147483647, %v743
  %vm809 = vcmp.lt.f32.partialorder %v808, 0.0004427343
  %v810 = vsel %vm809, %v807, %v804
  %v811 = vadd.f32 %v745, 1.0
  %v812 = vlog2.pop %v811
  %v813 = vmul.f32 %v812, 0.6931472
  %v814 = vmul.f32 -0.5, %v745
  %v815 = vadd.f32 %v814, 1.0
  %v816 = vmul.f32 %v815, %v745
  %v817 = vand.u32 2147483647, %v745
  %vm818 = vcmp.lt.f32.partialorder %v817, 0.0004427343
  %v819 = vsel %vm818, %v816, %v813
  %v820 = vadd.f32 %v747, 1.0
  %v821 = vlog2.pop %v820
  %v822 = vmul.f32 %v821, 0.6931472
  %v823 = vmul.f32 -0.5, %v747
  %v824 = vadd.f32 %v823, 1.0
  %v825 = vmul.f32 %v824, %v747
  %v826 = vand.u32 2147483647, %v747
  %vm827 = vcmp.lt.f32.partialorder %v826, 0.0004427343
  %v828 = vsel %vm827, %v825, %v822
  %v829 = vadd.f32 %v749, 1.0
  %v830 = vlog2.pop %v829
  %v831 = vmul.f32 %v830, 0.6931472
  %v832 = vmul.f32 -0.5, %v749
  %v833 = vadd.f32 %v832, 1.0
  %v834 = vmul.f32 %v833, %v749
  %v835 = vand.u32 2147483647, %v749
  %vm836 = vcmp.lt.f32.partialorder %v835, 0.0004427343
  %v837 = vsel %vm836, %v834, %v831
  %v838 = vadd.f32 %v751, 1.0
  %v839 = vlog2.pop %v838
  %v840 = vmul.f32 %v839, 0.6931472
  %v841 = vmul.f32 -0.5, %v751
  %v842 = vadd.f32 %v841, 1.0
  %v843 = vmul.f32 %v842, %v751
  %v844 = vand.u32 2147483647, %v751
  %vm845 = vcmp.lt.f32.partialorder %v844, 0.0004427343
  %v846 = vsel %vm845, %v843, %v840
  %v847 = vadd.f32 %v753, 1.0
  %v848 = vlog2.pop %v847
  %v849 = vmul.f32 %v848, 0.6931472
  %v850 = vmul.f32 -0.5, %v753
  %v851 = vadd.f32 %v850, 1.0
  %v852 = vmul.f32 %v851, %v753
  %v853 = vand.u32 2147483647, %v753
  %vm854 = vcmp.lt.f32.partialorder %v853, 0.0004427343
  %v855 = vsel %vm854, %v852, %v849
  %v856 = vadd.f32 %v755, 1.0
  %v857 = vlog2.pop %v856
  %v858 = vmul.f32 %v857, 0.6931472
  %v859 = vmul.f32 -0.5, %v755
  %v860 = vadd.f32 %v859, 1.0
  %v861 = vmul.f32 %v860, %v755
  %v862 = vand.u32 2147483647, %v755
  %vm863 = vcmp.lt.f32.partialorder %v862, 0.0004427343
  %v864 = vsel %vm863, %v861, %v858
  %v865 = vadd.f32 %v757, 1.0
  %v866 = vlog2.pop %v865
  %v867 = vmul.f32 %v866, 0.6931472
  %v868 = vmul.f32 -0.5, %v757
  %v869 = vadd.f32 %v868, 1.0
  %v870 = vmul.f32 %v869, %v757
  %v871 = vand.u32 2147483647, %v757
  %vm872 = vcmp.lt.f32.partialorder %v871, 0.0004427343
  %v873 = vsel %vm872, %v870, %v867
  %v874 = vadd.f32 %v759, 1.0
  %v875 = vlog2.pop %v874
  %v876 = vmul.f32 %v875, 0.6931472
  %v877 = vmul.f32 -0.5, %v759
  %v878 = vadd.f32 %v877, 1.0
  %v879 = vmul.f32 %v878, %v759
  %v880 = vand.u32 2147483647, %v759
  %vm881 = vcmp.lt.f32.partialorder %v880, 0.0004427343
  %v882 = vsel %vm881, %v879, %v876
  %v883 = vadd.f32 %v761, 1.0
  %v884 = vlog2.pop %v883
  %v885 = vmul.f32 %v884, 0.6931472
  %v886 = vmul.f32 -0.5, %v761
  %v887 = vadd.f32 %v886, 1.0
  %v888 = vmul.f32 %v887, %v761
  %v889 = vand.u32 2147483647, %v761
  %vm890 = vcmp.lt.f32.partialorder %v889, 0.0004427343
  %v891 = vsel %vm890, %v888, %v885
  %v892 = vadd.f32 %v763, 1.0
  %v893 = vlog2.pop %v892
  %v894 = vmul.f32 %v893, 0.6931472
  %v895 = vmul.f32 -0.5, %v763
  %v896 = vadd.f32 %v895, 1.0
  %v897 = vmul.f32 %v896, %v763
  %v898 = vand.u32 2147483647, %v763
  %vm899 = vcmp.lt.f32.partialorder %v898, 0.0004427343
  %v900 = vsel %vm899, %v897, %v894
  %v901 = vadd.f32 %v765, 1.0
  %v902 = vlog2.pop %v901
  %v903 = vmul.f32 %v902, 0.6931472
  %v904 = vmul.f32 -0.5, %v765
  %v905 = vadd.f32 %v904, 1.0
  %v906 = vmul.f32 %v905, %v765
  %v907 = vand.u32 2147483647, %v765
  %vm908 = vcmp.lt.f32.partialorder %v907, 0.0004427343
  %v909 = vsel %vm908, %v906, %v903
  %v910 = vadd.f32 %v654, %v774
  %v911 = vadd.f32 %v655, %v783
  %v912 = vadd.f32 %v656, %v792
  %v913 = vadd.f32 %v657, %v801
  %v914 = vadd.f32 %v658, %v810
  %v915 = vadd.f32 %v659, %v819
  %v916 = vadd.f32 %v660, %v828
  %v917 = vadd.f32 %v661, %v837
  %v918 = vadd.f32 %v662, %v846
  %v919 = vadd.f32 %v663, %v855
  %v920 = vadd.f32 %v664, %v864
  %v921 = vadd.f32 %v665, %v873
  %v922 = vadd.f32 %v666, %v882
  %v923 = vadd.f32 %v667, %v891
  %v924 = vadd.f32 %v668, %v900
  %v925 = vadd.f32 %v669, %v909
  %v926 = vsel %vm670, %v686, %v910
  %v927 = vsel %vm671, %v687, %v911
  %v928 = vsel %vm672, %v688, %v912
  %v929 = vsel %vm673, %v689, %v913
  %v930 = vsel %vm674, %v690, %v914
  %v931 = vsel %vm675, %v691, %v915
  %v932 = vsel %vm676, %v692, %v916
  %v933 = vsel %vm677, %v693, %v917
  %v934 = vsel %vm678, %v694, %v918
  %v935 = vsel %vm679, %v695, %v919
  %v936 = vsel %vm680, %v696, %v920
  %v937 = vsel %vm681, %v697, %v921
  %v938 = vsel %vm682, %v698, %v922
  %v939 = vsel %vm683, %v699, %v923
  %v940 = vsel %vm684, %v700, %v924
  %v941 = vsel %vm685, %v701, %v925
  %958 = vrot.lane.b32.xlu0 %v926, 96
  %v959 = vpop.permute.xlu0 %958
  %960 = vrot.lane.b32.xlu0 %v927, 96
  %v961 = vpop.permute.xlu0 %960
  %962 = vrot.lane.b32.xlu0 %v928, 96
  %v963 = vpop.permute.xlu0 %962
  %964 = vrot.lane.b32.xlu0 %v929, 96
  %v965 = vpop.permute.xlu0 %964
  %966 = vrot.lane.b32.xlu0 %v930, 96
  %v967 = vpop.permute.xlu0 %966
  %968 = vrot.lane.b32.xlu0 %v931, 96
  %v969 = vpop.permute.xlu0 %968
  %970 = vrot.lane.b32.xlu0 %v932, 96
  %v971 = vpop.permute.xlu0 %970
  %972 = vrot.lane.b32.xlu0 %v933, 96
  %v973 = vpop.permute.xlu0 %972
  %974 = vrot.lane.b32.xlu0 %v934, 96
  %v975 = vpop.permute.xlu0 %974
  %976 = vrot.lane.b32.xlu0 %v935, 96
  %v977 = vpop.permute.xlu0 %976
  %978 = vrot.lane.b32.xlu0 %v936, 96
  %v979 = vpop.permute.xlu0 %978
  %980 = vrot.lane.b32.xlu0 %v937, 96
  %v981 = vpop.permute.xlu0 %980
  %982 = vrot.lane.b32.xlu0 %v938, 96
  %v983 = vpop.permute.xlu0 %982
  %984 = vrot.lane.b32.xlu0 %v939, 96
  %v985 = vpop.permute.xlu0 %984
  %986 = vrot.lane.b32.xlu0 %v940, 96
  %v987 = vpop.permute.xlu0 %986
  %988 = vrot.lane.b32.xlu0 %v941, 96
  %v989 = vpop.permute.xlu0 %988
  %v1006 = vmul.f32 %v638, %v959
  %v1007 = vmul.f32 %v639, %v961
  %v1008 = vmul.f32 %v640, %v963
  %v1009 = vmul.f32 %v641, %v965
  %v1010 = vmul.f32 %v642, %v967
  %v1011 = vmul.f32 %v643, %v969
  %v1012 = vmul.f32 %v644, %v971
  %v1013 = vmul.f32 %v645, %v973
  %v1014 = vmul.f32 %v646, %v975
  %v1015 = vmul.f32 %v647, %v977
  %v1016 = vmul.f32 %v648, %v979
  %v1017 = vmul.f32 %v649, %v981
  %v1018 = vmul.f32 %v650, %v983
  %v1019 = vmul.f32 %v651, %v985
  %v1020 = vmul.f32 %v652, %v987
  %v1021 = vmul.f32 %v653, %v989
  %1022 = vmatpush.msra.mxu0 %v1021
  %1023 = vmatpush.msra.mxu0 %v1020
  %1024 = vmatpush.msra.mxu0 %v1019
  %1025 = vmatpush.msra.mxu0 %v1018
  %1026 = vmatpush.msra.mxu0 %v1017
  %1027 = vmatpush.msra.mxu0 %v1016
  %1028 = vmatpush.msra.mxu0 %v1015
  %1029 = vmatpush.msra.mxu0 %v1014
  %1030 = vmatpush.msra.mxu0 %v1013
  %1031 = vmatpush.msra.mxu0 %v1012
  %1032 = vmatpush.msra.mxu0 %v1011
  %1033 = vmatpush.msra.mxu0 %v1010
  %1034 = vmatpush.msra.mxu0 %v1009
  %1035 = vmatpush.msra.mxu0 %v1008
  %1036 = vmatpush.msra.mxu0 %v1007
  %1037 = vmatpush.msra.mxu0 %v1006
  %1038 = vmatmul.f32.gmra.mxu0 %v136
  %v1039 = vpop.f32.mrf.mxu0
  %v1040 = vadd.f32 0.0, %v1039
  %1041 = vmatmul.f32.gmra.mxu0 %v137
  %v1042 = vpop.f32.mrf.mxu0
  %v1043 = vadd.f32 0.0, %v1042
  %1044 = vdwg.mxu0
  %v1045 = vld [vmem:[%s14] sm:$0x1]
  %v1047 = vperm.slane %v1045, 0
  %v1049 = vmul.f32 %v1040, %v1047
  %v1050 = vmul.f32 %v1043, %v1047
  %v1051 = vld [vmem:[%s15] sm:$0x1]
  %v1053 = vperm.slane %v1051, 0
  %v1055 = vadd.f32 %v1049, %v1053
  %v1056 = vadd.f32 %v1050, %v1053
  %v1057 = vadd.f32 %v100, %v1055
  %v1058 = vadd.f32 %v102, %v1056
  %v1059 = vmax.f32 %v1057, 0.0
  %v1060 = vmax.f32 %v1058, 0.0
  %vm1061 = vcmp.ne.f32.partialorder %v1057, %v1057
  %vm1062 = vcmp.ne.f32.partialorder %v1058, %v1058
  %v1063 = vadd.f32 %v1057, 0.0
  %v1064 = vadd.f32 %v1058, 0.0
  %v1065 = vand.u32 2147483647, %v1057
  %v1066 = vand.u32 2147483647, %v1058
  %v1067 = vsub.f32 0.0, %v1065
  %v1068 = vsub.f32 0.0, %v1066
  %v1069 = vmul.f32 %v1067, 1.442695
  %v1070 = vpow.pop %v1069
  %v1071 = vmul.f32 %v1068, 1.442695
  %v1072 = vpow.pop %v1071
  %v1073 = vadd.f32 %v1070, 1.0
  %v1074 = vlog2.pop %v1073
  %v1075 = vmul.f32 %v1074, 0.6931472
  %v1076 = vmul.f32 -0.5, %v1070
  %v1077 = vadd.f32 %v1076, 1.0
  %v1078 = vmul.f32 %v1077, %v1070
  %v1079 = vand.u32 2147483647, %v1070
  %vm1080 = vcmp.lt.f32.partialorder %v1079, 0.0004427343
  %v1081 = vsel %vm1080, %v1078, %v1075
  %v1082 = vadd.f32 %v1072, 1.0
  %v1083 = vlog2.pop %v1082
  %v1084 = vmul.f32 %v1083, 0.6931472
  %v1085 = vmul.f32 -0.5, %v1072
  %v1086 = vadd.f32 %v1085, 1.0
  %v1087 = vmul.f32 %v1086, %v1072
  %v1088 = vand.u32 2147483647, %v1072
  %vm1089 = vcmp.lt.f32.partialorder %v1088, 0.0004427343
  %v1090 = vsel %vm1089, %v1087, %v1084
  %v1091 = vadd.f32 %v1059, %v1081
  %v1092 = vadd.f32 %v1060, %v1090
  %v1093 = vsel %vm1061, %v1063, %v1091
  %v1094 = vsel %vm1062, %v1064, %v1092
  %v1095 = vpack.c.bf16 %v1094, %v1093
  %s1096 = scalar_lea.vmem %s9, 16
  %v1097 = vld [vmem:[%s1096] sm:$0xf]
  %v1098 = vld [vmem:[%s1096 + $0x4] sm:$0xf]
  %v1099 = vld [vmem:[%s1096 + $0x8] sm:$0xf]
  %v1100 = vld [vmem:[%s1096 + $0xc] sm:$0xf]
  %v1105 = vunpack.c.l.b16 %v1097
  %v1106 = vunpack.c.l.b16 %v1098
  %v1107 = vunpack.c.l.b16 %v1099
  %v1108 = vunpack.c.l.b16 %v1100
  %v1109 = vpack.c.b16 %v1106, %v1105
  %v1110 = vpack.c.b16 %v1108, %v1107
  %v1114 = vsel %vm179, %v1095, 0
  %1116 = vmatpush.bf16.msra.mxu0 0
  %1117 = vmatpush.bf16.msra.mxu0 0
  %1118 = vmatpush.bf16.msra.mxu0 0
  %1119 = vmatpush.bf16.msra.mxu0 0
  %1120 = vmatpush.bf16.msra.mxu0 0
  %1121 = vmatpush.bf16.msra.mxu0 0
  %1122 = vmatpush.bf16.msra.mxu0 %v1110
  %1123 = vmatpush.bf16.msra.mxu0 %v1109
  %1124 = vmatmul.bf16.gmra.mxu0 %v1114
  %v1125 = vpop.f32.mrf.mxu0
  %v1126 = vadd.f32 0.0, %v1125
  %v1127 = vpop.f32.mrf.mxu0
  %v1128 = vadd.f32 0.0, %v1127
  %1129 = vdwg.mxu0
  %s1130 = scalar_lea.vmem %s10, 16
  %v1131 = vld [vmem:[%s1130] sm:$0xf]
  %v1132 = vld [vmem:[%s1130 + $0x4] sm:$0xf]
  %v1133 = vld [vmem:[%s1130 + $0x8] sm:$0xf]
  %v1134 = vld [vmem:[%s1130 + $0xc] sm:$0xf]
  %v1139 = vunpack.c.l.b16 %v1131
  %v1140 = vunpack.c.l.b16 %v1132
  %v1141 = vunpack.c.l.b16 %v1133
  %v1142 = vunpack.c.l.b16 %v1134
  %v1143 = vpack.c.b16 %v1140, %v1139
  %v1144 = vpack.c.b16 %v1142, %v1141
  %1147 = vmatpush.bf16.msra.mxu0 0
  %1148 = vmatpush.bf16.msra.mxu0 0
  %1149 = vmatpush.bf16.msra.mxu0 0
  %1150 = vmatpush.bf16.msra.mxu0 0
  %1151 = vmatpush.bf16.msra.mxu0 0
  %1152 = vmatpush.bf16.msra.mxu0 0
  %1153 = vmatpush.bf16.msra.mxu0 %v1144
  %1154 = vmatpush.bf16.msra.mxu0 %v1143
  %1155 = vmatmul.bf16.gmra.mxu0 %v1114
  %v1156 = vpop.f32.mrf.mxu0
  %v1157 = vadd.f32 0.0, %v1156
  %v1158 = vpop.f32.mrf.mxu0
  %v1159 = vadd.f32 0.0, %v1158
  %1160 = vdwg.mxu0
  %s1161 = scalar_lea.vmem %s11, 8
  %v1162 = vld [vmem:[%s1161] sm:$0xf]
  %v1163 = vld [vmem:[%s1161 + $0x4] sm:$0xf]
  %v1166 = vunpack.c.l.b16 %v1162
  %v1167 = vunpack.c.l.b16 %v1163
  %v1168 = vpack.c.b16 %v1167, %v1166
  %1170 = vmatpush.bf16.msra.mxu0 0
  %1171 = vmatpush.bf16.msra.mxu0 0
  %1172 = vmatpush.bf16.msra.mxu0 0
  %1173 = vmatpush.bf16.msra.mxu0 0
  %1174 = vmatpush.bf16.msra.mxu0 0
  %1175 = vmatpush.bf16.msra.mxu0 0
  %1176 = vmatpush.bf16.msra.mxu0 0
  %1177 = vmatpush.bf16.msra.mxu0 %v1168
  %1178 = vmatmul.bf16.gmra.mxu0 %v236
  %v1179 = vpop.f32.mrf.mxu0
  %v1180 = vadd.f32 0.0, %v1179
  %v1181 = vpop.f32.mrf.mxu0
  %v1182 = vadd.f32 0.0, %v1181
  %1183 = vmatmul.bf16.gmra.mxu0 %v239
  %v1184 = vpop.f32.mrf.mxu0
  %v1185 = vadd.f32 0.0, %v1184
  %v1186 = vpop.f32.mrf.mxu0
  %v1187 = vadd.f32 0.0, %v1186
  %1188 = vmatmul.bf16.gmra.mxu0 %v242
  %v1189 = vpop.f32.mrf.mxu0
  %v1190 = vadd.f32 0.0, %v1189
  %v1191 = vpop.f32.mrf.mxu0
  %v1192 = vadd.f32 0.0, %v1191
  %1193 = vmatmul.bf16.gmra.mxu0 %v245
  %v1194 = vpop.f32.mrf.mxu0
  %v1195 = vadd.f32 0.0, %v1194
  %v1196 = vpop.f32.mrf.mxu0
  %v1197 = vadd.f32 0.0, %v1196
  %1198 = vmatmul.bf16.gmra.mxu0 %v248
  %v1199 = vpop.f32.mrf.mxu0
  %v1200 = vadd.f32 0.0, %v1199
  %v1201 = vpop.f32.mrf.mxu0
  %v1202 = vadd.f32 0.0, %v1201
  %1203 = vmatmul.bf16.gmra.mxu0 %v251
  %v1204 = vpop.f32.mrf.mxu0
  %v1205 = vadd.f32 0.0, %v1204
  %v1206 = vpop.f32.mrf.mxu0
  %v1207 = vadd.f32 0.0, %v1206
  %1208 = vmatmul.bf16.gmra.mxu0 %v254
  %v1209 = vpop.f32.mrf.mxu0
  %v1210 = vadd.f32 0.0, %v1209
  %v1211 = vpop.f32.mrf.mxu0
  %v1212 = vadd.f32 0.0, %v1211
  %1213 = vmatmul.bf16.gmra.mxu0 %v257
  %v1214 = vpop.f32.mrf.mxu0
  %v1215 = vadd.f32 0.0, %v1214
  %v1216 = vpop.f32.mrf.mxu0
  %v1217 = vadd.f32 0.0, %v1216
  %1218 = vdwg.mxu0
  %1219 = vmatpush.msra.mxu0 0.0
  %1220 = vmatpush.msra.mxu0 0.0
  %1221 = vmatpush.msra.mxu0 0.0
  %1222 = vmatpush.msra.mxu0 0.0
  %1223 = vmatpush.msra.mxu0 0.0
  %1224 = vmatpush.msra.mxu0 0.0
  %1225 = vmatpush.msra.mxu0 0.0
  %1226 = vmatpush.msra.mxu0 0.0
  %1227 = vmatpush.msra.mxu0 0.0
  %1228 = vmatpush.msra.mxu0 0.0
  %1229 = vmatpush.msra.mxu0 0.0
  %1230 = vmatpush.msra.mxu0 0.0
  %1231 = vmatpush.msra.mxu0 0.0
  %1232 = vmatpush.msra.mxu0 0.0
  %1233 = vmatpush.msra.mxu0 %v1159
  %1234 = vmatpush.msra.mxu0 %v1157
  %1235 = vmatmul.f32.gmra.mxu0 %v309
  %v1236 = vpop.f32.mrf.mxu0
  %v1237 = vadd.f32 0.0, %v1236
  %1238 = vmatmul.f32.gmra.mxu0 %v312
  %v1239 = vpop.f32.mrf.mxu0
  %v1240 = vadd.f32 0.0, %v1239
  %1241 = vmatmul.f32.gmra.mxu0 %v315
  %v1242 = vpop.f32.mrf.mxu0
  %v1243 = vadd.f32 0.0, %v1242
  %1244 = vmatmul.f32.gmra.mxu0 %v318
  %v1245 = vpop.f32.mrf.mxu0
  %v1246 = vadd.f32 0.0, %v1245
  %1247 = vmatmul.f32.gmra.mxu0 %v321
  %v1248 = vpop.f32.mrf.mxu0
  %v1249 = vadd.f32 0.0, %v1248
  %1250 = vmatmul.f32.gmra.mxu0 %v324
  %v1251 = vpop.f32.mrf.mxu0
  %v1252 = vadd.f32 0.0, %v1251
  %1253 = vmatmul.f32.gmra.mxu0 %v327
  %v1254 = vpop.f32.mrf.mxu0
  %v1255 = vadd.f32 0.0, %v1254
  %1256 = vmatmul.f32.gmra.mxu0 %v330
  %v1257 = vpop.f32.mrf.mxu0
  %v1258 = vadd.f32 0.0, %v1257
  %1259 = vmatmul.f32.gmra.mxu0 %v333
  %v1260 = vpop.f32.mrf.mxu0
  %v1261 = vadd.f32 0.0, %v1260
  %1262 = vmatmul.f32.gmra.mxu0 %v336
  %v1263 = vpop.f32.mrf.mxu0
  %v1264 = vadd.f32 0.0, %v1263
  %1265 = vmatmul.f32.gmra.mxu0 %v339
  %v1266 = vpop.f32.mrf.mxu0
  %v1267 = vadd.f32 0.0, %v1266
  %1268 = vmatmul.f32.gmra.mxu0 %v342
  %v1269 = vpop.f32.mrf.mxu0
  %v1270 = vadd.f32 0.0, %v1269
  %1271 = vmatmul.f32.gmra.mxu0 %v345
  %v1272 = vpop.f32.mrf.mxu0
  %v1273 = vadd.f32 0.0, %v1272
  %1274 = vmatmul.f32.gmra.mxu0 %v348
  %v1275 = vpop.f32.mrf.mxu0
  %v1276 = vadd.f32 0.0, %v1275
  %1277 = vmatmul.f32.gmra.mxu0 %v351
  %v1278 = vpop.f32.mrf.mxu0
  %v1279 = vadd.f32 0.0, %v1278
  %1280 = vmatmul.f32.gmra.mxu0 %v354
  %v1281 = vpop.f32.mrf.mxu0
  %v1282 = vadd.f32 0.0, %v1281
  %1283 = vdwg.mxu0
  %1284 = vmatpush.msra.mxu0 0.0
  %1285 = vmatpush.msra.mxu0 0.0
  %1286 = vmatpush.msra.mxu0 0.0
  %1287 = vmatpush.msra.mxu0 0.0
  %1288 = vmatpush.msra.mxu0 0.0
  %1289 = vmatpush.msra.mxu0 0.0
  %1290 = vmatpush.msra.mxu0 0.0
  %1291 = vmatpush.msra.mxu0 0.0
  %1292 = vmatpush.msra.mxu0 0.0
  %1293 = vmatpush.msra.mxu0 0.0
  %1294 = vmatpush.msra.mxu0 0.0
  %1295 = vmatpush.msra.mxu0 0.0
  %1296 = vmatpush.msra.mxu0 0.0
  %1297 = vmatpush.msra.mxu0 0.0
  %1298 = vmatpush.msra.mxu0 %v1128
  %1299 = vmatpush.msra.mxu0 %v1126
  %1300 = vmatmul.f32.gmra.mxu0 %v422
  %v1301 = vpop.f32.mrf.mxu0
  %v1302 = vadd.f32 %v1237, %v1301
  %1303 = vmatmul.f32.gmra.mxu0 %v425
  %v1304 = vpop.f32.mrf.mxu0
  %v1305 = vadd.f32 %v1240, %v1304
  %1306 = vmatmul.f32.gmra.mxu0 %v428
  %v1307 = vpop.f32.mrf.mxu0
  %v1308 = vadd.f32 %v1243, %v1307
  %1309 = vmatmul.f32.gmra.mxu0 %v431
  %v1310 = vpop.f32.mrf.mxu0
  %v1311 = vadd.f32 %v1246, %v1310
  %1312 = vmatmul.f32.gmra.mxu0 %v434
  %v1313 = vpop.f32.mrf.mxu0
  %v1314 = vadd.f32 %v1249, %v1313
  %1315 = vmatmul.f32.gmra.mxu0 %v437
  %v1316 = vpop.f32.mrf.mxu0
  %v1317 = vadd.f32 %v1252, %v1316
  %1318 = vmatmul.f32.gmra.mxu0 %v440
  %v1319 = vpop.f32.mrf.mxu0
  %v1320 = vadd.f32 %v1255, %v1319
  %1321 = vmatmul.f32.gmra.mxu0 %v443
  %v1322 = vpop.f32.mrf.mxu0
  %v1323 = vadd.f32 %v1258, %v1322
  %1324 = vmatmul.f32.gmra.mxu0 %v446
  %v1325 = vpop.f32.mrf.mxu0
  %v1326 = vadd.f32 %v1261, %v1325
  %1327 = vmatmul.f32.gmra.mxu0 %v449
  %v1328 = vpop.f32.mrf.mxu0
  %v1329 = vadd.f32 %v1264, %v1328
  %1330 = vmatmul.f32.gmra.mxu0 %v452
  %v1331 = vpop.f32.mrf.mxu0
  %v1332 = vadd.f32 %v1267, %v1331
  %1333 = vmatmul.f32.gmra.mxu0 %v455
  %v1334 = vpop.f32.mrf.mxu0
  %v1335 = vadd.f32 %v1270, %v1334
  %1336 = vmatmul.f32.gmra.mxu0 %v458
  %v1337 = vpop.f32.mrf.mxu0
  %v1338 = vadd.f32 %v1273, %v1337
  %1339 = vmatmul.f32.gmra.mxu0 %v461
  %v1340 = vpop.f32.mrf.mxu0
  %v1341 = vadd.f32 %v1276, %v1340
  %1342 = vmatmul.f32.gmra.mxu0 %v464
  %v1343 = vpop.f32.mrf.mxu0
  %v1344 = vadd.f32 %v1279, %v1343
  %1345 = vmatmul.f32.gmra.mxu0 %v467
  %v1346 = vpop.f32.mrf.mxu0
  %v1347 = vadd.f32 %v1282, %v1346
  %1348 = vdwg.mxu0
  %v1349 = vadd.f32 %v1302, %v1180
  %v1350 = vadd.f32 %v1305, %v1182
  %v1351 = vadd.f32 %v1308, %v1185
  %v1352 = vadd.f32 %v1311, %v1187
  %v1353 = vadd.f32 %v1314, %v1190
  %v1354 = vadd.f32 %v1317, %v1192
  %v1355 = vadd.f32 %v1320, %v1195
  %v1356 = vadd.f32 %v1323, %v1197
  %v1357 = vadd.f32 %v1326, %v1200
  %v1358 = vadd.f32 %v1329, %v1202
  %v1359 = vadd.f32 %v1332, %v1205
  %v1360 = vadd.f32 %v1335, %v1207
  %v1361 = vadd.f32 %v1338, %v1210
  %v1362 = vadd.f32 %v1341, %v1212
  %v1363 = vadd.f32 %v1344, %v1215
  %v1364 = vadd.f32 %v1347, %v1217
  %s1365 = scalar_lea.vmem %s12, 1
  %v1366 = vld [vmem:[%s1365] sm:$0x1]
  %v1368 = vperm.slane %v1366, 0
  %v1370 = vmul.f32 %v1349, %v1368
  %v1371 = vmul.f32 %v1350, %v1368
  %v1372 = vmul.f32 %v1351, %v1368
  %v1373 = vmul.f32 %v1352, %v1368
  %v1374 = vmul.f32 %v1353, %v1368
  %v1375 = vmul.f32 %v1354, %v1368
  %v1376 = vmul.f32 %v1355, %v1368
  %v1377 = vmul.f32 %v1356, %v1368
  %v1378 = vmul.f32 %v1357, %v1368
  %v1379 = vmul.f32 %v1358, %v1368
  %v1380 = vmul.f32 %v1359, %v1368
  %v1381 = vmul.f32 %v1360, %v1368
  %v1382 = vmul.f32 %v1361, %v1368
  %v1383 = vmul.f32 %v1362, %v1368
  %v1384 = vmul.f32 %v1363, %v1368
  %v1385 = vmul.f32 %v1364, %v1368
  %s1386 = scalar_lea.vmem %s13, 1
  %v1387 = vld [vmem:[%s1386] sm:$0x1]
  %v1389 = vperm.slane %v1387, 0
  %v1391 = vadd.f32 %v1370, %v1389
  %v1392 = vadd.f32 %v1371, %v1389
  %v1393 = vadd.f32 %v1372, %v1389
  %v1394 = vadd.f32 %v1373, %v1389
  %v1395 = vadd.f32 %v1374, %v1389
  %v1396 = vadd.f32 %v1375, %v1389
  %v1397 = vadd.f32 %v1376, %v1389
  %v1398 = vadd.f32 %v1377, %v1389
  %v1399 = vadd.f32 %v1378, %v1389
  %v1400 = vadd.f32 %v1379, %v1389
  %v1401 = vadd.f32 %v1380, %v1389
  %v1402 = vadd.f32 %v1381, %v1389
  %v1403 = vadd.f32 %v1382, %v1389
  %v1404 = vadd.f32 %v1383, %v1389
  %v1405 = vadd.f32 %v1384, %v1389
  %v1406 = vadd.f32 %v1385, %v1389
  %v1407 = vmul.f32 %v1391, 0.5
  %v1408 = vmul.f32 %v1392, 0.5
  %v1409 = vmul.f32 %v1393, 0.5
  %v1410 = vmul.f32 %v1394, 0.5
  %v1411 = vmul.f32 %v1395, 0.5
  %v1412 = vmul.f32 %v1396, 0.5
  %v1413 = vmul.f32 %v1397, 0.5
  %v1414 = vmul.f32 %v1398, 0.5
  %v1415 = vmul.f32 %v1399, 0.5
  %v1416 = vmul.f32 %v1400, 0.5
  %v1417 = vmul.f32 %v1401, 0.5
  %v1418 = vmul.f32 %v1402, 0.5
  %v1419 = vmul.f32 %v1403, 0.5
  %v1420 = vmul.f32 %v1404, 0.5
  %v1421 = vmul.f32 %v1405, 0.5
  %v1422 = vmul.f32 %v1406, 0.5
  %v1423 = vtanh.pop %v1407
  %v1424 = vtanh.pop %v1408
  %v1425 = vtanh.pop %v1409
  %v1426 = vtanh.pop %v1410
  %v1427 = vtanh.pop %v1411
  %v1428 = vtanh.pop %v1412
  %v1429 = vtanh.pop %v1413
  %v1430 = vtanh.pop %v1414
  %v1431 = vtanh.pop %v1415
  %v1432 = vtanh.pop %v1416
  %v1433 = vtanh.pop %v1417
  %v1434 = vtanh.pop %v1418
  %v1435 = vtanh.pop %v1419
  %v1436 = vtanh.pop %v1420
  %v1437 = vtanh.pop %v1421
  %v1438 = vtanh.pop %v1422
  %v1439 = vmul.f32 %v1423, 0.5
  %v1440 = vmul.f32 %v1424, 0.5
  %v1441 = vmul.f32 %v1425, 0.5
  %v1442 = vmul.f32 %v1426, 0.5
  %v1443 = vmul.f32 %v1427, 0.5
  %v1444 = vmul.f32 %v1428, 0.5
  %v1445 = vmul.f32 %v1429, 0.5
  %v1446 = vmul.f32 %v1430, 0.5
  %v1447 = vmul.f32 %v1431, 0.5
  %v1448 = vmul.f32 %v1432, 0.5
  %v1449 = vmul.f32 %v1433, 0.5
  %v1450 = vmul.f32 %v1434, 0.5
  %v1451 = vmul.f32 %v1435, 0.5
  %v1452 = vmul.f32 %v1436, 0.5
  %v1453 = vmul.f32 %v1437, 0.5
  %v1454 = vmul.f32 %v1438, 0.5
  %v1455 = vadd.f32 %v1439, 0.5
  %v1456 = vadd.f32 %v1440, 0.5
  %v1457 = vadd.f32 %v1441, 0.5
  %v1458 = vadd.f32 %v1442, 0.5
  %v1459 = vadd.f32 %v1443, 0.5
  %v1460 = vadd.f32 %v1444, 0.5
  %v1461 = vadd.f32 %v1445, 0.5
  %v1462 = vadd.f32 %v1446, 0.5
  %v1463 = vadd.f32 %v1447, 0.5
  %v1464 = vadd.f32 %v1448, 0.5
  %v1465 = vadd.f32 %v1449, 0.5
  %v1466 = vadd.f32 %v1450, 0.5
  %v1467 = vadd.f32 %v1451, 0.5
  %v1468 = vadd.f32 %v1452, 0.5
  %v1469 = vadd.f32 %v1453, 0.5
  %v1470 = vadd.f32 %v1454, 0.5
  %v1471 = vmax.f32 %v1391, 0.0
  %v1472 = vmax.f32 %v1392, 0.0
  %v1473 = vmax.f32 %v1393, 0.0
  %v1474 = vmax.f32 %v1394, 0.0
  %v1475 = vmax.f32 %v1395, 0.0
  %v1476 = vmax.f32 %v1396, 0.0
  %v1477 = vmax.f32 %v1397, 0.0
  %v1478 = vmax.f32 %v1398, 0.0
  %v1479 = vmax.f32 %v1399, 0.0
  %v1480 = vmax.f32 %v1400, 0.0
  %v1481 = vmax.f32 %v1401, 0.0
  %v1482 = vmax.f32 %v1402, 0.0
  %v1483 = vmax.f32 %v1403, 0.0
  %v1484 = vmax.f32 %v1404, 0.0
  %v1485 = vmax.f32 %v1405, 0.0
  %v1486 = vmax.f32 %v1406, 0.0
  %vm1487 = vcmp.ne.f32.partialorder %v1391, %v1391
  %vm1488 = vcmp.ne.f32.partialorder %v1392, %v1392
  %vm1489 = vcmp.ne.f32.partialorder %v1393, %v1393
  %vm1490 = vcmp.ne.f32.partialorder %v1394, %v1394
  %vm1491 = vcmp.ne.f32.partialorder %v1395, %v1395
  %vm1492 = vcmp.ne.f32.partialorder %v1396, %v1396
  %vm1493 = vcmp.ne.f32.partialorder %v1397, %v1397
  %vm1494 = vcmp.ne.f32.partialorder %v1398, %v1398
  %vm1495 = vcmp.ne.f32.partialorder %v1399, %v1399
  %vm1496 = vcmp.ne.f32.partialorder %v1400, %v1400
  %vm1497 = vcmp.ne.f32.partialorder %v1401, %v1401
  %vm1498 = vcmp.ne.f32.partialorder %v1402, %v1402
  %vm1499 = vcmp.ne.f32.partialorder %v1403, %v1403
  %vm1500 = vcmp.ne.f32.partialorder %v1404, %v1404
  %vm1501 = vcmp.ne.f32.partialorder %v1405, %v1405
  %vm1502 = vcmp.ne.f32.partialorder %v1406, %v1406
  %v1503 = vadd.f32 %v1391, 0.0
  %v1504 = vadd.f32 %v1392, 0.0
  %v1505 = vadd.f32 %v1393, 0.0
  %v1506 = vadd.f32 %v1394, 0.0
  %v1507 = vadd.f32 %v1395, 0.0
  %v1508 = vadd.f32 %v1396, 0.0
  %v1509 = vadd.f32 %v1397, 0.0
  %v1510 = vadd.f32 %v1398, 0.0
  %v1511 = vadd.f32 %v1399, 0.0
  %v1512 = vadd.f32 %v1400, 0.0
  %v1513 = vadd.f32 %v1401, 0.0
  %v1514 = vadd.f32 %v1402, 0.0
  %v1515 = vadd.f32 %v1403, 0.0
  %v1516 = vadd.f32 %v1404, 0.0
  %v1517 = vadd.f32 %v1405, 0.0
  %v1518 = vadd.f32 %v1406, 0.0
  %v1519 = vand.u32 2147483647, %v1391
  %v1520 = vand.u32 2147483647, %v1392
  %v1521 = vand.u32 2147483647, %v1393
  %v1522 = vand.u32 2147483647, %v1394
  %v1523 = vand.u32 2147483647, %v1395
  %v1524 = vand.u32 2147483647, %v1396
  %v1525 = vand.u32 2147483647, %v1397
  %v1526 = vand.u32 2147483647, %v1398
  %v1527 = vand.u32 2147483647, %v1399
  %v1528 = vand.u32 2147483647, %v1400
  %v1529 = vand.u32 2147483647, %v1401
  %v1530 = vand.u32 2147483647, %v1402
  %v1531 = vand.u32 2147483647, %v1403
  %v1532 = vand.u32 2147483647, %v1404
  %v1533 = vand.u32 2147483647, %v1405
  %v1534 = vand.u32 2147483647, %v1406
  %v1535 = vsub.f32 0.0, %v1519
  %v1536 = vsub.f32 0.0, %v1520
  %v1537 = vsub.f32 0.0, %v1521
  %v1538 = vsub.f32 0.0, %v1522
  %v1539 = vsub.f32 0.0, %v1523
  %v1540 = vsub.f32 0.0, %v1524
  %v1541 = vsub.f32 0.0, %v1525
  %v1542 = vsub.f32 0.0, %v1526
  %v1543 = vsub.f32 0.0, %v1527
  %v1544 = vsub.f32 0.0, %v1528
  %v1545 = vsub.f32 0.0, %v1529
  %v1546 = vsub.f32 0.0, %v1530
  %v1547 = vsub.f32 0.0, %v1531
  %v1548 = vsub.f32 0.0, %v1532
  %v1549 = vsub.f32 0.0, %v1533
  %v1550 = vsub.f32 0.0, %v1534
  %v1551 = vmul.f32 %v1535, 1.442695
  %v1552 = vpow.pop %v1551
  %v1553 = vmul.f32 %v1536, 1.442695
  %v1554 = vpow.pop %v1553
  %v1555 = vmul.f32 %v1537, 1.442695
  %v1556 = vpow.pop %v1555
  %v1557 = vmul.f32 %v1538, 1.442695
  %v1558 = vpow.pop %v1557
  %v1559 = vmul.f32 %v1539, 1.442695
  %v1560 = vpow.pop %v1559
  %v1561 = vmul.f32 %v1540, 1.442695
  %v1562 = vpow.pop %v1561
  %v1563 = vmul.f32 %v1541, 1.442695
  %v1564 = vpow.pop %v1563
  %v1565 = vmul.f32 %v1542, 1.442695
  %v1566 = vpow.pop %v1565
  %v1567 = vmul.f32 %v1543, 1.442695
  %v1568 = vpow.pop %v1567
  %v1569 = vmul.f32 %v1544, 1.442695
  %v1570 = vpow.pop %v1569
  %v1571 = vmul.f32 %v1545, 1.442695
  %v1572 = vpow.pop %v1571
  %v1573 = vmul.f32 %v1546, 1.442695
  %v1574 = vpow.pop %v1573
  %v1575 = vmul.f32 %v1547, 1.442695
  %v1576 = vpow.pop %v1575
  %v1577 = vmul.f32 %v1548, 1.442695
  %v1578 = vpow.pop %v1577
  %v1579 = vmul.f32 %v1549, 1.442695
  %v1580 = vpow.pop %v1579
  %v1581 = vmul.f32 %v1550, 1.442695
  %v1582 = vpow.pop %v1581
  %v1583 = vadd.f32 %v1552, 1.0
  %v1584 = vlog2.pop %v1583
  %v1585 = vmul.f32 %v1584, 0.6931472
  %v1586 = vmul.f32 -0.5, %v1552
  %v1587 = vadd.f32 %v1586, 1.0
  %v1588 = vmul.f32 %v1587, %v1552
  %v1589 = vand.u32 2147483647, %v1552
  %vm1590 = vcmp.lt.f32.partialorder %v1589, 0.0004427343
  %v1591 = vsel %vm1590, %v1588, %v1585
  %v1592 = vadd.f32 %v1554, 1.0
  %v1593 = vlog2.pop %v1592
  %v1594 = vmul.f32 %v1593, 0.6931472
  %v1595 = vmul.f32 -0.5, %v1554
  %v1596 = vadd.f32 %v1595, 1.0
  %v1597 = vmul.f32 %v1596, %v1554
  %v1598 = vand.u32 2147483647, %v1554
  %vm1599 = vcmp.lt.f32.partialorder %v1598, 0.0004427343
  %v1600 = vsel %vm1599, %v1597, %v1594
  %v1601 = vadd.f32 %v1556, 1.0
  %v1602 = vlog2.pop %v1601
  %v1603 = vmul.f32 %v1602, 0.6931472
  %v1604 = vmul.f32 -0.5, %v1556
  %v1605 = vadd.f32 %v1604, 1.0
  %v1606 = vmul.f32 %v1605, %v1556
  %v1607 = vand.u32 2147483647, %v1556
  %vm1608 = vcmp.lt.f32.partialorder %v1607, 0.0004427343
  %v1609 = vsel %vm1608, %v1606, %v1603
  %v1610 = vadd.f32 %v1558, 1.0
  %v1611 = vlog2.pop %v1610
  %v1612 = vmul.f32 %v1611, 0.6931472
  %v1613 = vmul.f32 -0.5, %v1558
  %v1614 = vadd.f32 %v1613, 1.0
  %v1615 = vmul.f32 %v1614, %v1558
  %v1616 = vand.u32 2147483647, %v1558
  %vm1617 = vcmp.lt.f32.partialorder %v1616, 0.0004427343
  %v1618 = vsel %vm1617, %v1615, %v1612
  %v1619 = vadd.f32 %v1560, 1.0
  %v1620 = vlog2.pop %v1619
  %v1621 = vmul.f32 %v1620, 0.6931472
  %v1622 = vmul.f32 -0.5, %v1560
  %v1623 = vadd.f32 %v1622, 1.0
  %v1624 = vmul.f32 %v1623, %v1560
  %v1625 = vand.u32 2147483647, %v1560
  %vm1626 = vcmp.lt.f32.partialorder %v1625, 0.0004427343
  %v1627 = vsel %vm1626, %v1624, %v1621
  %v1628 = vadd.f32 %v1562, 1.0
  %v1629 = vlog2.pop %v1628
  %v1630 = vmul.f32 %v1629, 0.6931472
  %v1631 = vmul.f32 -0.5, %v1562
  %v1632 = vadd.f32 %v1631, 1.0
  %v1633 = vmul.f32 %v1632, %v1562
  %v1634 = vand.u32 2147483647, %v1562
  %vm1635 = vcmp.lt.f32.partialorder %v1634, 0.0004427343
  %v1636 = vsel %vm1635, %v1633, %v1630
  %v1637 = vadd.f32 %v1564, 1.0
  %v1638 = vlog2.pop %v1637
  %v1639 = vmul.f32 %v1638, 0.6931472
  %v1640 = vmul.f32 -0.5, %v1564
  %v1641 = vadd.f32 %v1640, 1.0
  %v1642 = vmul.f32 %v1641, %v1564
  %v1643 = vand.u32 2147483647, %v1564
  %vm1644 = vcmp.lt.f32.partialorder %v1643, 0.0004427343
  %v1645 = vsel %vm1644, %v1642, %v1639
  %v1646 = vadd.f32 %v1566, 1.0
  %v1647 = vlog2.pop %v1646
  %v1648 = vmul.f32 %v1647, 0.6931472
  %v1649 = vmul.f32 -0.5, %v1566
  %v1650 = vadd.f32 %v1649, 1.0
  %v1651 = vmul.f32 %v1650, %v1566
  %v1652 = vand.u32 2147483647, %v1566
  %vm1653 = vcmp.lt.f32.partialorder %v1652, 0.0004427343
  %v1654 = vsel %vm1653, %v1651, %v1648
  %v1655 = vadd.f32 %v1568, 1.0
  %v1656 = vlog2.pop %v1655
  %v1657 = vmul.f32 %v1656, 0.6931472
  %v1658 = vmul.f32 -0.5, %v1568
  %v1659 = vadd.f32 %v1658, 1.0
  %v1660 = vmul.f32 %v1659, %v1568
  %v1661 = vand.u32 2147483647, %v1568
  %vm1662 = vcmp.lt.f32.partialorder %v1661, 0.0004427343
  %v1663 = vsel %vm1662, %v1660, %v1657
  %v1664 = vadd.f32 %v1570, 1.0
  %v1665 = vlog2.pop %v1664
  %v1666 = vmul.f32 %v1665, 0.6931472
  %v1667 = vmul.f32 -0.5, %v1570
  %v1668 = vadd.f32 %v1667, 1.0
  %v1669 = vmul.f32 %v1668, %v1570
  %v1670 = vand.u32 2147483647, %v1570
  %vm1671 = vcmp.lt.f32.partialorder %v1670, 0.0004427343
  %v1672 = vsel %vm1671, %v1669, %v1666
  %v1673 = vadd.f32 %v1572, 1.0
  %v1674 = vlog2.pop %v1673
  %v1675 = vmul.f32 %v1674, 0.6931472
  %v1676 = vmul.f32 -0.5, %v1572
  %v1677 = vadd.f32 %v1676, 1.0
  %v1678 = vmul.f32 %v1677, %v1572
  %v1679 = vand.u32 2147483647, %v1572
  %vm1680 = vcmp.lt.f32.partialorder %v1679, 0.0004427343
  %v1681 = vsel %vm1680, %v1678, %v1675
  %v1682 = vadd.f32 %v1574, 1.0
  %v1683 = vlog2.pop %v1682
  %v1684 = vmul.f32 %v1683, 0.6931472
  %v1685 = vmul.f32 -0.5, %v1574
  %v1686 = vadd.f32 %v1685, 1.0
  %v1687 = vmul.f32 %v1686, %v1574
  %v1688 = vand.u32 2147483647, %v1574
  %vm1689 = vcmp.lt.f32.partialorder %v1688, 0.0004427343
  %v1690 = vsel %vm1689, %v1687, %v1684
  %v1691 = vadd.f32 %v1576, 1.0
  %v1692 = vlog2.pop %v1691
  %v1693 = vmul.f32 %v1692, 0.6931472
  %v1694 = vmul.f32 -0.5, %v1576
  %v1695 = vadd.f32 %v1694, 1.0
  %v1696 = vmul.f32 %v1695, %v1576
  %v1697 = vand.u32 2147483647, %v1576
  %vm1698 = vcmp.lt.f32.partialorder %v1697, 0.0004427343
  %v1699 = vsel %vm1698, %v1696, %v1693
  %v1700 = vadd.f32 %v1578, 1.0
  %v1701 = vlog2.pop %v1700
  %v1702 = vmul.f32 %v1701, 0.6931472
  %v1703 = vmul.f32 -0.5, %v1578
  %v1704 = vadd.f32 %v1703, 1.0
  %v1705 = vmul.f32 %v1704, %v1578
  %v1706 = vand.u32 2147483647, %v1578
  %vm1707 = vcmp.lt.f32.partialorder %v1706, 0.0004427343
  %v1708 = vsel %vm1707, %v1705, %v1702
  %v1709 = vadd.f32 %v1580, 1.0
  %v1710 = vlog2.pop %v1709
  %v1711 = vmul.f32 %v1710, 0.6931472
  %v1712 = vmul.f32 -0.5, %v1580
  %v1713 = vadd.f32 %v1712, 1.0
  %v1714 = vmul.f32 %v1713, %v1580
  %v1715 = vand.u32 2147483647, %v1580
  %vm1716 = vcmp.lt.f32.partialorder %v1715, 0.0004427343
  %v1717 = vsel %vm1716, %v1714, %v1711
  %v1718 = vadd.f32 %v1582, 1.0
  %v1719 = vlog2.pop %v1718
  %v1720 = vmul.f32 %v1719, 0.6931472
  %v1721 = vmul.f32 -0.5, %v1582
  %v1722 = vadd.f32 %v1721, 1.0
  %v1723 = vmul.f32 %v1722, %v1582
  %v1724 = vand.u32 2147483647, %v1582
  %vm1725 = vcmp.lt.f32.partialorder %v1724, 0.0004427343
  %v1726 = vsel %vm1725, %v1723, %v1720
  %v1727 = vadd.f32 %v1471, %v1591
  %v1728 = vadd.f32 %v1472, %v1600
  %v1729 = vadd.f32 %v1473, %v1609
  %v1730 = vadd.f32 %v1474, %v1618
  %v1731 = vadd.f32 %v1475, %v1627
  %v1732 = vadd.f32 %v1476, %v1636
  %v1733 = vadd.f32 %v1477, %v1645
  %v1734 = vadd.f32 %v1478, %v1654
  %v1735 = vadd.f32 %v1479, %v1663
  %v1736 = vadd.f32 %v1480, %v1672
  %v1737 = vadd.f32 %v1481, %v1681
  %v1738 = vadd.f32 %v1482, %v1690
  %v1739 = vadd.f32 %v1483, %v1699
  %v1740 = vadd.f32 %v1484, %v1708
  %v1741 = vadd.f32 %v1485, %v1717
  %v1742 = vadd.f32 %v1486, %v1726
  %v1743 = vsel %vm1487, %v1503, %v1727
  %v1744 = vsel %vm1488, %v1504, %v1728
  %v1745 = vsel %vm1489, %v1505, %v1729
  %v1746 = vsel %vm1490, %v1506, %v1730
  %v1747 = vsel %vm1491, %v1507, %v1731
  %v1748 = vsel %vm1492, %v1508, %v1732
  %v1749 = vsel %vm1493, %v1509, %v1733
  %v1750 = vsel %vm1494, %v1510, %v1734
  %v1751 = vsel %vm1495, %v1511, %v1735
  %v1752 = vsel %vm1496, %v1512, %v1736
  %v1753 = vsel %vm1497, %v1513, %v1737
  %v1754 = vsel %vm1498, %v1514, %v1738
  %v1755 = vsel %vm1499, %v1515, %v1739
  %v1756 = vsel %vm1500, %v1516, %v1740
  %v1757 = vsel %vm1501, %v1517, %v1741
  %v1758 = vsel %vm1502, %v1518, %v1742
  %1775 = vrot.lane.b32.xlu0 %v1743, 96
  %v1776 = vpop.permute.xlu0 %1775
  %1777 = vrot.lane.b32.xlu0 %v1744, 96
  %v1778 = vpop.permute.xlu0 %1777
  %1779 = vrot.lane.b32.xlu0 %v1745, 96
  %v1780 = vpop.permute.xlu0 %1779
  %1781 = vrot.lane.b32.xlu0 %v1746, 96
  %v1782 = vpop.permute.xlu0 %1781
  %1783 = vrot.lane.b32.xlu0 %v1747, 96
  %v1784 = vpop.permute.xlu0 %1783
  %1785 = vrot.lane.b32.xlu0 %v1748, 96
  %v1786 = vpop.permute.xlu0 %1785
  %1787 = vrot.lane.b32.xlu0 %v1749, 96
  %v1788 = vpop.permute.xlu0 %1787
  %1789 = vrot.lane.b32.xlu0 %v1750, 96
  %v1790 = vpop.permute.xlu0 %1789
  %1791 = vrot.lane.b32.xlu0 %v1751, 96
  %v1792 = vpop.permute.xlu0 %1791
  %1793 = vrot.lane.b32.xlu0 %v1752, 96
  %v1794 = vpop.permute.xlu0 %1793
  %1795 = vrot.lane.b32.xlu0 %v1753, 96
  %v1796 = vpop.permute.xlu0 %1795
  %1797 = vrot.lane.b32.xlu0 %v1754, 96
  %v1798 = vpop.permute.xlu0 %1797
  %1799 = vrot.lane.b32.xlu0 %v1755, 96
  %v1800 = vpop.permute.xlu0 %1799
  %1801 = vrot.lane.b32.xlu0 %v1756, 96
  %v1802 = vpop.permute.xlu0 %1801
  %1803 = vrot.lane.b32.xlu0 %v1757, 96
  %v1804 = vpop.permute.xlu0 %1803
  %1805 = vrot.lane.b32.xlu0 %v1758, 96
  %v1806 = vpop.permute.xlu0 %1805
  %v1823 = vmul.f32 %v1455, %v1776
  %v1824 = vmul.f32 %v1456, %v1778
  %v1825 = vmul.f32 %v1457, %v1780
  %v1826 = vmul.f32 %v1458, %v1782
  %v1827 = vmul.f32 %v1459, %v1784
  %v1828 = vmul.f32 %v1460, %v1786
  %v1829 = vmul.f32 %v1461, %v1788
  %v1830 = vmul.f32 %v1462, %v1790
  %v1831 = vmul.f32 %v1463, %v1792
  %v1832 = vmul.f32 %v1464, %v1794
  %v1833 = vmul.f32 %v1465, %v1796
  %v1834 = vmul.f32 %v1466, %v1798
  %v1835 = vmul.f32 %v1467, %v1800
  %v1836 = vmul.f32 %v1468, %v1802
  %v1837 = vmul.f32 %v1469, %v1804
  %v1838 = vmul.f32 %v1470, %v1806
  %1839 = vmatpush.msra.mxu0 %v1838
  %1840 = vmatpush.msra.mxu0 %v1837
  %1841 = vmatpush.msra.mxu0 %v1836
  %1842 = vmatpush.msra.mxu0 %v1835
  %1843 = vmatpush.msra.mxu0 %v1834
  %1844 = vmatpush.msra.mxu0 %v1833
  %1845 = vmatpush.msra.mxu0 %v1832
  %1846 = vmatpush.msra.mxu0 %v1831
  %1847 = vmatpush.msra.mxu0 %v1830
  %1848 = vmatpush.msra.mxu0 %v1829
  %1849 = vmatpush.msra.mxu0 %v1828
  %1850 = vmatpush.msra.mxu0 %v1827
  %1851 = vmatpush.msra.mxu0 %v1826
  %1852 = vmatpush.msra.mxu0 %v1825
  %1853 = vmatpush.msra.mxu0 %v1824
  %1854 = vmatpush.msra.mxu0 %v1823
  %1855 = vmatmul.f32.gmra.mxu0 %v136
  %v1856 = vpop.f32.mrf.mxu0
  %v1857 = vadd.f32 0.0, %v1856
  %1858 = vmatmul.f32.gmra.mxu0 %v137
  %v1859 = vpop.f32.mrf.mxu0
  %v1860 = vadd.f32 0.0, %v1859
  %1861 = vdwg.mxu0
  %s1862 = scalar_lea.vmem %s14, 1
  %v1863 = vld [vmem:[%s1862] sm:$0x1]
  %v1865 = vperm.slane %v1863, 0
  %v1867 = vmul.f32 %v1857, %v1865
  %v1868 = vmul.f32 %v1860, %v1865
  %s1869 = scalar_lea.vmem %s15, 1
  %v1870 = vld [vmem:[%s1869] sm:$0x1]
  %v1872 = vperm.slane %v1870, 0
  %v1874 = vadd.f32 %v1867, %v1872
  %v1875 = vadd.f32 %v1868, %v1872
  %v1876 = vadd.f32 %v1093, %v1874
  %v1877 = vadd.f32 %v1094, %v1875
  %v1878 = vmax.f32 %v1876, 0.0
  %v1879 = vmax.f32 %v1877, 0.0
  %vm1880 = vcmp.ne.f32.partialorder %v1876, %v1876
  %vm1881 = vcmp.ne.f32.partialorder %v1877, %v1877
  %v1882 = vadd.f32 %v1876, 0.0
  %v1883 = vadd.f32 %v1877, 0.0
  %v1884 = vand.u32 2147483647, %v1876
  %v1885 = vand.u32 2147483647, %v1877
  %v1886 = vsub.f32 0.0, %v1884
  %v1887 = vsub.f32 0.0, %v1885
  %v1888 = vmul.f32 %v1886, 1.442695
  %v1889 = vpow.pop %v1888
  %v1890 = vmul.f32 %v1887, 1.442695
  %v1891 = vpow.pop %v1890
  %v1892 = vadd.f32 %v1889, 1.0
  %v1893 = vlog2.pop %v1892
  %v1894 = vmul.f32 %v1893, 0.6931472
  %v1895 = vmul.f32 -0.5, %v1889
  %v1896 = vadd.f32 %v1895, 1.0
  %v1897 = vmul.f32 %v1896, %v1889
  %v1898 = vand.u32 2147483647, %v1889
  %vm1899 = vcmp.lt.f32.partialorder %v1898, 0.0004427343
  %v1900 = vsel %vm1899, %v1897, %v1894
  %v1901 = vadd.f32 %v1891, 1.0
  %v1902 = vlog2.pop %v1901
  %v1903 = vmul.f32 %v1902, 0.6931472
  %v1904 = vmul.f32 -0.5, %v1891
  %v1905 = vadd.f32 %v1904, 1.0
  %v1906 = vmul.f32 %v1905, %v1891
  %v1907 = vand.u32 2147483647, %v1891
  %vm1908 = vcmp.lt.f32.partialorder %v1907, 0.0004427343
  %v1909 = vsel %vm1908, %v1906, %v1903
  %v1910 = vadd.f32 %v1878, %v1900
  %v1911 = vadd.f32 %v1879, %v1909
  %v1912 = vsel %vm1880, %v1882, %v1910
  %v1913 = vsel %vm1881, %v1883, %v1911
  %v1914 = vpack.c.bf16 %v1913, %v1912
  %s1915 = scalar_lea.vmem %s9, 32
  %v1916 = vld [vmem:[%s1915] sm:$0xf]
  %v1917 = vld [vmem:[%s1915 + $0x4] sm:$0xf]
  %v1918 = vld [vmem:[%s1915 + $0x8] sm:$0xf]
  %v1919 = vld [vmem:[%s1915 + $0xc] sm:$0xf]
  %v1924 = vunpack.c.l.b16 %v1916
  %v1925 = vunpack.c.l.b16 %v1917
  %v1926 = vunpack.c.l.b16 %v1918
  %v1927 = vunpack.c.l.b16 %v1919
  %v1928 = vpack.c.b16 %v1925, %v1924
  %v1929 = vpack.c.b16 %v1927, %v1926
  %v1933 = vsel %vm179, %v1914, 0
  %1935 = vmatpush.bf16.msra.mxu0 0
  %1936 = vmatpush.bf16.msra.mxu0 0
  %1937 = vmatpush.bf16.msra.mxu0 0
  %1938 = vmatpush.bf16.msra.mxu0 0
  %1939 = vmatpush.bf16.msra.mxu0 0
  %1940 = vmatpush.bf16.msra.mxu0 0
  %1941 = vmatpush.bf16.msra.mxu0 %v1929
  %1942 = vmatpush.bf16.msra.mxu0 %v1928
  %1943 = vmatmul.bf16.gmra.mxu0 %v1933
  %v1944 = vpop.f32.mrf.mxu0
  %v1945 = vadd.f32 0.0, %v1944
  %v1946 = vpop.f32.mrf.mxu0
  %v1947 = vadd.f32 0.0, %v1946
  %1948 = vdwg.mxu0
  %s1949 = scalar_lea.vmem %s10, 32
  %v1950 = vld [vmem:[%s1949] sm:$0xf]
  %v1951 = vld [vmem:[%s1949 + $0x4] sm:$0xf]
  %v1952 = vld [vmem:[%s1949 + $0x8] sm:$0xf]
  %v1953 = vld [vmem:[%s1949 + $0xc] sm:$0xf]
  %v1958 = vunpack.c.l.b16 %v1950
  %v1959 = vunpack.c.l.b16 %v1951
  %v1960 = vunpack.c.l.b16 %v1952
  %v1961 = vunpack.c.l.b16 %v1953
  %v1962 = vpack.c.b16 %v1959, %v1958
  %v1963 = vpack.c.b16 %v1961, %v1960
  %1966 = vmatpush.bf16.msra.mxu0 0
  %1967 = vmatpush.bf16.msra.mxu0 0
  %1968 = vmatpush.bf16.msra.mxu0 0
  %1969 = vmatpush.bf16.msra.mxu0 0
  %1970 = vmatpush.bf16.msra.mxu0 0
  %1971 = vmatpush.bf16.msra.mxu0 0
  %1972 = vmatpush.bf16.msra.mxu0 %v1963
  %1973 = vmatpush.bf16.msra.mxu0 %v1962
  %1974 = vmatmul.bf16.gmra.mxu0 %v1933
  %v1975 = vpop.f32.mrf.mxu0
  %v1976 = vadd.f32 0.0, %v1975
  %v1977 = vpop.f32.mrf.mxu0
  %v1978 = vadd.f32 0.0, %v1977
  %1979 = vdwg.mxu0
  %s1980 = scalar_lea.vmem %s11, 16
  %v1981 = vld [vmem:[%s1980] sm:$0xf]
  %v1982 = vld [vmem:[%s1980 + $0x4] sm:$0xf]
  %v1985 = vunpack.c.l.b16 %v1981
  %v1986 = vunpack.c.l.b16 %v1982
  %v1987 = vpack.c.b16 %v1986, %v1985
  %1989 = vmatpush.bf16.msra.mxu0 0
  %1990 = vmatpush.bf16.msra.mxu0 0
  %1991 = vmatpush.bf16.msra.mxu0 0
  %1992 = vmatpush.bf16.msra.mxu0 0
  %1993 = vmatpush.bf16.msra.mxu0 0
  %1994 = vmatpush.bf16.msra.mxu0 0
  %1995 = vmatpush.bf16.msra.mxu0 0
  %1996 = vmatpush.bf16.msra.mxu0 %v1987
  %1997 = vmatmul.bf16.gmra.mxu0 %v236
  %v1998 = vpop.f32.mrf.mxu0
  %v1999 = vadd.f32 0.0, %v1998
  %v2000 = vpop.f32.mrf.mxu0
  %v2001 = vadd.f32 0.0, %v2000
  %2002 = vmatmul.bf16.gmra.mxu0 %v239
  %v2003 = vpop.f32.mrf.mxu0
  %v2004 = vadd.f32 0.0, %v2003
  %v2005 = vpop.f32.mrf.mxu0
  %v2006 = vadd.f32 0.0, %v2005
  %2007 = vmatmul.bf16.gmra.mxu0 %v242
  %v2008 = vpop.f32.mrf.mxu0
  %v2009 = vadd.f32 0.0, %v2008
  %v2010 = vpop.f32.mrf.mxu0
  %v2011 = vadd.f32 0.0, %v2010
  %2012 = vmatmul.bf16.gmra.mxu0 %v245
  %v2013 = vpop.f32.mrf.mxu0
  %v2014 = vadd.f32 0.0, %v2013
  %v2015 = vpop.f32.mrf.mxu0
  %v2016 = vadd.f32 0.0, %v2015
  %2017 = vmatmul.bf16.gmra.mxu0 %v248
  %v2018 = vpop.f32.mrf.mxu0
  %v2019 = vadd.f32 0.0, %v2018
  %v2020 = vpop.f32.mrf.mxu0
  %v2021 = vadd.f32 0.0, %v2020
  %2022 = vmatmul.bf16.gmra.mxu0 %v251
  %v2023 = vpop.f32.mrf.mxu0
  %v2024 = vadd.f32 0.0, %v2023
  %v2025 = vpop.f32.mrf.mxu0
  %v2026 = vadd.f32 0.0, %v2025
  %2027 = vmatmul.bf16.gmra.mxu0 %v254
  %v2028 = vpop.f32.mrf.mxu0
  %v2029 = vadd.f32 0.0, %v2028
  %v2030 = vpop.f32.mrf.mxu0
  %v2031 = vadd.f32 0.0, %v2030
  %2032 = vmatmul.bf16.gmra.mxu0 %v257
  %v2033 = vpop.f32.mrf.mxu0
  %v2034 = vadd.f32 0.0, %v2033
  %v2035 = vpop.f32.mrf.mxu0
  %v2036 = vadd.f32 0.0, %v2035
  %2037 = vdwg.mxu0
  %2038 = vmatpush.msra.mxu0 0.0
  %2039 = vmatpush.msra.mxu0 0.0
  %2040 = vmatpush.msra.mxu0 0.0
  %2041 = vmatpush.msra.mxu0 0.0
  %2042 = vmatpush.msra.mxu0 0.0
  %2043 = vmatpush.msra.mxu0 0.0
  %2044 = vmatpush.msra.mxu0 0.0
  %2045 = vmatpush.msra.mxu0 0.0
  %2046 = vmatpush.msra.mxu0 0.0
  %2047 = vmatpush.msra.mxu0 0.0
  %2048 = vmatpush.msra.mxu0 0.0
  %2049 = vmatpush.msra.mxu0 0.0
  %2050 = vmatpush.msra.mxu0 0.0
  %2051 = vmatpush.msra.mxu0 0.0
  %2052 = vmatpush.msra.mxu0 %v1978
  %2053 = vmatpush.msra.mxu0 %v1976
  %2054 = vmatmul.f32.gmra.mxu0 %v309
  %v2055 = vpop.f32.mrf.mxu0
  %v2056 = vadd.f32 0.0, %v2055
  %2057 = vmatmul.f32.gmra.mxu0 %v312
  %v2058 = vpop.f32.mrf.mxu0
  %v2059 = vadd.f32 0.0, %v2058
  %2060 = vmatmul.f32.gmra.mxu0 %v315
  %v2061 = vpop.f32.mrf.mxu0
  %v2062 = vadd.f32 0.0, %v2061
  %2063 = vmatmul.f32.gmra.mxu0 %v318
  %v2064 = vpop.f32.mrf.mxu0
  %v2065 = vadd.f32 0.0, %v2064
  %2066 = vmatmul.f32.gmra.mxu0 %v321
  %v2067 = vpop.f32.mrf.mxu0
  %v2068 = vadd.f32 0.0, %v2067
  %2069 = vmatmul.f32.gmra.mxu0 %v324
  %v2070 = vpop.f32.mrf.mxu0
  %v2071 = vadd.f32 0.0, %v2070
  %2072 = vmatmul.f32.gmra.mxu0 %v327
  %v2073 = vpop.f32.mrf.mxu0
  %v2074 = vadd.f32 0.0, %v2073
  %2075 = vmatmul.f32.gmra.mxu0 %v330
  %v2076 = vpop.f32.mrf.mxu0
  %v2077 = vadd.f32 0.0, %v2076
  %2078 = vmatmul.f32.gmra.mxu0 %v333
  %v2079 = vpop.f32.mrf.mxu0
  %v2080 = vadd.f32 0.0, %v2079
  %2081 = vmatmul.f32.gmra.mxu0 %v336
  %v2082 = vpop.f32.mrf.mxu0
  %v2083 = vadd.f32 0.0, %v2082
  %2084 = vmatmul.f32.gmra.mxu0 %v339
  %v2085 = vpop.f32.mrf.mxu0
  %v2086 = vadd.f32 0.0, %v2085
  %2087 = vmatmul.f32.gmra.mxu0 %v342
  %v2088 = vpop.f32.mrf.mxu0
  %v2089 = vadd.f32 0.0, %v2088
  %2090 = vmatmul.f32.gmra.mxu0 %v345
  %v2091 = vpop.f32.mrf.mxu0
  %v2092 = vadd.f32 0.0, %v2091
  %2093 = vmatmul.f32.gmra.mxu0 %v348
  %v2094 = vpop.f32.mrf.mxu0
  %v2095 = vadd.f32 0.0, %v2094
  %2096 = vmatmul.f32.gmra.mxu0 %v351
  %v2097 = vpop.f32.mrf.mxu0
  %v2098 = vadd.f32 0.0, %v2097
  %2099 = vmatmul.f32.gmra.mxu0 %v354
  %v2100 = vpop.f32.mrf.mxu0
  %v2101 = vadd.f32 0.0, %v2100
  %2102 = vdwg.mxu0
  %2103 = vmatpush.msra.mxu0 0.0
  %2104 = vmatpush.msra.mxu0 0.0
  %2105 = vmatpush.msra.mxu0 0.0
  %2106 = vmatpush.msra.mxu0 0.0
  %2107 = vmatpush.msra.mxu0 0.0
  %2108 = vmatpush.msra.mxu0 0.0
  %2109 = vmatpush.msra.mxu0 0.0
  %2110 = vmatpush.msra.mxu0 0.0
  %2111 = vmatpush.msra.mxu0 0.0
  %2112 = vmatpush.msra.mxu0 0.0
  %2113 = vmatpush.msra.mxu0 0.0
  %2114 = vmatpush.msra.mxu0 0.0
  %2115 = vmatpush.msra.mxu0 0.0
  %2116 = vmatpush.msra.mxu0 0.0
  %2117 = vmatpush.msra.mxu0 %v1947
  %2118 = vmatpush.msra.mxu0 %v1945
  %2119 = vmatmul.f32.gmra.mxu0 %v422
  %v2120 = vpop.f32.mrf.mxu0
  %v2121 = vadd.f32 %v2056, %v2120
  %2122 = vmatmul.f32.gmra.mxu0 %v425
  %v2123 = vpop.f32.mrf.mxu0
  %v2124 = vadd.f32 %v2059, %v2123
  %2125 = vmatmul.f32.gmra.mxu0 %v428
  %v2126 = vpop.f32.mrf.mxu0
  %v2127 = vadd.f32 %v2062, %v2126
  %2128 = vmatmul.f32.gmra.mxu0 %v431
  %v2129 = vpop.f32.mrf.mxu0
  %v2130 = vadd.f32 %v2065, %v2129
  %2131 = vmatmul.f32.gmra.mxu0 %v434
  %v2132 = vpop.f32.mrf.mxu0
  %v2133 = vadd.f32 %v2068, %v2132
  %2134 = vmatmul.f32.gmra.mxu0 %v437
  %v2135 = vpop.f32.mrf.mxu0
  %v2136 = vadd.f32 %v2071, %v2135
  %2137 = vmatmul.f32.gmra.mxu0 %v440
  %v2138 = vpop.f32.mrf.mxu0
  %v2139 = vadd.f32 %v2074, %v2138
  %2140 = vmatmul.f32.gmra.mxu0 %v443
  %v2141 = vpop.f32.mrf.mxu0
  %v2142 = vadd.f32 %v2077, %v2141
  %2143 = vmatmul.f32.gmra.mxu0 %v446
  %v2144 = vpop.f32.mrf.mxu0
  %v2145 = vadd.f32 %v2080, %v2144
  %2146 = vmatmul.f32.gmra.mxu0 %v449
  %v2147 = vpop.f32.mrf.mxu0
  %v2148 = vadd.f32 %v2083, %v2147
  %2149 = vmatmul.f32.gmra.mxu0 %v452
  %v2150 = vpop.f32.mrf.mxu0
  %v2151 = vadd.f32 %v2086, %v2150
  %2152 = vmatmul.f32.gmra.mxu0 %v455
  %v2153 = vpop.f32.mrf.mxu0
  %v2154 = vadd.f32 %v2089, %v2153
  %2155 = vmatmul.f32.gmra.mxu0 %v458
  %v2156 = vpop.f32.mrf.mxu0
  %v2157 = vadd.f32 %v2092, %v2156
  %2158 = vmatmul.f32.gmra.mxu0 %v461
  %v2159 = vpop.f32.mrf.mxu0
  %v2160 = vadd.f32 %v2095, %v2159
  %2161 = vmatmul.f32.gmra.mxu0 %v464
  %v2162 = vpop.f32.mrf.mxu0
  %v2163 = vadd.f32 %v2098, %v2162
  %2164 = vmatmul.f32.gmra.mxu0 %v467
  %v2165 = vpop.f32.mrf.mxu0
  %v2166 = vadd.f32 %v2101, %v2165
  %2167 = vdwg.mxu0
  %v2168 = vadd.f32 %v2121, %v1999
  %v2169 = vadd.f32 %v2124, %v2001
  %v2170 = vadd.f32 %v2127, %v2004
  %v2171 = vadd.f32 %v2130, %v2006
  %v2172 = vadd.f32 %v2133, %v2009
  %v2173 = vadd.f32 %v2136, %v2011
  %v2174 = vadd.f32 %v2139, %v2014
  %v2175 = vadd.f32 %v2142, %v2016
  %v2176 = vadd.f32 %v2145, %v2019
  %v2177 = vadd.f32 %v2148, %v2021
  %v2178 = vadd.f32 %v2151, %v2024
  %v2179 = vadd.f32 %v2154, %v2026
  %v2180 = vadd.f32 %v2157, %v2029
  %v2181 = vadd.f32 %v2160, %v2031
  %v2182 = vadd.f32 %v2163, %v2034
  %v2183 = vadd.f32 %v2166, %v2036
  %s2184 = scalar_lea.vmem %s12, 2
  %v2185 = vld [vmem:[%s2184] sm:$0x1]
  %v2187 = vperm.slane %v2185, 0
  %v2189 = vmul.f32 %v2168, %v2187
  %v2190 = vmul.f32 %v2169, %v2187
  %v2191 = vmul.f32 %v2170, %v2187
  %v2192 = vmul.f32 %v2171, %v2187
  %v2193 = vmul.f32 %v2172, %v2187
  %v2194 = vmul.f32 %v2173, %v2187
  %v2195 = vmul.f32 %v2174, %v2187
  %v2196 = vmul.f32 %v2175, %v2187
  %v2197 = vmul.f32 %v2176, %v2187
  %v2198 = vmul.f32 %v2177, %v2187
  %v2199 = vmul.f32 %v2178, %v2187
  %v2200 = vmul.f32 %v2179, %v2187
  %v2201 = vmul.f32 %v2180, %v2187
  %v2202 = vmul.f32 %v2181, %v2187
  %v2203 = vmul.f32 %v2182, %v2187
  %v2204 = vmul.f32 %v2183, %v2187
  %s2205 = scalar_lea.vmem %s13, 2
  %v2206 = vld [vmem:[%s2205] sm:$0x1]
  %v2208 = vperm.slane %v2206, 0
  %v2210 = vadd.f32 %v2189, %v2208
  %v2211 = vadd.f32 %v2190, %v2208
  %v2212 = vadd.f32 %v2191, %v2208
  %v2213 = vadd.f32 %v2192, %v2208
  %v2214 = vadd.f32 %v2193, %v2208
  %v2215 = vadd.f32 %v2194, %v2208
  %v2216 = vadd.f32 %v2195, %v2208
  %v2217 = vadd.f32 %v2196, %v2208
  %v2218 = vadd.f32 %v2197, %v2208
  %v2219 = vadd.f32 %v2198, %v2208
  %v2220 = vadd.f32 %v2199, %v2208
  %v2221 = vadd.f32 %v2200, %v2208
  %v2222 = vadd.f32 %v2201, %v2208
  %v2223 = vadd.f32 %v2202, %v2208
  %v2224 = vadd.f32 %v2203, %v2208
  %v2225 = vadd.f32 %v2204, %v2208
  %v2226 = vmul.f32 %v2210, 0.5
  %v2227 = vmul.f32 %v2211, 0.5
  %v2228 = vmul.f32 %v2212, 0.5
  %v2229 = vmul.f32 %v2213, 0.5
  %v2230 = vmul.f32 %v2214, 0.5
  %v2231 = vmul.f32 %v2215, 0.5
  %v2232 = vmul.f32 %v2216, 0.5
  %v2233 = vmul.f32 %v2217, 0.5
  %v2234 = vmul.f32 %v2218, 0.5
  %v2235 = vmul.f32 %v2219, 0.5
  %v2236 = vmul.f32 %v2220, 0.5
  %v2237 = vmul.f32 %v2221, 0.5
  %v2238 = vmul.f32 %v2222, 0.5
  %v2239 = vmul.f32 %v2223, 0.5
  %v2240 = vmul.f32 %v2224, 0.5
  %v2241 = vmul.f32 %v2225, 0.5
  %v2242 = vtanh.pop %v2226
  %v2243 = vtanh.pop %v2227
  %v2244 = vtanh.pop %v2228
  %v2245 = vtanh.pop %v2229
  %v2246 = vtanh.pop %v2230
  %v2247 = vtanh.pop %v2231
  %v2248 = vtanh.pop %v2232
  %v2249 = vtanh.pop %v2233
  %v2250 = vtanh.pop %v2234
  %v2251 = vtanh.pop %v2235
  %v2252 = vtanh.pop %v2236
  %v2253 = vtanh.pop %v2237
  %v2254 = vtanh.pop %v2238
  %v2255 = vtanh.pop %v2239
  %v2256 = vtanh.pop %v2240
  %v2257 = vtanh.pop %v2241
  %v2258 = vmul.f32 %v2242, 0.5
  %v2259 = vmul.f32 %v2243, 0.5
  %v2260 = vmul.f32 %v2244, 0.5
  %v2261 = vmul.f32 %v2245, 0.5
  %v2262 = vmul.f32 %v2246, 0.5
  %v2263 = vmul.f32 %v2247, 0.5
  %v2264 = vmul.f32 %v2248, 0.5
  %v2265 = vmul.f32 %v2249, 0.5
  %v2266 = vmul.f32 %v2250, 0.5
  %v2267 = vmul.f32 %v2251, 0.5
  %v2268 = vmul.f32 %v2252, 0.5
  %v2269 = vmul.f32 %v2253, 0.5
  %v2270 = vmul.f32 %v2254, 0.5
  %v2271 = vmul.f32 %v2255, 0.5
  %v2272 = vmul.f32 %v2256, 0.5
  %v2273 = vmul.f32 %v2257, 0.5
  %v2274 = vadd.f32 %v2258, 0.5
  %v2275 = vadd.f32 %v2259, 0.5
  %v2276 = vadd.f32 %v2260, 0.5
  %v2277 = vadd.f32 %v2261, 0.5
  %v2278 = vadd.f32 %v2262, 0.5
  %v2279 = vadd.f32 %v2263, 0.5
  %v2280 = vadd.f32 %v2264, 0.5
  %v2281 = vadd.f32 %v2265, 0.5
  %v2282 = vadd.f32 %v2266, 0.5
  %v2283 = vadd.f32 %v2267, 0.5
  %v2284 = vadd.f32 %v2268, 0.5
  %v2285 = vadd.f32 %v2269, 0.5
  %v2286 = vadd.f32 %v2270, 0.5
  %v2287 = vadd.f32 %v2271, 0.5
  %v2288 = vadd.f32 %v2272, 0.5
  %v2289 = vadd.f32 %v2273, 0.5
  %v2290 = vmax.f32 %v2210, 0.0
  %v2291 = vmax.f32 %v2211, 0.0
  %v2292 = vmax.f32 %v2212, 0.0
  %v2293 = vmax.f32 %v2213, 0.0
  %v2294 = vmax.f32 %v2214, 0.0
  %v2295 = vmax.f32 %v2215, 0.0
  %v2296 = vmax.f32 %v2216, 0.0
  %v2297 = vmax.f32 %v2217, 0.0
  %v2298 = vmax.f32 %v2218, 0.0
  %v2299 = vmax.f32 %v2219, 0.0
  %v2300 = vmax.f32 %v2220, 0.0
  %v2301 = vmax.f32 %v2221, 0.0
  %v2302 = vmax.f32 %v2222, 0.0
  %v2303 = vmax.f32 %v2223, 0.0
  %v2304 = vmax.f32 %v2224, 0.0
  %v2305 = vmax.f32 %v2225, 0.0
  %vm2306 = vcmp.ne.f32.partialorder %v2210, %v2210
  %vm2307 = vcmp.ne.f32.partialorder %v2211, %v2211
  %vm2308 = vcmp.ne.f32.partialorder %v2212, %v2212
  %vm2309 = vcmp.ne.f32.partialorder %v2213, %v2213
  %vm2310 = vcmp.ne.f32.partialorder %v2214, %v2214
  %vm2311 = vcmp.ne.f32.partialorder %v2215, %v2215
  %vm2312 = vcmp.ne.f32.partialorder %v2216, %v2216
  %vm2313 = vcmp.ne.f32.partialorder %v2217, %v2217
  %vm2314 = vcmp.ne.f32.partialorder %v2218, %v2218
  %vm2315 = vcmp.ne.f32.partialorder %v2219, %v2219
  %vm2316 = vcmp.ne.f32.partialorder %v2220, %v2220
  %vm2317 = vcmp.ne.f32.partialorder %v2221, %v2221
  %vm2318 = vcmp.ne.f32.partialorder %v2222, %v2222
  %vm2319 = vcmp.ne.f32.partialorder %v2223, %v2223
  %vm2320 = vcmp.ne.f32.partialorder %v2224, %v2224
  %vm2321 = vcmp.ne.f32.partialorder %v2225, %v2225
  %v2322 = vadd.f32 %v2210, 0.0
  %v2323 = vadd.f32 %v2211, 0.0
  %v2324 = vadd.f32 %v2212, 0.0
  %v2325 = vadd.f32 %v2213, 0.0
  %v2326 = vadd.f32 %v2214, 0.0
  %v2327 = vadd.f32 %v2215, 0.0
  %v2328 = vadd.f32 %v2216, 0.0
  %v2329 = vadd.f32 %v2217, 0.0
  %v2330 = vadd.f32 %v2218, 0.0
  %v2331 = vadd.f32 %v2219, 0.0
  %v2332 = vadd.f32 %v2220, 0.0
  %v2333 = vadd.f32 %v2221, 0.0
  %v2334 = vadd.f32 %v2222, 0.0
  %v2335 = vadd.f32 %v2223, 0.0
  %v2336 = vadd.f32 %v2224, 0.0
  %v2337 = vadd.f32 %v2225, 0.0
  %v2338 = vand.u32 2147483647, %v2210
  %v2339 = vand.u32 2147483647, %v2211
  %v2340 = vand.u32 2147483647, %v2212
  %v2341 = vand.u32 2147483647, %v2213
  %v2342 = vand.u32 2147483647, %v2214
  %v2343 = vand.u32 2147483647, %v2215
  %v2344 = vand.u32 2147483647, %v2216
  %v2345 = vand.u32 2147483647, %v2217
  %v2346 = vand.u32 2147483647, %v2218
  %v2347 = vand.u32 2147483647, %v2219
  %v2348 = vand.u32 2147483647, %v2220
  %v2349 = vand.u32 2147483647, %v2221
  %v2350 = vand.u32 2147483647, %v2222
  %v2351 = vand.u32 2147483647, %v2223
  %v2352 = vand.u32 2147483647, %v2224
  %v2353 = vand.u32 2147483647, %v2225
  %v2354 = vsub.f32 0.0, %v2338
  %v2355 = vsub.f32 0.0, %v2339
  %v2356 = vsub.f32 0.0, %v2340
  %v2357 = vsub.f32 0.0, %v2341
  %v2358 = vsub.f32 0.0, %v2342
  %v2359 = vsub.f32 0.0, %v2343
  %v2360 = vsub.f32 0.0, %v2344
  %v2361 = vsub.f32 0.0, %v2345
  %v2362 = vsub.f32 0.0, %v2346
  %v2363 = vsub.f32 0.0, %v2347
  %v2364 = vsub.f32 0.0, %v2348
  %v2365 = vsub.f32 0.0, %v2349
  %v2366 = vsub.f32 0.0, %v2350
  %v2367 = vsub.f32 0.0, %v2351
  %v2368 = vsub.f32 0.0, %v2352
  %v2369 = vsub.f32 0.0, %v2353
  %v2370 = vmul.f32 %v2354, 1.442695
  %v2371 = vpow.pop %v2370
  %v2372 = vmul.f32 %v2355, 1.442695
  %v2373 = vpow.pop %v2372
  %v2374 = vmul.f32 %v2356, 1.442695
  %v2375 = vpow.pop %v2374
  %v2376 = vmul.f32 %v2357, 1.442695
  %v2377 = vpow.pop %v2376
  %v2378 = vmul.f32 %v2358, 1.442695
  %v2379 = vpow.pop %v2378
  %v2380 = vmul.f32 %v2359, 1.442695
  %v2381 = vpow.pop %v2380
  %v2382 = vmul.f32 %v2360, 1.442695
  %v2383 = vpow.pop %v2382
  %v2384 = vmul.f32 %v2361, 1.442695
  %v2385 = vpow.pop %v2384
  %v2386 = vmul.f32 %v2362, 1.442695
  %v2387 = vpow.pop %v2386
  %v2388 = vmul.f32 %v2363, 1.442695
  %v2389 = vpow.pop %v2388
  %v2390 = vmul.f32 %v2364, 1.442695
  %v2391 = vpow.pop %v2390
  %v2392 = vmul.f32 %v2365, 1.442695
  %v2393 = vpow.pop %v2392
  %v2394 = vmul.f32 %v2366, 1.442695
  %v2395 = vpow.pop %v2394
  %v2396 = vmul.f32 %v2367, 1.442695
  %v2397 = vpow.pop %v2396
  %v2398 = vmul.f32 %v2368, 1.442695
  %v2399 = vpow.pop %v2398
  %v2400 = vmul.f32 %v2369, 1.442695
  %v2401 = vpow.pop %v2400
  %v2402 = vadd.f32 %v2371, 1.0
  %v2403 = vlog2.pop %v2402
  %v2404 = vmul.f32 %v2403, 0.6931472
  %v2405 = vmul.f32 -0.5, %v2371
  %v2406 = vadd.f32 %v2405, 1.0
  %v2407 = vmul.f32 %v2406, %v2371
  %v2408 = vand.u32 2147483647, %v2371
  %vm2409 = vcmp.lt.f32.partialorder %v2408, 0.0004427343
  %v2410 = vsel %vm2409, %v2407, %v2404
  %v2411 = vadd.f32 %v2373, 1.0
  %v2412 = vlog2.pop %v2411
  %v2413 = vmul.f32 %v2412, 0.6931472
  %v2414 = vmul.f32 -0.5, %v2373
  %v2415 = vadd.f32 %v2414, 1.0
  %v2416 = vmul.f32 %v2415, %v2373
  %v2417 = vand.u32 2147483647, %v2373
  %vm2418 = vcmp.lt.f32.partialorder %v2417, 0.0004427343
  %v2419 = vsel %vm2418, %v2416, %v2413
  %v2420 = vadd.f32 %v2375, 1.0
  %v2421 = vlog2.pop %v2420
  %v2422 = vmul.f32 %v2421, 0.6931472
  %v2423 = vmul.f32 -0.5, %v2375
  %v2424 = vadd.f32 %v2423, 1.0
  %v2425 = vmul.f32 %v2424, %v2375
  %v2426 = vand.u32 2147483647, %v2375
  %vm2427 = vcmp.lt.f32.partialorder %v2426, 0.0004427343
  %v2428 = vsel %vm2427, %v2425, %v2422
  %v2429 = vadd.f32 %v2377, 1.0
  %v2430 = vlog2.pop %v2429
  %v2431 = vmul.f32 %v2430, 0.6931472
  %v2432 = vmul.f32 -0.5, %v2377
  %v2433 = vadd.f32 %v2432, 1.0
  %v2434 = vmul.f32 %v2433, %v2377
  %v2435 = vand.u32 2147483647, %v2377
  %vm2436 = vcmp.lt.f32.partialorder %v2435, 0.0004427343
  %v2437 = vsel %vm2436, %v2434, %v2431
  %v2438 = vadd.f32 %v2379, 1.0
  %v2439 = vlog2.pop %v2438
  %v2440 = vmul.f32 %v2439, 0.6931472
  %v2441 = vmul.f32 -0.5, %v2379
  %v2442 = vadd.f32 %v2441, 1.0
  %v2443 = vmul.f32 %v2442, %v2379
  %v2444 = vand.u32 2147483647, %v2379
  %vm2445 = vcmp.lt.f32.partialorder %v2444, 0.0004427343
  %v2446 = vsel %vm2445, %v2443, %v2440
  %v2447 = vadd.f32 %v2381, 1.0
  %v2448 = vlog2.pop %v2447
  %v2449 = vmul.f32 %v2448, 0.6931472
  %v2450 = vmul.f32 -0.5, %v2381
  %v2451 = vadd.f32 %v2450, 1.0
  %v2452 = vmul.f32 %v2451, %v2381
  %v2453 = vand.u32 2147483647, %v2381
  %vm2454 = vcmp.lt.f32.partialorder %v2453, 0.0004427343
  %v2455 = vsel %vm2454, %v2452, %v2449
  %v2456 = vadd.f32 %v2383, 1.0
  %v2457 = vlog2.pop %v2456
  %v2458 = vmul.f32 %v2457, 0.6931472
  %v2459 = vmul.f32 -0.5, %v2383
  %v2460 = vadd.f32 %v2459, 1.0
  %v2461 = vmul.f32 %v2460, %v2383
  %v2462 = vand.u32 2147483647, %v2383
  %vm2463 = vcmp.lt.f32.partialorder %v2462, 0.0004427343
  %v2464 = vsel %vm2463, %v2461, %v2458
  %v2465 = vadd.f32 %v2385, 1.0
  %v2466 = vlog2.pop %v2465
  %v2467 = vmul.f32 %v2466, 0.6931472
  %v2468 = vmul.f32 -0.5, %v2385
  %v2469 = vadd.f32 %v2468, 1.0
  %v2470 = vmul.f32 %v2469, %v2385
  %v2471 = vand.u32 2147483647, %v2385
  %vm2472 = vcmp.lt.f32.partialorder %v2471, 0.0004427343
  %v2473 = vsel %vm2472, %v2470, %v2467
  %v2474 = vadd.f32 %v2387, 1.0
  %v2475 = vlog2.pop %v2474
  %v2476 = vmul.f32 %v2475, 0.6931472
  %v2477 = vmul.f32 -0.5, %v2387
  %v2478 = vadd.f32 %v2477, 1.0
  %v2479 = vmul.f32 %v2478, %v2387
  %v2480 = vand.u32 2147483647, %v2387
  %vm2481 = vcmp.lt.f32.partialorder %v2480, 0.0004427343
  %v2482 = vsel %vm2481, %v2479, %v2476
  %v2483 = vadd.f32 %v2389, 1.0
  %v2484 = vlog2.pop %v2483
  %v2485 = vmul.f32 %v2484, 0.6931472
  %v2486 = vmul.f32 -0.5, %v2389
  %v2487 = vadd.f32 %v2486, 1.0
  %v2488 = vmul.f32 %v2487, %v2389
  %v2489 = vand.u32 2147483647, %v2389
  %vm2490 = vcmp.lt.f32.partialorder %v2489, 0.0004427343
  %v2491 = vsel %vm2490, %v2488, %v2485
  %v2492 = vadd.f32 %v2391, 1.0
  %v2493 = vlog2.pop %v2492
  %v2494 = vmul.f32 %v2493, 0.6931472
  %v2495 = vmul.f32 -0.5, %v2391
  %v2496 = vadd.f32 %v2495, 1.0
  %v2497 = vmul.f32 %v2496, %v2391
  %v2498 = vand.u32 2147483647, %v2391
  %vm2499 = vcmp.lt.f32.partialorder %v2498, 0.0004427343
  %v2500 = vsel %vm2499, %v2497, %v2494
  %v2501 = vadd.f32 %v2393, 1.0
  %v2502 = vlog2.pop %v2501
  %v2503 = vmul.f32 %v2502, 0.6931472
  %v2504 = vmul.f32 -0.5, %v2393
  %v2505 = vadd.f32 %v2504, 1.0
  %v2506 = vmul.f32 %v2505, %v2393
  %v2507 = vand.u32 2147483647, %v2393
  %vm2508 = vcmp.lt.f32.partialorder %v2507, 0.0004427343
  %v2509 = vsel %vm2508, %v2506, %v2503
  %v2510 = vadd.f32 %v2395, 1.0
  %v2511 = vlog2.pop %v2510
  %v2512 = vmul.f32 %v2511, 0.6931472
  %v2513 = vmul.f32 -0.5, %v2395
  %v2514 = vadd.f32 %v2513, 1.0
  %v2515 = vmul.f32 %v2514, %v2395
  %v2516 = vand.u32 2147483647, %v2395
  %vm2517 = vcmp.lt.f32.partialorder %v2516, 0.0004427343
  %v2518 = vsel %vm2517, %v2515, %v2512
  %v2519 = vadd.f32 %v2397, 1.0
  %v2520 = vlog2.pop %v2519
  %v2521 = vmul.f32 %v2520, 0.6931472
  %v2522 = vmul.f32 -0.5, %v2397
  %v2523 = vadd.f32 %v2522, 1.0
  %v2524 = vmul.f32 %v2523, %v2397
  %v2525 = vand.u32 2147483647, %v2397
  %vm2526 = vcmp.lt.f32.partialorder %v2525, 0.0004427343
  %v2527 = vsel %vm2526, %v2524, %v2521
  %v2528 = vadd.f32 %v2399, 1.0
  %v2529 = vlog2.pop %v2528
  %v2530 = vmul.f32 %v2529, 0.6931472
  %v2531 = vmul.f32 -0.5, %v2399
  %v2532 = vadd.f32 %v2531, 1.0
  %v2533 = vmul.f32 %v2532, %v2399
  %v2534 = vand.u32 2147483647, %v2399
  %vm2535 = vcmp.lt.f32.partialorder %v2534, 0.0004427343
  %v2536 = vsel %vm2535, %v2533, %v2530
  %v2537 = vadd.f32 %v2401, 1.0
  %v2538 = vlog2.pop %v2537
  %v2539 = vmul.f32 %v2538, 0.6931472
  %v2540 = vmul.f32 -0.5, %v2401
  %v2541 = vadd.f32 %v2540, 1.0
  %v2542 = vmul.f32 %v2541, %v2401
  %v2543 = vand.u32 2147483647, %v2401
  %vm2544 = vcmp.lt.f32.partialorder %v2543, 0.0004427343
  %v2545 = vsel %vm2544, %v2542, %v2539
  %v2546 = vadd.f32 %v2290, %v2410
  %v2547 = vadd.f32 %v2291, %v2419
  %v2548 = vadd.f32 %v2292, %v2428
  %v2549 = vadd.f32 %v2293, %v2437
  %v2550 = vadd.f32 %v2294, %v2446
  %v2551 = vadd.f32 %v2295, %v2455
  %v2552 = vadd.f32 %v2296, %v2464
  %v2553 = vadd.f32 %v2297, %v2473
  %v2554 = vadd.f32 %v2298, %v2482
  %v2555 = vadd.f32 %v2299, %v2491
  %v2556 = vadd.f32 %v2300, %v2500
  %v2557 = vadd.f32 %v2301, %v2509
  %v2558 = vadd.f32 %v2302, %v2518
  %v2559 = vadd.f32 %v2303, %v2527
  %v2560 = vadd.f32 %v2304, %v2536
  %v2561 = vadd.f32 %v2305, %v2545
  %v2562 = vsel %vm2306, %v2322, %v2546
  %v2563 = vsel %vm2307, %v2323, %v2547
  %v2564 = vsel %vm2308, %v2324, %v2548
  %v2565 = vsel %vm2309, %v2325, %v2549
  %v2566 = vsel %vm2310, %v2326, %v2550
  %v2567 = vsel %vm2311, %v2327, %v2551
  %v2568 = vsel %vm2312, %v2328, %v2552
  %v2569 = vsel %vm2313, %v2329, %v2553
  %v2570 = vsel %vm2314, %v2330, %v2554
  %v2571 = vsel %vm2315, %v2331, %v2555
  %v2572 = vsel %vm2316, %v2332, %v2556
  %v2573 = vsel %vm2317, %v2333, %v2557
  %v2574 = vsel %vm2318, %v2334, %v2558
  %v2575 = vsel %vm2319, %v2335, %v2559
  %v2576 = vsel %vm2320, %v2336, %v2560
  %v2577 = vsel %vm2321, %v2337, %v2561
  %2594 = vrot.lane.b32.xlu0 %v2562, 96
  %v2595 = vpop.permute.xlu0 %2594
  %2596 = vrot.lane.b32.xlu0 %v2563, 96
  %v2597 = vpop.permute.xlu0 %2596
  %2598 = vrot.lane.b32.xlu0 %v2564, 96
  %v2599 = vpop.permute.xlu0 %2598
  %2600 = vrot.lane.b32.xlu0 %v2565, 96
  %v2601 = vpop.permute.xlu0 %2600
  %2602 = vrot.lane.b32.xlu0 %v2566, 96
  %v2603 = vpop.permute.xlu0 %2602
  %2604 = vrot.lane.b32.xlu0 %v2567, 96
  %v2605 = vpop.permute.xlu0 %2604
  %2606 = vrot.lane.b32.xlu0 %v2568, 96
  %v2607 = vpop.permute.xlu0 %2606
  %2608 = vrot.lane.b32.xlu0 %v2569, 96
  %v2609 = vpop.permute.xlu0 %2608
  %2610 = vrot.lane.b32.xlu0 %v2570, 96
  %v2611 = vpop.permute.xlu0 %2610
  %2612 = vrot.lane.b32.xlu0 %v2571, 96
  %v2613 = vpop.permute.xlu0 %2612
  %2614 = vrot.lane.b32.xlu0 %v2572, 96
  %v2615 = vpop.permute.xlu0 %2614
  %2616 = vrot.lane.b32.xlu0 %v2573, 96
  %v2617 = vpop.permute.xlu0 %2616
  %2618 = vrot.lane.b32.xlu0 %v2574, 96
  %v2619 = vpop.permute.xlu0 %2618
  %2620 = vrot.lane.b32.xlu0 %v2575, 96
  %v2621 = vpop.permute.xlu0 %2620
  %2622 = vrot.lane.b32.xlu0 %v2576, 96
  %v2623 = vpop.permute.xlu0 %2622
  %2624 = vrot.lane.b32.xlu0 %v2577, 96
  %v2625 = vpop.permute.xlu0 %2624
  %v2642 = vmul.f32 %v2274, %v2595
  %v2643 = vmul.f32 %v2275, %v2597
  %v2644 = vmul.f32 %v2276, %v2599
  %v2645 = vmul.f32 %v2277, %v2601
  %v2646 = vmul.f32 %v2278, %v2603
  %v2647 = vmul.f32 %v2279, %v2605
  %v2648 = vmul.f32 %v2280, %v2607
  %v2649 = vmul.f32 %v2281, %v2609
  %v2650 = vmul.f32 %v2282, %v2611
  %v2651 = vmul.f32 %v2283, %v2613
  %v2652 = vmul.f32 %v2284, %v2615
  %v2653 = vmul.f32 %v2285, %v2617
  %v2654 = vmul.f32 %v2286, %v2619
  %v2655 = vmul.f32 %v2287, %v2621
  %v2656 = vmul.f32 %v2288, %v2623
  %v2657 = vmul.f32 %v2289, %v2625
  %2658 = vmatpush.msra.mxu0 %v2657
  %2659 = vmatpush.msra.mxu0 %v2656
  %2660 = vmatpush.msra.mxu0 %v2655
  %2661 = vmatpush.msra.mxu0 %v2654
  %2662 = vmatpush.msra.mxu0 %v2653
  %2663 = vmatpush.msra.mxu0 %v2652
  %2664 = vmatpush.msra.mxu0 %v2651
  %2665 = vmatpush.msra.mxu0 %v2650
  %2666 = vmatpush.msra.mxu0 %v2649
  %2667 = vmatpush.msra.mxu0 %v2648
  %2668 = vmatpush.msra.mxu0 %v2647
  %2669 = vmatpush.msra.mxu0 %v2646
  %2670 = vmatpush.msra.mxu0 %v2645
  %2671 = vmatpush.msra.mxu0 %v2644
  %2672 = vmatpush.msra.mxu0 %v2643
  %2673 = vmatpush.msra.mxu0 %v2642
  %2674 = vmatmul.f32.gmra.mxu0 %v136
  %v2675 = vpop.f32.mrf.mxu0
  %v2676 = vadd.f32 0.0, %v2675
  %2677 = vmatmul.f32.gmra.mxu0 %v137
  %v2678 = vpop.f32.mrf.mxu0
  %v2679 = vadd.f32 0.0, %v2678
  %2680 = vdwg.mxu0
  %s2681 = scalar_lea.vmem %s14, 2
  %v2682 = vld [vmem:[%s2681] sm:$0x1]
  %v2684 = vperm.slane %v2682, 0
  %v2686 = vmul.f32 %v2676, %v2684
  %v2687 = vmul.f32 %v2679, %v2684
  %s2688 = scalar_lea.vmem %s15, 2
  %v2689 = vld [vmem:[%s2688] sm:$0x1]
  %v2691 = vperm.slane %v2689, 0
  %v2693 = vadd.f32 %v2686, %v2691
  %v2694 = vadd.f32 %v2687, %v2691
  %v2695 = vadd.f32 %v1912, %v2693
  %v2696 = vadd.f32 %v1913, %v2694
  %v2697 = vmax.f32 %v2695, 0.0
  %v2698 = vmax.f32 %v2696, 0.0
  %vm2699 = vcmp.ne.f32.partialorder %v2695, %v2695
  %vm2700 = vcmp.ne.f32.partialorder %v2696, %v2696
  %v2701 = vadd.f32 %v2695, 0.0
  %v2702 = vadd.f32 %v2696, 0.0
  %v2703 = vand.u32 2147483647, %v2695
  %v2704 = vand.u32 2147483647, %v2696
  %v2705 = vsub.f32 0.0, %v2703
  %v2706 = vsub.f32 0.0, %v2704
  %v2707 = vmul.f32 %v2705, 1.442695
  %v2708 = vpow.pop %v2707
  %v2709 = vmul.f32 %v2706, 1.442695
  %v2710 = vpow.pop %v2709
  %v2711 = vadd.f32 %v2708, 1.0
  %v2712 = vlog2.pop %v2711
  %v2713 = vmul.f32 %v2712, 0.6931472
  %v2714 = vmul.f32 -0.5, %v2708
  %v2715 = vadd.f32 %v2714, 1.0
  %v2716 = vmul.f32 %v2715, %v2708
  %v2717 = vand.u32 2147483647, %v2708
  %vm2718 = vcmp.lt.f32.partialorder %v2717, 0.0004427343
  %v2719 = vsel %vm2718, %v2716, %v2713
  %v2720 = vadd.f32 %v2710, 1.0
  %v2721 = vlog2.pop %v2720
  %v2722 = vmul.f32 %v2721, 0.6931472
  %v2723 = vmul.f32 -0.5, %v2710
  %v2724 = vadd.f32 %v2723, 1.0
  %v2725 = vmul.f32 %v2724, %v2710
  %v2726 = vand.u32 2147483647, %v2710
  %vm2727 = vcmp.lt.f32.partialorder %v2726, 0.0004427343
  %v2728 = vsel %vm2727, %v2725, %v2722
  %v2729 = vadd.f32 %v2697, %v2719
  %v2730 = vadd.f32 %v2698, %v2728
  %v2731 = vsel %vm2699, %v2701, %v2729
  %v2732 = vsel %vm2700, %v2702, %v2730
  %v2733 = vld [vmem:[%s5] sm:$0x3]
  %v2735 = vsel %vm86, %v2733, 0
  %2737 = vmatpush.msra.mxu0 0.0
  %2738 = vmatpush.msra.mxu0 0.0
  %2739 = vmatpush.msra.mxu0 0.0
  %2740 = vmatpush.msra.mxu0 0.0
  %2741 = vmatpush.msra.mxu0 0.0
  %2742 = vmatpush.msra.mxu0 0.0
  %2743 = vmatpush.msra.mxu0 0.0
  %2744 = vmatpush.msra.mxu0 0.0
  %2745 = vmatpush.msra.mxu0 0.0
  %2746 = vmatpush.msra.mxu0 0.0
  %2747 = vmatpush.msra.mxu0 0.0
  %2748 = vmatpush.msra.mxu0 0.0
  %2749 = vmatpush.msra.mxu0 0.0
  %2750 = vmatpush.msra.mxu0 0.0
  %2751 = vmatpush.msra.mxu0 %v2732
  %2752 = vmatpush.msra.mxu0 %v2731
  %2753 = vmatmul.f32.gmra.mxu0 %v2735
  %v2754 = vpop.f32.mrf.mxu0
  %v2755 = vadd.f32 0.0, %v2754
  %2756 = vdwg.mxu0
  %v2757 = vmax.f32 %v2755, 0.0
  %vm2758 = vcmp.ne.f32.partialorder %v2755, %v2755
  %v2759 = vadd.f32 %v2755, 0.0
  %v2760 = vand.u32 2147483647, %v2755
  %v2761 = vsub.f32 0.0, %v2760
  %v2762 = vmul.f32 %v2761, 1.442695
  %v2763 = vpow.pop %v2762
  %v2764 = vadd.f32 %v2763, 1.0
  %v2765 = vlog2.pop %v2764
  %v2766 = vmul.f32 %v2765, 0.6931472
  %v2767 = vmul.f32 -0.5, %v2763
  %v2768 = vadd.f32 %v2767, 1.0
  %v2769 = vmul.f32 %v2768, %v2763
  %v2770 = vand.u32 2147483647, %v2763
  %vm2771 = vcmp.lt.f32.partialorder %v2770, 0.0004427343
  %v2772 = vsel %vm2771, %v2769, %v2766
  %v2773 = vadd.f32 %v2757, %v2772
  %v2774 = vsel %vm2758, %v2759, %v2773
  %v2775 = vld [vmem:[%s16] sm:$0xff]
  %v2776 = vld [vmem:[%s16 + $0x8] sm:$0xff]
  %v2777 = vld [vmem:[%s16 + $0x10] sm:$0xff]
  %v2778 = vld [vmem:[%s16 + $0x18] sm:$0xff]
  %v2779 = vld [vmem:[%s6] sm:$0x3]
  %v2780 = vmax.f32 %v2779, 0.0
  %vm2781 = vcmp.ne.f32.partialorder %v2779, %v2779
  %v2782 = vadd.f32 %v2779, 0.0
  %v2783 = vand.u32 2147483647, %v2779
  %v2784 = vsub.f32 0.0, %v2783
  %v2785 = vmul.f32 %v2784, 1.442695
  %v2786 = vpow.pop %v2785
  %v2787 = vadd.f32 %v2786, 1.0
  %v2788 = vlog2.pop %v2787
  %v2789 = vmul.f32 %v2788, 0.6931472
  %v2790 = vmul.f32 -0.5, %v2786
  %v2791 = vadd.f32 %v2790, 1.0
  %v2792 = vmul.f32 %v2791, %v2786
  %v2793 = vand.u32 2147483647, %v2786
  %vm2794 = vcmp.lt.f32.partialorder %v2793, 0.0004427343
  %v2795 = vsel %vm2794, %v2792, %v2789
  %v2796 = vadd.f32 %v2780, %v2795
  %v2797 = vsel %vm2781, %v2782, %v2796
  %v2798 = vld [vmem:[%s17] sm:$0xff]
  %vm2799 = vcmask 64512
  %v2801 = vsel %vm2799, %v2797, 0
  %2803 = vmatpush.msra.mxu0 0.0
  %2804 = vmatpush.msra.mxu0 0.0
  %2805 = vmatpush.msra.mxu0 0.0
  %2806 = vmatpush.msra.mxu0 0.0
  %2807 = vmatpush.msra.mxu0 0.0
  %2808 = vmatpush.msra.mxu0 0.0
  %2809 = vmatpush.msra.mxu0 0.0
  %2810 = vmatpush.msra.mxu0 0.0
  %2811 = vmatpush.msra.mxu0 0.0
  %2812 = vmatpush.msra.mxu0 0.0
  %2813 = vmatpush.msra.mxu0 0.0
  %2814 = vmatpush.msra.mxu0 0.0
  %2815 = vmatpush.msra.mxu0 0.0
  %2816 = vmatpush.msra.mxu0 0.0
  %2817 = vmatpush.msra.mxu0 0.0
  %2818 = vmatpush.msra.mxu0 %v2798
  %2819 = vmatmul.f32.gmra.mxu0 %v2801
  %v2820 = vpop.f32.mrf.mxu0
  %v2821 = vadd.f32 0.0, %v2820
  %2822 = vdwg.mxu0
  %v2824 = vsel %vm179, %v2774, 0
  %2826 = vmatpush.msra.mxu0 0.0
  %2827 = vmatpush.msra.mxu0 0.0
  %2828 = vmatpush.msra.mxu0 0.0
  %2829 = vmatpush.msra.mxu0 0.0
  %2830 = vmatpush.msra.mxu0 0.0
  %2831 = vmatpush.msra.mxu0 0.0
  %2832 = vmatpush.msra.mxu0 0.0
  %2833 = vmatpush.msra.mxu0 0.0
  %2834 = vmatpush.msra.mxu0 0.0
  %2835 = vmatpush.msra.mxu0 0.0
  %2836 = vmatpush.msra.mxu0 0.0
  %2837 = vmatpush.msra.mxu0 0.0
  %2838 = vmatpush.msra.mxu0 %v2778
  %2839 = vmatpush.msra.mxu0 %v2777
  %2840 = vmatpush.msra.mxu0 %v2776
  %2841 = vmatpush.msra.mxu0 %v2775
  %2842 = vmatmul.f32.gmra.mxu0 %v2824
  %v2843 = vpop.f32.mrf.mxu0
  %v2844 = vadd.f32 %v2821, %v2843
  %2845 = vdwg.mxu0
  %v2846 = vld [vmem:[%s18] sm:$0x1]
  %v2848 = vperm.slane %v2846, 0
  %v2850 = vadd.f32 %v2844, %v2848
  %v2851 = vmax.f32 %v2850, 0.0
  %vm2852 = vcmp.ne.f32.partialorder %v2850, %v2850
  %v2853 = vadd.f32 %v2850, 0.0
  %v2854 = vand.u32 2147483647, %v2850
  %v2855 = vsub.f32 0.0, %v2854
  %v2856 = vmul.f32 %v2855, 1.442695
  %v2857 = vpow.pop %v2856
  %v2858 = vadd.f32 %v2857, 1.0
  %v2859 = vlog2.pop %v2858
  %v2860 = vmul.f32 %v2859, 0.6931472
  %v2861 = vmul.f32 -0.5, %v2857
  %v2862 = vadd.f32 %v2861, 1.0
  %v2863 = vmul.f32 %v2862, %v2857
  %v2864 = vand.u32 2147483647, %v2857
  %vm2865 = vcmp.lt.f32.partialorder %v2864, 0.0004427343
  %v2866 = vsel %vm2865, %v2863, %v2860
  %v2867 = vadd.f32 %v2851, %v2866
  %v2868 = vsel %vm2852, %v2853, %v2867
  %v2869 = vld [vmem:[%s19] sm:$0xff]
  %v2870 = vld [vmem:[%s19 + $0x8] sm:$0xff]
  %v2871 = vld [vmem:[%s19 + $0x10] sm:$0xff]
  %v2872 = vld [vmem:[%s19 + $0x18] sm:$0xff]
  %v2873 = vld [vmem:[%s19 + $0x20] sm:$0xff]
  %v2874 = vld [vmem:[%s19 + $0x28] sm:$0xff]
  %v2875 = vld [vmem:[%s19 + $0x30] sm:$0xff]
  %v2876 = vld [vmem:[%s19 + $0x38] sm:$0xff]
  %v2877 = vld [vmem:[#allocation2] sm:$0x1]
  %v2879 = vperm.slane %v2877, 0
  %vm2881 = vcmask 523264
  %v2883 = vsel %vm2881, %v2868, 0
  %2885 = vmatpush.msra.mxu0 0.0
  %2886 = vmatpush.msra.mxu0 0.0
  %2887 = vmatpush.msra.mxu0 0.0
  %2888 = vmatpush.msra.mxu0 0.0
  %2889 = vmatpush.msra.mxu0 0.0
  %2890 = vmatpush.msra.mxu0 0.0
  %2891 = vmatpush.msra.mxu0 0.0
  %2892 = vmatpush.msra.mxu0 0.0
  %2893 = vmatpush.msra.mxu0 %v2876
  %2894 = vmatpush.msra.mxu0 %v2875
  %2895 = vmatpush.msra.mxu0 %v2874
  %2896 = vmatpush.msra.mxu0 %v2873
  %2897 = vmatpush.msra.mxu0 %v2872
  %2898 = vmatpush.msra.mxu0 %v2871
  %2899 = vmatpush.msra.mxu0 %v2870
  %2900 = vmatpush.msra.mxu0 %v2869
  %2901 = vmatmul.f32.gmra.mxu0 %v2883
  %v2902 = vpop.f32.mrf.mxu0
  %v2903 = vadd.f32 %v2879, %v2902
  %2904 = vdwg.mxu0
  %vm2905 = vcmask 1024
  %2906 = vst.msk [vmem:[%s21] sm:$0x3] %vm2905, %v2903
  // Predicated region
  $region86: #{cgcnn_forward.1} parent=0 // pred_check
    _
  $region87: #{cgcnn_forward.1} parent=0 // pred_check_branch
    %2908 = sbr.rel (0) target = $region89
  $region88: #{cgcnn_forward.1} parent=0 // pred_region
    _
  $region89: #{cgcnn_forward.1} parent=0 // pred_fallthru
    _
  // Predicated region
  $region90: #{cgcnn_forward.1} parent=0 // pred_check
    _
  $region91: #{cgcnn_forward.1} parent=0 // pred_check_branch
    %2910 = sbr.rel (0) target = $region93
  $region92: #{cgcnn_forward.1} parent=0 // pred_region
    _
  $region93: #{cgcnn_forward.1} parent=0 // pred_fallthru
    _

</llo_original>
